<compile_context>
chip_gen: v6e
topology: v6e:2x2x1
jax: 0.10.0
libtpu: 0.0.40
codegen_flags: <defaults>
</compile_context>

<pallas_src>
import functools

import jax
import jax.numpy as jnp
from jax import lax
from jax.experimental import pallas as pl
from jax.experimental.pallas import tpu as pltpu

BN_EPS = 1e-5
LANE = 128


def _conv_stats_kernel(xp_ref, w_ref, y_ref, stats_ref, *, th, w_out, cin,
                       cout_pad, kh, kw):
  """Phase 1: conv (kh*kw shifted matmuls, f32 acc) + per-channel sum/sumsq.

  xp_ref:    [Hp, Wp, Cin]        bf16  (one padded image, resident per batch)
  w_ref:     [kh*kw, Cin, Cout_p] bf16  (resident)
  y_ref:     [th, W, Cout_p]      f32   (this row-tile of the conv output)
  stats_ref: [2, Cout_p]          f32   (row 0: sum, row 1: sumsq; accumulator
                                         carried across the entire grid)
  """
  n = pl.program_id(0)
  t = pl.program_id(1)

  @pl.when((n == 0) & (t == 0))
  def _init():
    stats_ref[...] = jnp.zeros_like(stats_ref)

  h0 = t * th                                     # top padded row of this tile
  acc = jnp.zeros((th * w_out, cout_pad), jnp.float32)
  for dh in range(kh):                            # static 3x3 -> fully unrolled
    band = xp_ref[pl.ds(h0 + dh, th), :, :]       # [th, Wp, Cin] bf16
    for dw in range(kw):
      xs = band[:, dw:dw + w_out, :]              # shifted window [th, W, Cin]
      xs = xs.reshape(th * w_out, cin)
      acc = acc + jnp.dot(xs, w_ref[dh * kw + dw],
                          preferred_element_type=jnp.float32)   # MXU, f32 acc

  y_ref[...] = acc.reshape(th, w_out, cout_pad)

  # f32 partial BN statistics (one small cross-sublane reduce per tile).
  s1 = jnp.sum(acc, axis=0, keepdims=True)                       # [1, Cout_p]
  s2 = jnp.sum(acc * acc, axis=0, keepdims=True)                 # [1, Cout_p]
  stats_ref[...] += jnp.concatenate([s1, s2], axis=0)


def _bn_act_kernel(y_ref, scale_ref, bias_ref, alpha_ref, o_ref):
  """Phase 2: y_hat = y*scale + bias (folded BN) followed by PReLU."""
  y = y_ref[...] * scale_ref[...] + bias_ref[...]
  o_ref[...] = jnp.where(y > 0, y, alpha_ref[...] * y)


def _round_up(x, m):
  return (x + m - 1) // m * m


def _row_tile(h, w):
  """Largest divisor of h keeping the matmul row tile (th*w) <= 1024 rows."""
  target = max(1, 1024 // max(w, 1))
  best = 1
  for cand in range(1, h + 1):
    if h % cand == 0 and cand <= target:
      best = cand
  return best


def _m_tile(m):
  for cand in (1024, 512, 256, 128, 64, 32, 16, 8):
    if m % cand == 0:
      return cand
  return m


@functools.partial(jax.jit, static_argnames=("kernel_size", "padding"))
def conv_block(x, weight, gamma, beta, alpha, *, kernel_size=3, padding=1):
  """x: [N, Cin, H, W] (NCHW).  weight: [Cout, Cin, kh, kw] (OIHW, torch).
  gamma/beta/alpha: [Cout].  Returns [N, Cout, H, W] float32."""
  n, cin, h, w = x.shape
  cout = weight.shape[0]
  kh = kw = kernel_size
  pad = padding
  cout_pad = _round_up(cout, LANE)            # lane-dense output / MXU N dim
  hp, wp = h + 2 * pad, w + 2 * pad

  # --- layout prep at the module boundary (NHWC + bf16 inside) -------------
  x_nhwc = jnp.transpose(x, (0, 2, 3, 1))
  xp = jnp.pad(x_nhwc, ((0, 0), (pad, pad), (pad, pad), (0, 0)))
  xp = xp.astype(jnp.bfloat16)

  # OIHW -> [kh*kw, Cin, Cout_pad] bf16 (tap-major for the 9 shifted matmuls).
  w_taps = jnp.transpose(weight, (2, 3, 1, 0)).reshape(kh * kw, cin, cout)
  w_taps = jnp.pad(w_taps, ((0, 0), (0, 0), (0, cout_pad - cout)))
  w_taps = w_taps.astype(jnp.bfloat16)

  th = _row_tile(h, w)
  grid1 = (n, h // th)

  kernel1 = functools.partial(_conv_stats_kernel, th=th, w_out=w, cin=cin,
                              cout_pad=cout_pad, kh=kh, kw=kw)
  y, stats = pl.pallas_call(
      kernel1,
      grid=grid1,
      in_specs=[
          # whole padded image stays VMEM-resident across the row-tile axis
          pl.BlockSpec((None, hp, wp, cin), lambda i, t: (i, 0, 0, 0)),
          pl.BlockSpec((kh * kw, cin, cout_pad), lambda i, t: (0, 0, 0)),
      ],
      out_specs=[
          pl.BlockSpec((None, th, w, cout_pad), lambda i, t: (i, t, 0, 0)),
          pl.BlockSpec((2, cout_pad), lambda i, t: (0, 0)),   # grid accumulator
      ],
      out_shape=(
          jax.ShapeDtypeStruct((n, h, w, cout_pad), jnp.float32),
          jax.ShapeDtypeStruct((2, cout_pad), jnp.float32),
      ),
      compiler_params=pltpu.CompilerParams(
          # BN stats are carried across the whole grid -> both axes serial.
          dimension_semantics=("arbitrary", "arbitrary"),
          vmem_limit_bytes=32 * 1024 * 1024),
  )(xp, w_taps)

  # --- fold BN batch statistics (training mode, biased var) into scale/bias --
  m_total = n * h * w
  gamma_p = jnp.pad(gamma.astype(jnp.float32), (0, cout_pad - cout))
  beta_p = jnp.pad(beta.astype(jnp.float32), (0, cout_pad - cout))
  alpha_p = jnp.pad(alpha.astype(jnp.float32), (0, cout_pad - cout))

  mean = stats[0] / m_total
  var = jnp.maximum(stats[1] / m_total - mean * mean, 0.0)
  inv_std = lax.rsqrt(var + BN_EPS)
  scale = (gamma_p * inv_std).reshape(1, cout_pad)
  bias = (beta_p - mean * gamma_p * inv_std).reshape(1, cout_pad)
  alpha2 = alpha_p.reshape(1, cout_pad)

  # --- phase 2: tiled, megacore-parallel BN-apply + PReLU -------------------
  y2 = y.reshape(m_total, cout_pad)             # flat NHWC rows, lane-dense
  tm = _m_tile(m_total)
  out2 = pl.pallas_call(
      _bn_act_kernel,
      grid=(m_total // tm,),
      in_specs=[
          pl.BlockSpec((tm, cout_pad), lambda i: (i, 0)),
          pl.BlockSpec((1, cout_pad), lambda i: (0, 0)),
          pl.BlockSpec((1, cout_pad), lambda i: (0, 0)),
          pl.BlockSpec((1, cout_pad), lambda i: (0, 0)),
      ],
      out_specs=pl.BlockSpec((tm, cout_pad), lambda i: (i, 0)),
      out_shape=jax.ShapeDtypeStruct((m_total, cout_pad), jnp.float32),
      compiler_params=pltpu.CompilerParams(
          dimension_semantics=("parallel",),
          vmem_limit_bytes=32 * 1024 * 1024),
  )(y2, scale, bias, alpha2)

  # strip channel padding, back to NCHW only at the module boundary
  out_nhwc = out2[:, :cout].reshape(n, h, w, cout)
  return jnp.transpose(out_nhwc, (0, 3, 1, 2))


def _reference(x, weight, gamma, beta, alpha):
  """Pure-JAX reference mirroring torch Conv2d(bias=False)->BN(train)->PReLU.

  Inputs are rounded to bf16 (exactly what the kernel feeds the MXU, with f32
  accumulation on both sides) so the comparison isolates kernel correctness
  rather than bf16 input rounding."""
  xb = x.astype(jnp.bfloat16).astype(jnp.float32)
  wb = weight.astype(jnp.bfloat16).astype(jnp.float32)
  y = lax.conv_general_dilated(
      xb, wb, window_strides=(1, 1), padding=((1, 1), (1, 1)),
      dimension_numbers=("NCHW", "OIHW", "NCHW"),
      precision=lax.Precision.HIGHEST)
  mean = jnp.mean(y, axis=(0, 2, 3), keepdims=True)
  var = jnp.mean((y - mean) ** 2, axis=(0, 2, 3), keepdims=True)
  y = (y - mean) * lax.rsqrt(var + BN_EPS)
  y = y * gamma[None, :, None, None] + beta[None, :, None, None]
  a = alpha[None, :, None, None]
  return jnp.where(y > 0, y, a * y)


if __name__ == "__main__":
  key = jax.random.PRNGKey(0)
  k_x, k_w, k_g, k_b = jax.random.split(key, 4)

  N, CIN, COUT, H, W = 2, 4, 8, 16, 16
  x = jax.random.normal(k_x, (N, CIN, H, W), dtype=jnp.float32)
  weight = 0.1 * jax.random.normal(k_w, (COUT, CIN, 3, 3), dtype=jnp.float32)
  gamma = 1.0 + 0.1 * jax.random.normal(k_g, (COUT,), dtype=jnp.float32)
  beta = 0.1 * jax.random.normal(k_b, (COUT,), dtype=jnp.float32)
  alpha = jnp.full((COUT,), 0.25, dtype=jnp.float32)   # PReLU default init

  out = jax.block_until_ready(conv_block(x, weight, gamma, beta, alpha))
  ref = jax.block_until_ready(_reference(x, weight, gamma, beta, alpha))

  assert out.shape == (N, COUT, H, W)
  err = float(jnp.max(jnp.abs(out - ref)))
  assert jnp.allclose(out, ref, rtol=1e-3, atol=1e-3), (
      "mismatch vs reference, max abs err = %g" % err)

  print("KERNEL_OK")
</pallas_src>

<mosaic_0001>
module attributes {stable_mosaic.version = 11 : i64} {
  func.func @_conv_stats_kernel(%arg0: i32, %arg1: i32, %arg2: memref<1x18x18x4xbf16, #tpu.memory_space<vmem>>, %arg3: memref<9x4x128xbf16, #tpu.memory_space<vmem>>, %arg4: memref<1x16x16x128xf32, #tpu.memory_space<vmem>>, %arg5: memref<2x128xf32, #tpu.memory_space<vmem>>) attributes {dimension_semantics = [#tpu.dimension_semantics<arbitrary>, #tpu.dimension_semantics<arbitrary>], iteration_bounds = array<i64: 2, 1>, scalar_prefetch = 0 : i64, scratch_operands = 0 : i64, tpu.core_type = #tpu.core_type<tc>, window_params = [{transform_indices = @transform_0, window_bounds = array<i64: 1, 18, 18, 4>}, {pipeline_mode = #tpu.pipeline_mode<synchronous>, transform_indices = @transform_1, window_bounds = array<i64: 9, 4, 128>}, {transform_indices = @transform_2, window_bounds = array<i64: 1, 16, 16, 128>}, {pipeline_mode = #tpu.pipeline_mode<synchronous>, transform_indices = @transform_3, window_bounds = array<i64: 2, 128>}]} {
    %c0_i32 = arith.constant 0 : i32
    %0 = arith.cmpi eq, %arg0, %c0_i32 : i32
    %c0_i32_0 = arith.constant 0 : i32
    %1 = arith.cmpi eq, %arg1, %c0_i32_0 : i32
    %2 = arith.andi %0, %1 : i1
    %3 = arith.extui %2 : i1 to i32
    %c0_i32_1 = arith.constant 0 : i32
    %4 = arith.cmpi ne, %3, %c0_i32_1 : i32
    scf.if %4 {
      %cst_49 = arith.constant 0.000000e+00 : f32
      %86 = vector.broadcast %cst_49 : f32 to vector<2x128xf32>
      %c0_50 = arith.constant 0 : index
      %c0_51 = arith.constant 0 : index
      %87 = vector.load %arg5[%c0_50, %c0_51] : memref<2x128xf32, #tpu.memory_space<vmem>>, vector<2x128xf32>
      tpu.vector_store %arg5[%c0_50, %c0_51], %86 {strides = array<i32>} : memref<2x128xf32, #tpu.memory_space<vmem>>, vector<2x128xf32>,
    } else {
    }
    %c16_i32 = arith.constant 16 : i32
    %5 = arith.muli %arg1, %c16_i32 : i32
    %cst = arith.constant 0.000000e+00 : f32
    %6 = vector.broadcast %cst : f32 to vector<256x128xf32>
    %c0_i32_2 = arith.constant 0 : i32
    %7 = arith.addi %5, %c0_i32_2 : i32
    %c0 = arith.constant 0 : index
    %8 = arith.index_cast %7 : i32 to index
    %c0_3 = arith.constant 0 : index
    %c0_4 = arith.constant 0 : index
    %9 = vector.load %arg2[%c0, %8, %c0_3, %c0_4] : memref<1x18x18x4xbf16, #tpu.memory_space<vmem>>, vector<1x16x18x4xbf16>
    %10 = vector.shape_cast %9 : vector<1x16x18x4xbf16> to vector<16x18x4xbf16>
    %11 = vector.extract_strided_slice %10 {offsets = [0, 0, 0], sizes = [16, 16, 4], strides = [1, 1, 1]} : vector<16x18x4xbf16> to vector<16x16x4xbf16>
    %12 = vector.shape_cast %11 : vector<16x16x4xbf16> to vector<256x4xbf16>
    %c0_5 = arith.constant 0 : index
    %c0_6 = arith.constant 0 : index
    %c0_7 = arith.constant 0 : index
    %13 = vector.load %arg3[%c0_5, %c0_6, %c0_7] : memref<9x4x128xbf16, #tpu.memory_space<vmem>>, vector<1x4x128xbf16>
    %14 = vector.shape_cast %13 : vector<1x4x128xbf16> to vector<4x128xbf16>
    %cst_8 = arith.constant dense<0.000000e+00> : vector<256x128xf32>
    %15 = tpu.matmul %12, %14, %cst_8 {dimension_numbers = #tpu.dot_dimension_numbers<[1], [0], [0], [1], [0, 0, 1, 1], [], []>} : vector<256x4xbf16>, vector<4x128xbf16>, vector<256x128xf32> -> vector<256x128xf32>
    %16 = arith.addf %6, %15 : vector<256x128xf32>
    %17 = vector.extract_strided_slice %10 {offsets = [0, 1, 0], sizes = [16, 16, 4], strides = [1, 1, 1]} : vector<16x18x4xbf16> to vector<16x16x4xbf16>
    %18 = vector.shape_cast %17 : vector<16x16x4xbf16> to vector<256x4xbf16>
    %c1 = arith.constant 1 : index
    %c0_9 = arith.constant 0 : index
    %c0_10 = arith.constant 0 : index
    %19 = vector.load %arg3[%c1, %c0_9, %c0_10] : memref<9x4x128xbf16, #tpu.memory_space<vmem>>, vector<1x4x128xbf16>
    %20 = vector.shape_cast %19 : vector<1x4x128xbf16> to vector<4x128xbf16>
    %cst_11 = arith.constant dense<0.000000e+00> : vector<256x128xf32>
    %21 = tpu.matmul %18, %20, %cst_11 {dimension_numbers = #tpu.dot_dimension_numbers<[1], [0], [0], [1], [0, 0, 1, 1], [], []>} : vector<256x4xbf16>, vector<4x128xbf16>, vector<256x128xf32> -> vector<256x128xf32>
    %22 = arith.addf %16, %21 : vector<256x128xf32>
    %23 = vector.extract_strided_slice %10 {offsets = [0, 2, 0], sizes = [16, 16, 4], strides = [1, 1, 1]} : vector<16x18x4xbf16> to vector<16x16x4xbf16>
    %24 = vector.shape_cast %23 : vector<16x16x4xbf16> to vector<256x4xbf16>
    %c2 = arith.constant 2 : index
    %c0_12 = arith.constant 0 : index
    %c0_13 = arith.constant 0 : index
    %25 = vector.load %arg3[%c2, %c0_12, %c0_13] : memref<9x4x128xbf16, #tpu.memory_space<vmem>>, vector<1x4x128xbf16>
    %26 = vector.shape_cast %25 : vector<1x4x128xbf16> to vector<4x128xbf16>
    %cst_14 = arith.constant dense<0.000000e+00> : vector<256x128xf32>
    %27 = tpu.matmul %24, %26, %cst_14 {dimension_numbers = #tpu.dot_dimension_numbers<[1], [0], [0], [1], [0, 0, 1, 1], [], []>} : vector<256x4xbf16>, vector<4x128xbf16>, vector<256x128xf32> -> vector<256x128xf32>
    %28 = arith.addf %22, %27 : vector<256x128xf32>
    %c1_i32 = arith.constant 1 : i32
    %29 = arith.addi %5, %c1_i32 : i32
    %c0_15 = arith.constant 0 : index
    %30 = arith.index_cast %29 : i32 to index
    %c0_16 = arith.constant 0 : index
    %c0_17 = arith.constant 0 : index
    %31 = vector.load %arg2[%c0_15, %30, %c0_16, %c0_17] : memref<1x18x18x4xbf16, #tpu.memory_space<vmem>>, vector<1x16x18x4xbf16>
    %32 = vector.shape_cast %31 : vector<1x16x18x4xbf16> to vector<16x18x4xbf16>
    %33 = vector.extract_strided_slice %32 {offsets = [0, 0, 0], sizes = [16, 16, 4], strides = [1, 1, 1]} : vector<16x18x4xbf16> to vector<16x16x4xbf16>
    %34 = vector.shape_cast %33 : vector<16x16x4xbf16> to vector<256x4xbf16>
    %c3 = arith.constant 3 : index
    %c0_18 = arith.constant 0 : index
    %c0_19 = arith.constant 0 : index
    %35 = vector.load %arg3[%c3, %c0_18, %c0_19] : memref<9x4x128xbf16, #tpu.memory_space<vmem>>, vector<1x4x128xbf16>
    %36 = vector.shape_cast %35 : vector<1x4x128xbf16> to vector<4x128xbf16>
    %cst_20 = arith.constant dense<0.000000e+00> : vector<256x128xf32>
    %37 = tpu.matmul %34, %36, %cst_20 {dimension_numbers = #tpu.dot_dimension_numbers<[1], [0], [0], [1], [0, 0, 1, 1], [], []>} : vector<256x4xbf16>, vector<4x128xbf16>, vector<256x128xf32> -> vector<256x128xf32>
    %38 = arith.addf %28, %37 : vector<256x128xf32>
    %39 = vector.extract_strided_slice %32 {offsets = [0, 1, 0], sizes = [16, 16, 4], strides = [1, 1, 1]} : vector<16x18x4xbf16> to vector<16x16x4xbf16>
    %40 = vector.shape_cast %39 : vector<16x16x4xbf16> to vector<256x4xbf16>
    %c4 = arith.constant 4 : index
    %c0_21 = arith.constant 0 : index
    %c0_22 = arith.constant 0 : index
    %41 = vector.load %arg3[%c4, %c0_21, %c0_22] : memref<9x4x128xbf16, #tpu.memory_space<vmem>>, vector<1x4x128xbf16>
    %42 = vector.shape_cast %41 : vector<1x4x128xbf16> to vector<4x128xbf16>
    %cst_23 = arith.constant dense<0.000000e+00> : vector<256x128xf32>
    %43 = tpu.matmul %40, %42, %cst_23 {dimension_numbers = #tpu.dot_dimension_numbers<[1], [0], [0], [1], [0, 0, 1, 1], [], []>} : vector<256x4xbf16>, vector<4x128xbf16>, vector<256x128xf32> -> vector<256x128xf32>
    %44 = arith.addf %38, %43 : vector<256x128xf32>
    %45 = vector.extract_strided_slice %32 {offsets = [0, 2, 0], sizes = [16, 16, 4], strides = [1, 1, 1]} : vector<16x18x4xbf16> to vector<16x16x4xbf16>
    %46 = vector.shape_cast %45 : vector<16x16x4xbf16> to vector<256x4xbf16>
    %c5 = arith.constant 5 : index
    %c0_24 = arith.constant 0 : index
    %c0_25 = arith.constant 0 : index
    %47 = vector.load %arg3[%c5, %c0_24, %c0_25] : memref<9x4x128xbf16, #tpu.memory_space<vmem>>, vector<1x4x128xbf16>
    %48 = vector.shape_cast %47 : vector<1x4x128xbf16> to vector<4x128xbf16>
    %cst_26 = arith.constant dense<0.000000e+00> : vector<256x128xf32>
    %49 = tpu.matmul %46, %48, %cst_26 {dimension_numbers = #tpu.dot_dimension_numbers<[1], [0], [0], [1], [0, 0, 1, 1], [], []>} : vector<256x4xbf16>, vector<4x128xbf16>, vector<256x128xf32> -> vector<256x128xf32>
    %50 = arith.addf %44, %49 : vector<256x128xf32>
    %c2_i32 = arith.constant 2 : i32
    %51 = arith.addi %5, %c2_i32 : i32
    %c0_27 = arith.constant 0 : index
    %52 = arith.index_cast %51 : i32 to index
    %c0_28 = arith.constant 0 : index
    %c0_29 = arith.constant 0 : index
    %53 = vector.load %arg2[%c0_27, %52, %c0_28, %c0_29] : memref<1x18x18x4xbf16, #tpu.memory_space<vmem>>, vector<1x16x18x4xbf16>
    %54 = vector.shape_cast %53 : vector<1x16x18x4xbf16> to vector<16x18x4xbf16>
    %55 = vector.extract_strided_slice %54 {offsets = [0, 0, 0], sizes = [16, 16, 4], strides = [1, 1, 1]} : vector<16x18x4xbf16> to vector<16x16x4xbf16>
    %56 = vector.shape_cast %55 : vector<16x16x4xbf16> to vector<256x4xbf16>
    %c6 = arith.constant 6 : index
    %c0_30 = arith.constant 0 : index
    %c0_31 = arith.constant 0 : index
    %57 = vector.load %arg3[%c6, %c0_30, %c0_31] : memref<9x4x128xbf16, #tpu.memory_space<vmem>>, vector<1x4x128xbf16>
    %58 = vector.shape_cast %57 : vector<1x4x128xbf16> to vector<4x128xbf16>
    %cst_32 = arith.constant dense<0.000000e+00> : vector<256x128xf32>
    %59 = tpu.matmul %56, %58, %cst_32 {dimension_numbers = #tpu.dot_dimension_numbers<[1], [0], [0], [1], [0, 0, 1, 1], [], []>} : vector<256x4xbf16>, vector<4x128xbf16>, vector<256x128xf32> -> vector<256x128xf32>
    %60 = arith.addf %50, %59 : vector<256x128xf32>
    %61 = vector.extract_strided_slice %54 {offsets = [0, 1, 0], sizes = [16, 16, 4], strides = [1, 1, 1]} : vector<16x18x4xbf16> to vector<16x16x4xbf16>
    %62 = vector.shape_cast %61 : vector<16x16x4xbf16> to vector<256x4xbf16>
    %c7 = arith.constant 7 : index
    %c0_33 = arith.constant 0 : index
    %c0_34 = arith.constant 0 : index
    %63 = vector.load %arg3[%c7, %c0_33, %c0_34] : memref<9x4x128xbf16, #tpu.memory_space<vmem>>, vector<1x4x128xbf16>
    %64 = vector.shape_cast %63 : vector<1x4x128xbf16> to vector<4x128xbf16>
    %cst_35 = arith.constant dense<0.000000e+00> : vector<256x128xf32>
    %65 = tpu.matmul %62, %64, %cst_35 {dimension_numbers = #tpu.dot_dimension_numbers<[1], [0], [0], [1], [0, 0, 1, 1], [], []>} : vector<256x4xbf16>, vector<4x128xbf16>, vector<256x128xf32> -> vector<256x128xf32>
    %66 = arith.addf %60, %65 : vector<256x128xf32>
    %67 = vector.extract_strided_slice %54 {offsets = [0, 2, 0], sizes = [16, 16, 4], strides = [1, 1, 1]} : vector<16x18x4xbf16> to vector<16x16x4xbf16>
    %68 = vector.shape_cast %67 : vector<16x16x4xbf16> to vector<256x4xbf16>
    %c8 = arith.constant 8 : index
    %c0_36 = arith.constant 0 : index
    %c0_37 = arith.constant 0 : index
    %69 = vector.load %arg3[%c8, %c0_36, %c0_37] : memref<9x4x128xbf16, #tpu.memory_space<vmem>>, vector<1x4x128xbf16>
    %70 = vector.shape_cast %69 : vector<1x4x128xbf16> to vector<4x128xbf16>
    %cst_38 = arith.constant dense<0.000000e+00> : vector<256x128xf32>
    %71 = tpu.matmul %68, %70, %cst_38 {dimension_numbers = #tpu.dot_dimension_numbers<[1], [0], [0], [1], [0, 0, 1, 1], [], []>} : vector<256x4xbf16>, vector<4x128xbf16>, vector<256x128xf32> -> vector<256x128xf32>
    %72 = arith.addf %66, %71 : vector<256x128xf32>
    %73 = vector.shape_cast %72 : vector<256x128xf32> to vector<16x16x128xf32>
    %c0_39 = arith.constant 0 : index
    %c0_40 = arith.constant 0 : index
    %c0_41 = arith.constant 0 : index
    %c0_42 = arith.constant 0 : index
    %74 = vector.load %arg4[%c0_39, %c0_40, %c0_41, %c0_42] : memref<1x16x16x128xf32, #tpu.memory_space<vmem>>, vector<1x16x16x128xf32>
    %75 = vector.shape_cast %74 : vector<1x16x16x128xf32> to vector<16x16x128xf32>
    %76 = vector.shape_cast %73 : vector<16x16x128xf32> to vector<1x16x16x128xf32>
    tpu.vector_store %arg4[%c0_39, %c0_40, %c0_41, %c0_42], %76 {strides = array<i32>} : memref<1x16x16x128xf32, #tpu.memory_space<vmem>>, vector<1x16x16x128xf32>,
    %cst_43 = arith.constant dense<0.000000e+00> : vector<128xf32>
    %77 = vector.multi_reduction <add>, %72, %cst_43 [0] : vector<256x128xf32> to vector<128xf32>
    %78 = vector.shape_cast %77 : vector<128xf32> to vector<1x128xf32>
    %79 = arith.mulf %72, %72 : vector<256x128xf32>
    %cst_44 = arith.constant dense<0.000000e+00> : vector<128xf32>
    %80 = vector.multi_reduction <add>, %79, %cst_44 [0] : vector<256x128xf32> to vector<128xf32>
    %81 = vector.shape_cast %80 : vector<128xf32> to vector<1x128xf32>
    %c0_45 = arith.constant 0 : index
    %c0_46 = arith.constant 0 : index
    %82 = vector.load %arg5[%c0_45, %c0_46] : memref<2x128xf32, #tpu.memory_space<vmem>>, vector<2x128xf32>
    %83 = tpu.concatenate %78, %81 in 0 : vector<1x128xf32>, vector<1x128xf32> -> vector<2x128xf32>
    %84 = arith.addf %82, %83 : vector<2x128xf32>
    %c0_47 = arith.constant 0 : index
    %c0_48 = arith.constant 0 : index
    %85 = vector.load %arg5[%c0_47, %c0_48] : memref<2x128xf32, #tpu.memory_space<vmem>>, vector<2x128xf32>
    tpu.vector_store %arg5[%c0_47, %c0_48], %84 {strides = array<i32>} : memref<2x128xf32, #tpu.memory_space<vmem>>, vector<2x128xf32>,
    return
  }
  func.func @transform_0(%arg0: i32, %arg1: i32) -> (i32, i32, i32, i32) {
    %c0_i32 = arith.constant 0 : i32
    %c0_i32_0 = arith.constant 0 : i32
    %c0_i32_1 = arith.constant 0 : i32
    %c0_i32_2 = arith.constant 0 : i32
    return %arg0, %c0_i32, %c0_i32_0, %c0_i32_1 : i32, i32, i32, i32
  }
  func.func @transform_1(%arg0: i32, %arg1: i32) -> (i32, i32, i32) {
    %c0_i32 = arith.constant 0 : i32
    %c0_i32_0 = arith.constant 0 : i32
    %c0_i32_1 = arith.constant 0 : i32
    %c0_i32_2 = arith.constant 0 : i32
    return %c0_i32, %c0_i32_0, %c0_i32_1 : i32, i32, i32
  }
  func.func @transform_2(%arg0: i32, %arg1: i32) -> (i32, i32, i32, i32) {
    %c0_i32 = arith.constant 0 : i32
    %c0_i32_0 = arith.constant 0 : i32
    %c0_i32_1 = arith.constant 0 : i32
    return %arg0, %arg1, %c0_i32, %c0_i32_0 : i32, i32, i32, i32
  }
  func.func @transform_3(%arg0: i32, %arg1: i32) -> (i32, i32) {
    %c0_i32 = arith.constant 0 : i32
    %c0_i32_0 = arith.constant 0 : i32
    %c0_i32_1 = arith.constant 0 : i32
    return %c0_i32, %c0_i32_0 : i32, i32
  }
}

module attributes {stable_mosaic.version = 11 : i64} {
  func.func @_bn_act_kernel(%arg0: i32, %arg1: memref<512x128xf32, #tpu.memory_space<vmem>>, %arg2: memref<1x128xf32, #tpu.memory_space<vmem>>, %arg3: memref<1x128xf32, #tpu.memory_space<vmem>>, %arg4: memref<1x128xf32, #tpu.memory_space<vmem>>, %arg5: memref<512x128xf32, #tpu.memory_space<vmem>>) attributes {dimension_semantics = [#tpu.dimension_semantics<parallel>], iteration_bounds = array<i64: 1>, scalar_prefetch = 0 : i64, scratch_operands = 0 : i64, tpu.core_type = #tpu.core_type<tc>, window_params = [{transform_indices = @transform_0, window_bounds = array<i64: 512, 128>}, {pipeline_mode = #tpu.pipeline_mode<synchronous>, transform_indices = @transform_1, window_bounds = array<i64: 1, 128>}, {pipeline_mode = #tpu.pipeline_mode<synchronous>, transform_indices = @transform_2, window_bounds = array<i64: 1, 128>}, {pipeline_mode = #tpu.pipeline_mode<synchronous>, transform_indices = @transform_3, window_bounds = array<i64: 1, 128>}, {transform_indices = @transform_4, window_bounds = array<i64: 512, 128>}]} {
    %c0 = arith.constant 0 : index
    %c0_0 = arith.constant 0 : index
    %0 = vector.load %arg1[%c0, %c0_0] : memref<512x128xf32, #tpu.memory_space<vmem>>, vector<512x128xf32>
    %c0_1 = arith.constant 0 : index
    %c0_2 = arith.constant 0 : index
    %1 = vector.load %arg2[%c0_1, %c0_2] : memref<1x128xf32, #tpu.memory_space<vmem>>, vector<1x128xf32>
    %2 = vector.broadcast %1 : vector<1x128xf32> to vector<512x128xf32>
    %3 = arith.mulf %0, %2 : vector<512x128xf32>
    %c0_3 = arith.constant 0 : index
    %c0_4 = arith.constant 0 : index
    %4 = vector.load %arg3[%c0_3, %c0_4] : memref<1x128xf32, #tpu.memory_space<vmem>>, vector<1x128xf32>
    %5 = vector.broadcast %4 : vector<1x128xf32> to vector<512x128xf32>
    %6 = arith.addf %3, %5 : vector<512x128xf32>
    %cst = arith.constant 0.000000e+00 : f32
    %7 = vector.broadcast %cst : f32 to vector<512x128xf32>
    %8 = arith.cmpf ogt, %6, %7 : vector<512x128xf32>
    %c0_5 = arith.constant 0 : index
    %c0_6 = arith.constant 0 : index
    %9 = vector.load %arg4[%c0_5, %c0_6] : memref<1x128xf32, #tpu.memory_space<vmem>>, vector<1x128xf32>
    %10 = vector.broadcast %9 : vector<1x128xf32> to vector<512x128xf32>
    %11 = arith.mulf %10, %6 : vector<512x128xf32>
    %12 = arith.select %8, %6, %11 : vector<512x128xi1>, vector<512x128xf32>
    %c0_7 = arith.constant 0 : index
    %c0_8 = arith.constant 0 : index
    %13 = vector.load %arg5[%c0_7, %c0_8] : memref<512x128xf32, #tpu.memory_space<vmem>>, vector<512x128xf32>
    tpu.vector_store %arg5[%c0_7, %c0_8], %12 {strides = array<i32>} : memref<512x128xf32, #tpu.memory_space<vmem>>, vector<512x128xf32>,
    return
  }
  func.func @transform_0(%arg0: i32) -> (i32, i32) {
    %c0_i32 = arith.constant 0 : i32
    %c0_i32_0 = arith.constant 0 : i32
    return %arg0, %c0_i32 : i32, i32
  }
  func.func @transform_1(%arg0: i32) -> (i32, i32) {
    %c0_i32 = arith.constant 0 : i32
    %c0_i32_0 = arith.constant 0 : i32
    %c0_i32_1 = arith.constant 0 : i32
    return %c0_i32, %c0_i32_0 : i32, i32
  }
  func.func @transform_2(%arg0: i32) -> (i32, i32) {
    %c0_i32 = arith.constant 0 : i32
    %c0_i32_0 = arith.constant 0 : i32
    %c0_i32_1 = arith.constant 0 : i32
    return %c0_i32, %c0_i32_0 : i32, i32
  }
  func.func @transform_3(%arg0: i32) -> (i32, i32) {
    %c0_i32 = arith.constant 0 : i32
    %c0_i32_0 = arith.constant 0 : i32
    %c0_i32_1 = arith.constant 0 : i32
    return %c0_i32, %c0_i32_0 : i32, i32
  }
  func.func @transform_4(%arg0: i32) -> (i32, i32) {
    %c0_i32 = arith.constant 0 : i32
    %c0_i32_0 = arith.constant 0 : i32
    return %arg0, %c0_i32 : i32, i32
  }
}

</mosaic_0001>

<llo_original>
// kernel: conv_block.3
$region0: #{conv_block.3}
  #allocation0 [shape = 'u32[]', space=smem, size = 0x4, offset = 0x4, fixed_abs, tag = 'smem constant byte address 0x4 - core index']
  #allocation1 [shape = 'u32[144,128]{1,0:T(1,128)}', space=vmem, size = 0x12000, scoped, tag = 'internal scratch']
  %s0 = inlined_call_operand.vmem [shape: f32[512,128], index: 0, kind: input, shape index: {}]
  %s1 = inlined_call_operand.vmem [shape: f32[1,128], index: 1, kind: input, shape index: {}]
  %s2 = inlined_call_operand.vmem [shape: f32[1,128], index: 2, kind: input, shape index: {}]
  %s3 = inlined_call_operand.vmem [shape: f32[1,128], index: 3, kind: input, shape index: {}]
  %s4 = inlined_call_operand.vmem [shape: f32[512,128], index: 4, kind: output, shape index: {}]
  %s5 = sld [smem:[#allocation0]]
  $region26: #{conv_block.3} parent=0
    _
  %s7 = ssub.s32 1, %s5
  %s8 = scalar_select 0, %s7, %s5
  // Predicated region
  $region2: #{conv_block.3} parent=0 // pred_check
    _
  $region3: #{conv_block.3} parent=0 // pred_check_branch
    %10 = sbr.rel (0) target = $region5
  $region4: #{conv_block.3} parent=0 // pred_region
    _
  $region5: #{conv_block.3} parent=0 // pred_fallthru
    _
  // Predicated region
  $region6: #{conv_block.3} parent=0 // pred_check
    _
  $region7: #{conv_block.3} parent=0 // pred_check_branch
    %12 = sbr.rel (0) target = $region9
  $region8: #{conv_block.3} parent=0 // pred_region
    _
  $region9: #{conv_block.3} parent=0 // pred_fallthru
    _
  // Predicated region
  $region10: #{conv_block.3} parent=0 // pred_check
    _
  $region11: #{conv_block.3} parent=0 // pred_check_branch
    %14 = sbr.rel (0) target = $region13
  $region12: #{conv_block.3} parent=0 // pred_region
    _
  $region13: #{conv_block.3} parent=0 // pred_fallthru
    _
  // Predicated region
  $region14: #{conv_block.3} parent=0 // pred_check
    _
  $region15: #{conv_block.3} parent=0 // pred_check_branch
    %16 = sbr.rel (0) target = $region17
  $region16: #{conv_block.3} parent=0 // pred_region
    _
  $region17: #{conv_block.3} parent=0 // pred_fallthru
    _
  %v17 = vld [vmem:[%s0] sm:$0xff]
  %v18 = vld [vmem:[%s0 + $0x8] sm:$0xff]
  %v19 = vld [vmem:[%s0 + $0x10] sm:$0xff]
  %v20 = vld [vmem:[%s0 + $0x18] sm:$0xff]
  %v21 = vld [vmem:[%s0 + $0x20] sm:$0xff]
  %v22 = vld [vmem:[%s0 + $0x28] sm:$0xff]
  %v23 = vld [vmem:[%s0 + $0x30] sm:$0xff]
  %v24 = vld [vmem:[%s0 + $0x38] sm:$0xff]
  %v25 = vld [vmem:[%s0 + $0x40] sm:$0xff]
  %v26 = vld [vmem:[%s0 + $0x48] sm:$0xff]
  %v27 = vld [vmem:[%s0 + $0x50] sm:$0xff]
  %v28 = vld [vmem:[%s0 + $0x58] sm:$0xff]
  %v29 = vld [vmem:[%s0 + $0x60] sm:$0xff]
  %v30 = vld [vmem:[%s0 + $0x68] sm:$0xff]
  %v31 = vld [vmem:[%s0 + $0x70] sm:$0xff]
  %v32 = vld [vmem:[%s0 + $0x78] sm:$0xff]
  %v33 = vld [vmem:[%s0 + $0x80] sm:$0xff]
  %v34 = vld [vmem:[%s0 + $0x88] sm:$0xff]
  %v35 = vld [vmem:[%s0 + $0x90] sm:$0xff]
  %v36 = vld [vmem:[%s0 + $0x98] sm:$0xff]
  %v37 = vld [vmem:[%s0 + $0xa0] sm:$0xff]
  %v38 = vld [vmem:[%s0 + $0xa8] sm:$0xff]
  %v39 = vld [vmem:[%s0 + $0xb0] sm:$0xff]
  %v40 = vld [vmem:[%s0 + $0xb8] sm:$0xff]
  %v41 = vld [vmem:[%s0 + $0xc0] sm:$0xff]
  %v42 = vld [vmem:[%s0 + $0xc8] sm:$0xff]
  %v43 = vld [vmem:[%s0 + $0xd0] sm:$0xff]
  %v44 = vld [vmem:[%s0 + $0xd8] sm:$0xff]
  %v45 = vld [vmem:[%s0 + $0xe0] sm:$0xff]
  %v46 = vld [vmem:[%s0 + $0xe8] sm:$0xff]
  %v47 = vld [vmem:[%s0 + $0xf0] sm:$0xff]
  %v48 = vld [vmem:[%s0 + $0xf8] sm:$0xff]
  %v49 = vld [vmem:[%s0 + $0x100] sm:$0xff]
  %v50 = vld [vmem:[%s0 + $0x108] sm:$0xff]
  %v51 = vld [vmem:[%s0 + $0x110] sm:$0xff]
  %v52 = vld [vmem:[%s0 + $0x118] sm:$0xff]
  %v53 = vld [vmem:[%s0 + $0x120] sm:$0xff]
  %v54 = vld [vmem:[%s0 + $0x128] sm:$0xff]
  %v55 = vld [vmem:[%s0 + $0x130] sm:$0xff]
  %v56 = vld [vmem:[%s0 + $0x138] sm:$0xff]
  %v57 = vld [vmem:[%s0 + $0x140] sm:$0xff]
  %v58 = vld [vmem:[%s0 + $0x148] sm:$0xff]
  %v59 = vld [vmem:[%s0 + $0x150] sm:$0xff]
  %v60 = vld [vmem:[%s0 + $0x158] sm:$0xff]
  %v61 = vld [vmem:[%s0 + $0x160] sm:$0xff]
  %v62 = vld [vmem:[%s0 + $0x168] sm:$0xff]
  %v63 = vld [vmem:[%s0 + $0x170] sm:$0xff]
  %v64 = vld [vmem:[%s0 + $0x178] sm:$0xff]
  %v65 = vld [vmem:[%s0 + $0x180] sm:$0xff]
  %v66 = vld [vmem:[%s0 + $0x188] sm:$0xff]
  %v67 = vld [vmem:[%s0 + $0x190] sm:$0xff]
  %v68 = vld [vmem:[%s0 + $0x198] sm:$0xff]
  %v69 = vld [vmem:[%s0 + $0x1a0] sm:$0xff]
  %v70 = vld [vmem:[%s0 + $0x1a8] sm:$0xff]
  %v71 = vld [vmem:[%s0 + $0x1b0] sm:$0xff]
  %v72 = vld [vmem:[%s0 + $0x1b8] sm:$0xff]
  %v73 = vld [vmem:[%s0 + $0x1c0] sm:$0xff]
  %v74 = vld [vmem:[%s0 + $0x1c8] sm:$0xff]
  %v75 = vld [vmem:[%s0 + $0x1d0] sm:$0xff]
  %v76 = vld [vmem:[%s0 + $0x1d8] sm:$0xff]
  %v77 = vld [vmem:[%s0 + $0x1e0] sm:$0xff]
  %v78 = vld [vmem:[%s0 + $0x1e8] sm:$0xff]
  %v79 = vld [vmem:[%s0 + $0x1f0] sm:$0xff]
  %v80 = vld [vmem:[%s0 + $0x1f8] sm:$0xff]
  %v81 = vld [vmem:[%s1] sm:$0x1]
  %v83 = vlaneseq
  %v84 = vshrl.u32 %v83, 7
  %v85 = vsub.s32 0, %v84
  %v86 = vrot.slane %v81, %v85
  %v88 = vmul.f32 %v17, %v86
  %v89 = vmul.f32 %v18, %v86
  %v90 = vmul.f32 %v19, %v86
  %v91 = vmul.f32 %v20, %v86
  %v92 = vmul.f32 %v21, %v86
  %v93 = vmul.f32 %v22, %v86
  %v94 = vmul.f32 %v23, %v86
  %v95 = vmul.f32 %v24, %v86
  %v96 = vmul.f32 %v25, %v86
  %v97 = vmul.f32 %v26, %v86
  %v98 = vmul.f32 %v27, %v86
  %v99 = vmul.f32 %v28, %v86
  %v100 = vmul.f32 %v29, %v86
  %v101 = vmul.f32 %v30, %v86
  %v102 = vmul.f32 %v31, %v86
  %v103 = vmul.f32 %v32, %v86
  %v104 = vmul.f32 %v33, %v86
  %v105 = vmul.f32 %v34, %v86
  %v106 = vmul.f32 %v35, %v86
  %v107 = vmul.f32 %v36, %v86
  %v108 = vmul.f32 %v37, %v86
  %v109 = vmul.f32 %v38, %v86
  %v110 = vmul.f32 %v39, %v86
  %v111 = vmul.f32 %v40, %v86
  %v112 = vmul.f32 %v41, %v86
  %v113 = vmul.f32 %v42, %v86
  %v114 = vmul.f32 %v43, %v86
  %v115 = vmul.f32 %v44, %v86
  %v116 = vmul.f32 %v45, %v86
  %v117 = vmul.f32 %v46, %v86
  %v118 = vmul.f32 %v47, %v86
  %v119 = vmul.f32 %v48, %v86
  %v120 = vmul.f32 %v49, %v86
  %v121 = vmul.f32 %v50, %v86
  %v122 = vmul.f32 %v51, %v86
  %v123 = vmul.f32 %v52, %v86
  %v124 = vmul.f32 %v53, %v86
  %v125 = vmul.f32 %v54, %v86
  %v126 = vmul.f32 %v55, %v86
  %v127 = vmul.f32 %v56, %v86
  %v128 = vmul.f32 %v57, %v86
  %v129 = vmul.f32 %v58, %v86
  %v130 = vmul.f32 %v59, %v86
  %v131 = vmul.f32 %v60, %v86
  %v132 = vmul.f32 %v61, %v86
  %v133 = vmul.f32 %v62, %v86
  %v134 = vmul.f32 %v63, %v86
  %v135 = vmul.f32 %v64, %v86
  %v136 = vmul.f32 %v65, %v86
  %v137 = vmul.f32 %v66, %v86
  %v138 = vmul.f32 %v67, %v86
  %v139 = vmul.f32 %v68, %v86
  %v140 = vmul.f32 %v69, %v86
  %v141 = vmul.f32 %v70, %v86
  %v142 = vmul.f32 %v71, %v86
  %v143 = vmul.f32 %v72, %v86
  %v144 = vmul.f32 %v73, %v86
  %v145 = vmul.f32 %v74, %v86
  %v146 = vmul.f32 %v75, %v86
  %v147 = vmul.f32 %v76, %v86
  %v148 = vmul.f32 %v77, %v86
  %v149 = vmul.f32 %v78, %v86
  %v150 = vmul.f32 %v79, %v86
  %v151 = vmul.f32 %v80, %v86
  %v152 = vld [vmem:[%s2] sm:$0x1]
  %v154 = vlaneseq
  %v155 = vshrl.u32 %v154, 7
  %v156 = vsub.s32 0, %v155
  %v157 = vrot.slane %v152, %v156
  %v159 = vadd.f32 %v88, %v157
  %v160 = vadd.f32 %v89, %v157
  %v161 = vadd.f32 %v90, %v157
  %v162 = vadd.f32 %v91, %v157
  %v163 = vadd.f32 %v92, %v157
  %v164 = vadd.f32 %v93, %v157
  %v165 = vadd.f32 %v94, %v157
  %v166 = vadd.f32 %v95, %v157
  %v167 = vadd.f32 %v96, %v157
  %v168 = vadd.f32 %v97, %v157
  %v169 = vadd.f32 %v98, %v157
  %v170 = vadd.f32 %v99, %v157
  %v171 = vadd.f32 %v100, %v157
  %v172 = vadd.f32 %v101, %v157
  %v173 = vadd.f32 %v102, %v157
  %v174 = vadd.f32 %v103, %v157
  %v175 = vadd.f32 %v104, %v157
  %v176 = vadd.f32 %v105, %v157
  %v177 = vadd.f32 %v106, %v157
  %v178 = vadd.f32 %v107, %v157
  %v179 = vadd.f32 %v108, %v157
  %v180 = vadd.f32 %v109, %v157
  %v181 = vadd.f32 %v110, %v157
  %v182 = vadd.f32 %v111, %v157
  %v183 = vadd.f32 %v112, %v157
  %v184 = vadd.f32 %v113, %v157
  %v185 = vadd.f32 %v114, %v157
  %v186 = vadd.f32 %v115, %v157
  %v187 = vadd.f32 %v116, %v157
  %v188 = vadd.f32 %v117, %v157
  %v189 = vadd.f32 %v118, %v157
  %v190 = vadd.f32 %v119, %v157
  %v191 = vadd.f32 %v120, %v157
  %v192 = vadd.f32 %v121, %v157
  %v193 = vadd.f32 %v122, %v157
  %v194 = vadd.f32 %v123, %v157
  %v195 = vadd.f32 %v124, %v157
  %v196 = vadd.f32 %v125, %v157
  %v197 = vadd.f32 %v126, %v157
  %v198 = vadd.f32 %v127, %v157
  %v199 = vadd.f32 %v128, %v157
  %v200 = vadd.f32 %v129, %v157
  %v201 = vadd.f32 %v130, %v157
  %v202 = vadd.f32 %v131, %v157
  %v203 = vadd.f32 %v132, %v157
  %v204 = vadd.f32 %v133, %v157
  %v205 = vadd.f32 %v134, %v157
  %v206 = vadd.f32 %v135, %v157
  %v207 = vadd.f32 %v136, %v157
  %v208 = vadd.f32 %v137, %v157
  %v209 = vadd.f32 %v138, %v157
  %v210 = vadd.f32 %v139, %v157
  %v211 = vadd.f32 %v140, %v157
  %v212 = vadd.f32 %v141, %v157
  %v213 = vadd.f32 %v142, %v157
  %v214 = vadd.f32 %v143, %v157
  %v215 = vadd.f32 %v144, %v157
  %v216 = vadd.f32 %v145, %v157
  %v217 = vadd.f32 %v146, %v157
  %v218 = vadd.f32 %v147, %v157
  %v219 = vadd.f32 %v148, %v157
  %v220 = vadd.f32 %v149, %v157
  %v221 = vadd.f32 %v150, %v157
  %v222 = vadd.f32 %v151, %v157
  %vm223 = vcmp.gt.f32.partialorder %v159, 0.0
  %vm224 = vcmp.gt.f32.partialorder %v160, 0.0
  %vm225 = vcmp.gt.f32.partialorder %v161, 0.0
  %vm226 = vcmp.gt.f32.partialorder %v162, 0.0
  %vm227 = vcmp.gt.f32.partialorder %v163, 0.0
  %vm228 = vcmp.gt.f32.partialorder %v164, 0.0
  %vm229 = vcmp.gt.f32.partialorder %v165, 0.0
  %vm230 = vcmp.gt.f32.partialorder %v166, 0.0
  %vm231 = vcmp.gt.f32.partialorder %v167, 0.0
  %vm232 = vcmp.gt.f32.partialorder %v168, 0.0
  %vm233 = vcmp.gt.f32.partialorder %v169, 0.0
  %vm234 = vcmp.gt.f32.partialorder %v170, 0.0
  %vm235 = vcmp.gt.f32.partialorder %v171, 0.0
  %vm236 = vcmp.gt.f32.partialorder %v172, 0.0
  %vm237 = vcmp.gt.f32.partialorder %v173, 0.0
  %vm238 = vcmp.gt.f32.partialorder %v174, 0.0
  %vm239 = vcmp.gt.f32.partialorder %v175, 0.0
  %vm240 = vcmp.gt.f32.partialorder %v176, 0.0
  %vm241 = vcmp.gt.f32.partialorder %v177, 0.0
  %vm242 = vcmp.gt.f32.partialorder %v178, 0.0
  %vm243 = vcmp.gt.f32.partialorder %v179, 0.0
  %vm244 = vcmp.gt.f32.partialorder %v180, 0.0
  %vm245 = vcmp.gt.f32.partialorder %v181, 0.0
  %vm246 = vcmp.gt.f32.partialorder %v182, 0.0
  %vm247 = vcmp.gt.f32.partialorder %v183, 0.0
  %vm248 = vcmp.gt.f32.partialorder %v184, 0.0
  %vm249 = vcmp.gt.f32.partialorder %v185, 0.0
  %vm250 = vcmp.gt.f32.partialorder %v186, 0.0
  %vm251 = vcmp.gt.f32.partialorder %v187, 0.0
  %vm252 = vcmp.gt.f32.partialorder %v188, 0.0
  %vm253 = vcmp.gt.f32.partialorder %v189, 0.0
  %vm254 = vcmp.gt.f32.partialorder %v190, 0.0
  %vm255 = vcmp.gt.f32.partialorder %v191, 0.0
  %vm256 = vcmp.gt.f32.partialorder %v192, 0.0
  %vm257 = vcmp.gt.f32.partialorder %v193, 0.0
  %vm258 = vcmp.gt.f32.partialorder %v194, 0.0
  %vm259 = vcmp.gt.f32.partialorder %v195, 0.0
  %vm260 = vcmp.gt.f32.partialorder %v196, 0.0
  %vm261 = vcmp.gt.f32.partialorder %v197, 0.0
  %vm262 = vcmp.gt.f32.partialorder %v198, 0.0
  %vm263 = vcmp.gt.f32.partialorder %v199, 0.0
  %vm264 = vcmp.gt.f32.partialorder %v200, 0.0
  %vm265 = vcmp.gt.f32.partialorder %v201, 0.0
  %vm266 = vcmp.gt.f32.partialorder %v202, 0.0
  %vm267 = vcmp.gt.f32.partialorder %v203, 0.0
  %vm268 = vcmp.gt.f32.partialorder %v204, 0.0
  %vm269 = vcmp.gt.f32.partialorder %v205, 0.0
  %vm270 = vcmp.gt.f32.partialorder %v206, 0.0
  %vm271 = vcmp.gt.f32.partialorder %v207, 0.0
  %vm272 = vcmp.gt.f32.partialorder %v208, 0.0
  %vm273 = vcmp.gt.f32.partialorder %v209, 0.0
  %vm274 = vcmp.gt.f32.partialorder %v210, 0.0
  %vm275 = vcmp.gt.f32.partialorder %v211, 0.0
  %vm276 = vcmp.gt.f32.partialorder %v212, 0.0
  %vm277 = vcmp.gt.f32.partialorder %v213, 0.0
  %vm278 = vcmp.gt.f32.partialorder %v214, 0.0
  %vm279 = vcmp.gt.f32.partialorder %v215, 0.0
  %vm280 = vcmp.gt.f32.partialorder %v216, 0.0
  %vm281 = vcmp.gt.f32.partialorder %v217, 0.0
  %vm282 = vcmp.gt.f32.partialorder %v218, 0.0
  %vm283 = vcmp.gt.f32.partialorder %v219, 0.0
  %vm284 = vcmp.gt.f32.partialorder %v220, 0.0
  %vm285 = vcmp.gt.f32.partialorder %v221, 0.0
  %vm286 = vcmp.gt.f32.partialorder %v222, 0.0
  %v287 = vld [vmem:[%s3] sm:$0x1]
  %v289 = vlaneseq
  %v290 = vshrl.u32 %v289, 7
  %v291 = vsub.s32 0, %v290
  %v292 = vrot.slane %v287, %v291
  %v294 = vmul.f32 %v292, %v159
  %v295 = vmul.f32 %v292, %v160
  %v296 = vmul.f32 %v292, %v161
  %v297 = vmul.f32 %v292, %v162
  %v298 = vmul.f32 %v292, %v163
  %v299 = vmul.f32 %v292, %v164
  %v300 = vmul.f32 %v292, %v165
  %v301 = vmul.f32 %v292, %v166
  %v302 = vmul.f32 %v292, %v167
  %v303 = vmul.f32 %v292, %v168
  %v304 = vmul.f32 %v292, %v169
  %v305 = vmul.f32 %v292, %v170
  %v306 = vmul.f32 %v292, %v171
  %v307 = vmul.f32 %v292, %v172
  %v308 = vmul.f32 %v292, %v173
  %v309 = vmul.f32 %v292, %v174
  %v310 = vmul.f32 %v292, %v175
  %v311 = vmul.f32 %v292, %v176
  %v312 = vmul.f32 %v292, %v177
  %v313 = vmul.f32 %v292, %v178
  %v314 = vmul.f32 %v292, %v179
  %v315 = vmul.f32 %v292, %v180
  %v316 = vmul.f32 %v292, %v181
  %v317 = vmul.f32 %v292, %v182
  %v318 = vmul.f32 %v292, %v183
  %v319 = vmul.f32 %v292, %v184
  %v320 = vmul.f32 %v292, %v185
  %v321 = vmul.f32 %v292, %v186
  %v322 = vmul.f32 %v292, %v187
  %v323 = vmul.f32 %v292, %v188
  %v324 = vmul.f32 %v292, %v189
  %v325 = vmul.f32 %v292, %v190
  %v326 = vmul.f32 %v292, %v191
  %v327 = vmul.f32 %v292, %v192
  %v328 = vmul.f32 %v292, %v193
  %v329 = vmul.f32 %v292, %v194
  %v330 = vmul.f32 %v292, %v195
  %v331 = vmul.f32 %v292, %v196
  %v332 = vmul.f32 %v292, %v197
  %v333 = vmul.f32 %v292, %v198
  %v334 = vmul.f32 %v292, %v199
  %v335 = vmul.f32 %v292, %v200
  %v336 = vmul.f32 %v292, %v201
  %v337 = vmul.f32 %v292, %v202
  %v338 = vmul.f32 %v292, %v203
  %v339 = vmul.f32 %v292, %v204
  %v340 = vmul.f32 %v292, %v205
  %v341 = vmul.f32 %v292, %v206
  %v342 = vmul.f32 %v292, %v207
  %v343 = vmul.f32 %v292, %v208
  %v344 = vmul.f32 %v292, %v209
  %v345 = vmul.f32 %v292, %v210
  %v346 = vmul.f32 %v292, %v211
  %v347 = vmul.f32 %v292, %v212
  %v348 = vmul.f32 %v292, %v213
  %v349 = vmul.f32 %v292, %v214
  %v350 = vmul.f32 %v292, %v215
  %v351 = vmul.f32 %v292, %v216
  %v352 = vmul.f32 %v292, %v217
  %v353 = vmul.f32 %v292, %v218
  %v354 = vmul.f32 %v292, %v219
  %v355 = vmul.f32 %v292, %v220
  %v356 = vmul.f32 %v292, %v221
  %v357 = vmul.f32 %v292, %v222
  %v358 = vsel %vm223, %v159, %v294
  %v359 = vsel %vm224, %v160, %v295
  %v360 = vsel %vm225, %v161, %v296
  %v361 = vsel %vm226, %v162, %v297
  %v362 = vsel %vm227, %v163, %v298
  %v363 = vsel %vm228, %v164, %v299
  %v364 = vsel %vm229, %v165, %v300
  %v365 = vsel %vm230, %v166, %v301
  %v366 = vsel %vm231, %v167, %v302
  %v367 = vsel %vm232, %v168, %v303
  %v368 = vsel %vm233, %v169, %v304
  %v369 = vsel %vm234, %v170, %v305
  %v370 = vsel %vm235, %v171, %v306
  %v371 = vsel %vm236, %v172, %v307
  %v372 = vsel %vm237, %v173, %v308
  %v373 = vsel %vm238, %v174, %v309
  %v374 = vsel %vm239, %v175, %v310
  %v375 = vsel %vm240, %v176, %v311
  %v376 = vsel %vm241, %v177, %v312
  %v377 = vsel %vm242, %v178, %v313
  %v378 = vsel %vm243, %v179, %v314
  %v379 = vsel %vm244, %v180, %v315
  %v380 = vsel %vm245, %v181, %v316
  %v381 = vsel %vm246, %v182, %v317
  %v382 = vsel %vm247, %v183, %v318
  %v383 = vsel %vm248, %v184, %v319
  %v384 = vsel %vm249, %v185, %v320
  %v385 = vsel %vm250, %v186, %v321
  %v386 = vsel %vm251, %v187, %v322
  %v387 = vsel %vm252, %v188, %v323
  %v388 = vsel %vm253, %v189, %v324
  %v389 = vsel %vm254, %v190, %v325
  %v390 = vsel %vm255, %v191, %v326
  %v391 = vsel %vm256, %v192, %v327
  %v392 = vsel %vm257, %v193, %v328
  %v393 = vsel %vm258, %v194, %v329
  %v394 = vsel %vm259, %v195, %v330
  %v395 = vsel %vm260, %v196, %v331
  %v396 = vsel %vm261, %v197, %v332
  %v397 = vsel %vm262, %v198, %v333
  %v398 = vsel %vm263, %v199, %v334
  %v399 = vsel %vm264, %v200, %v335
  %v400 = vsel %vm265, %v201, %v336
  %v401 = vsel %vm266, %v202, %v337
  %v402 = vsel %vm267, %v203, %v338
  %v403 = vsel %vm268, %v204, %v339
  %v404 = vsel %vm269, %v205, %v340
  %v405 = vsel %vm270, %v206, %v341
  %v406 = vsel %vm271, %v207, %v342
  %v407 = vsel %vm272, %v208, %v343
  %v408 = vsel %vm273, %v209, %v344
  %v409 = vsel %vm274, %v210, %v345
  %v410 = vsel %vm275, %v211, %v346
  %v411 = vsel %vm276, %v212, %v347
  %v412 = vsel %vm277, %v213, %v348
  %v413 = vsel %vm278, %v214, %v349
  %v414 = vsel %vm279, %v215, %v350
  %v415 = vsel %vm280, %v216, %v351
  %v416 = vsel %vm281, %v217, %v352
  %v417 = vsel %vm282, %v218, %v353
  %v418 = vsel %vm283, %v219, %v354
  %v419 = vsel %vm284, %v220, %v355
  %v420 = vsel %vm285, %v221, %v356
  %v421 = vsel %vm286, %v222, %v357
  %422 = vst [vmem:[%s4] sm:$0xff] %v358
  %423 = vst [vmem:[%s4 + $0x8] sm:$0xff] %v359
  %424 = vst [vmem:[%s4 + $0x10] sm:$0xff] %v360
  %425 = vst [vmem:[%s4 + $0x18] sm:$0xff] %v361
  %426 = vst [vmem:[%s4 + $0x20] sm:$0xff] %v362
  %427 = vst [vmem:[%s4 + $0x28] sm:$0xff] %v363
  %428 = vst [vmem:[%s4 + $0x30] sm:$0xff] %v364
  %429 = vst [vmem:[%s4 + $0x38] sm:$0xff] %v365
  %430 = vst [vmem:[%s4 + $0x40] sm:$0xff] %v366
  %431 = vst [vmem:[%s4 + $0x48] sm:$0xff] %v367
  %432 = vst [vmem:[%s4 + $0x50] sm:$0xff] %v368
  %433 = vst [vmem:[%s4 + $0x58] sm:$0xff] %v369
  %434 = vst [vmem:[%s4 + $0x60] sm:$0xff] %v370
  %435 = vst [vmem:[%s4 + $0x68] sm:$0xff] %v371
  %436 = vst [vmem:[%s4 + $0x70] sm:$0xff] %v372
  %437 = vst [vmem:[%s4 + $0x78] sm:$0xff] %v373
  %438 = vst [vmem:[%s4 + $0x80] sm:$0xff] %v374
  %439 = vst [vmem:[%s4 + $0x88] sm:$0xff] %v375
  %440 = vst [vmem:[%s4 + $0x90] sm:$0xff] %v376
  %441 = vst [vmem:[%s4 + $0x98] sm:$0xff] %v377
  %442 = vst [vmem:[%s4 + $0xa0] sm:$0xff] %v378
  %443 = vst [vmem:[%s4 + $0xa8] sm:$0xff] %v379
  %444 = vst [vmem:[%s4 + $0xb0] sm:$0xff] %v380
  %445 = vst [vmem:[%s4 + $0xb8] sm:$0xff] %v381
  %446 = vst [vmem:[%s4 + $0xc0] sm:$0xff] %v382
  %447 = vst [vmem:[%s4 + $0xc8] sm:$0xff] %v383
  %448 = vst [vmem:[%s4 + $0xd0] sm:$0xff] %v384
  %449 = vst [vmem:[%s4 + $0xd8] sm:$0xff] %v385
  %450 = vst [vmem:[%s4 + $0xe0] sm:$0xff] %v386
  %451 = vst [vmem:[%s4 + $0xe8] sm:$0xff] %v387
  %452 = vst [vmem:[%s4 + $0xf0] sm:$0xff] %v388
  %453 = vst [vmem:[%s4 + $0xf8] sm:$0xff] %v389
  %454 = vst [vmem:[%s4 + $0x100] sm:$0xff] %v390
  %455 = vst [vmem:[%s4 + $0x108] sm:$0xff] %v391
  %456 = vst [vmem:[%s4 + $0x110] sm:$0xff] %v392
  %457 = vst [vmem:[%s4 + $0x118] sm:$0xff] %v393
  %458 = vst [vmem:[%s4 + $0x120] sm:$0xff] %v394
  %459 = vst [vmem:[%s4 + $0x128] sm:$0xff] %v395
  %460 = vst [vmem:[%s4 + $0x130] sm:$0xff] %v396
  %461 = vst [vmem:[%s4 + $0x138] sm:$0xff] %v397
  %462 = vst [vmem:[%s4 + $0x140] sm:$0xff] %v398
  %463 = vst [vmem:[%s4 + $0x148] sm:$0xff] %v399
  %464 = vst [vmem:[%s4 + $0x150] sm:$0xff] %v400
  %465 = vst [vmem:[%s4 + $0x158] sm:$0xff] %v401
  %466 = vst [vmem:[%s4 + $0x160] sm:$0xff] %v402
  %467 = vst [vmem:[%s4 + $0x168] sm:$0xff] %v403
  %468 = vst [vmem:[%s4 + $0x170] sm:$0xff] %v404
  %469 = vst [vmem:[%s4 + $0x178] sm:$0xff] %v405
  %470 = vst [vmem:[%s4 + $0x180] sm:$0xff] %v406
  %471 = vst [vmem:[%s4 + $0x188] sm:$0xff] %v407
  %472 = vst [vmem:[%s4 + $0x190] sm:$0xff] %v408
  %473 = vst [vmem:[%s4 + $0x198] sm:$0xff] %v409
  %474 = vst [vmem:[%s4 + $0x1a0] sm:$0xff] %v410
  %475 = vst [vmem:[%s4 + $0x1a8] sm:$0xff] %v411
  %476 = vst [vmem:[%s4 + $0x1b0] sm:$0xff] %v412
  %477 = vst [vmem:[%s4 + $0x1b8] sm:$0xff] %v413
  %478 = vst [vmem:[%s4 + $0x1c0] sm:$0xff] %v414
  %479 = vst [vmem:[%s4 + $0x1c8] sm:$0xff] %v415
  %480 = vst [vmem:[%s4 + $0x1d0] sm:$0xff] %v416
  %481 = vst [vmem:[%s4 + $0x1d8] sm:$0xff] %v417
  %482 = vst [vmem:[%s4 + $0x1e0] sm:$0xff] %v418
  %483 = vst [vmem:[%s4 + $0x1e8] sm:$0xff] %v419
  %484 = vst [vmem:[%s4 + $0x1f0] sm:$0xff] %v420
  %485 = vst [vmem:[%s4 + $0x1f8] sm:$0xff] %v421
  // Predicated region
  $region18: #{conv_block.3} parent=0 // pred_check
    _
  $region19: #{conv_block.3} parent=0 // pred_check_branch
    %487 = sbr.rel (0) target = $region21
  $region20: #{conv_block.3} parent=0 // pred_region
    _
  $region21: #{conv_block.3} parent=0 // pred_fallthru
    _
  // Predicated region
  $region22: #{conv_block.3} parent=0 // pred_check
    _
  $region23: #{conv_block.3} parent=0 // pred_check_branch
    %489 = sbr.rel (0) target = $region25
  $region24: #{conv_block.3} parent=0 // pred_region
    _
  $region25: #{conv_block.3} parent=0 // pred_fallthru
    _

// kernel: conv_block.2
$region0: #{conv_block.2}
  #allocation0 [shape = 'u32[]', space=smem, size = 0x4, offset = 0x4, fixed_abs, tag = 'smem constant byte address 0x4 - core index']
  #allocation1 [shape = 'u32[144,128]{1,0:T(1,128)}', space=vmem, size = 0x12000, scoped, tag = 'internal scratch']
  %s0 = inlined_call_operand.vmem [shape: bf16[2,18,18,4], index: 0, kind: input, shape index: {}]
  %s1 = inlined_call_operand.vmem [shape: bf16[9,4,128], index: 1, kind: input, shape index: {}]
  %s2 = inlined_call_operand.vmem [shape: f32[2,16,16,128], index: 2, kind: output, shape index: {0}]
  %s3 = inlined_call_operand.vmem [shape: f32[2,128], index: 3, kind: output, shape index: {1}]
  %4 = xla_tuple %s2, %s3
  %s5 = sld [smem:[#allocation0]]
  $region53: #{conv_block.2} parent=0
    _
  %s7 = ssub.s32 1, %s5
  %s8 = scalar_select 0, %s7, %s5
  loop: start=0, step=1, limit=4
  $region2: #{conv_block.2} parent=0 // loop_pre_header
    _
  $region3: #{conv_block.2} parent=0 // loop_header
    %s10 = sphi 0, %s14
    %p11 = scmp.ge.s32.totalorder %s10, 4
    %s17 = sphi 0, %s29
    %s18 = sphi 0, %s25
    %s19 = sphi 0, %s17
    %s20 = sphi 0, %s18
    %s21 = sphi 0, %s19
    %s22 = sphi 0, %s20
    %s32 = sphi 0, %s34
    %s35 = sphi 0, %s32
    %s36 = sphi 0, %s35
    %s52 = sphi 0, %s36
    %s56 = sphi 0, %s56
    %s58 = sphi 0, %s56
    %s59 = sphi 0, %s58
    %s73 = sphi 0, %s59
    %s81 = sphi 0, %s83
    %s84 = sphi 0, %s81
    %s85 = sphi 0, %s84
    %s101 = sphi 0, %s85
    %s105 = sphi 0, %s105
    %s107 = sphi 0, %s105
    %s108 = sphi 0, %s107
    %s122 = sphi 0, %s108
  $region4: #{conv_block.2} parent=0 // loop_header_branch
    %13 = sbr.rel (%p11) target = $region8
  $region5: #{conv_block.2} parent=0 // loop_body
    %s15 = ssub.s32 %s10, 1
    %s16 = ssub.s32 %s10, 2
    %s23 = sadd.s32 1, %s18
    %p24 = scmp.ge.s32.totalorder %s23, 1
    %s25 = scalar_select %p24, 0, %s23
    %s26 = sadd.s32 1, %s17
    %s27 = scalar_select %p24, %s26, %s17
    %p28 = scmp.ge.s32.totalorder %s27, 2
    %s29 = scalar_select %p28, 0, %s27
    %s30 = ssub.s32 %s17, %s29
    %p31 = scmp.eq.s32.totalorder %s30, 0
    %s33 = sadd.s32 %s32, 1
    %s34 = scalar_select %p31, %s32, %s33
    %p37 = pneg %p31
    %p38 = scmp.eq.s32.totalorder %s10, 1
    %p39 = por %p37, %p38
    %p40 = scmp.ne.s32.totalorder %s32, %s35
    %p41 = scmp.eq.s32.totalorder %s10, 0
    %p42 = por %p40, %p41
    %p43 = scmp.ne.s32.totalorder %s32, %s35
    %p44 = scmp.eq.s32.totalorder %s15, 1
    %p45 = por %p43, %p44
    %p46 = scmp.ne.s32.totalorder %s35, %s36
    %p47 = scmp.eq.s32.totalorder %s15, 0
    %p48 = por %p46, %p47
    %p49 = scmp.ne.s32.totalorder %s35, %s36
    %p50 = scmp.eq.s32.totalorder %s16, 1
    %p51 = por %p49, %p50
    %p53 = scmp.ne.s32.totalorder %s36, %s52
    %p54 = scmp.eq.s32.totalorder %s16, 0
    %p55 = por %p53, %p54
    %s57 = sadd.s32 %s56, 1
    %p60 = scmp.eq.s32.totalorder %s10, 1
    %p61 = scmp.ne.s32.totalorder %s56, %s58
    %p62 = scmp.eq.s32.totalorder %s10, 0
    %p63 = por %p61, %p62
    %p64 = scmp.ne.s32.totalorder %s56, %s58
    %p65 = scmp.eq.s32.totalorder %s15, 1
    %p66 = por %p64, %p65
    %p67 = scmp.ne.s32.totalorder %s58, %s59
    %p68 = scmp.eq.s32.totalorder %s15, 0
    %p69 = por %p67, %p68
    %p70 = scmp.ne.s32.totalorder %s58, %s59
    %p71 = scmp.eq.s32.totalorder %s16, 1
    %p72 = por %p70, %p71
    %p74 = scmp.ne.s32.totalorder %s59, %s73
    %p75 = scmp.eq.s32.totalorder %s16, 0
    %p76 = por %p74, %p75
    %s77 = ssub.s32 %s17, %s29
    %s78 = ssub.s32 %s18, %s25
    %s79 = sor.u32 %s77, %s78
    %p80 = scmp.eq.s32.totalorder %s79, 0
    %s82 = sadd.s32 %s81, 1
    %s83 = scalar_select %p80, %s81, %s82
    %p86 = pneg %p80
    %p87 = scmp.eq.s32.totalorder %s10, 1
    %p88 = por %p86, %p87
    %p89 = scmp.ne.s32.totalorder %s81, %s84
    %p90 = scmp.eq.s32.totalorder %s10, 0
    %p91 = por %p89, %p90
    %p92 = scmp.ne.s32.totalorder %s81, %s84
    %p93 = scmp.eq.s32.totalorder %s15, 1
    %p94 = por %p92, %p93
    %p95 = scmp.ne.s32.totalorder %s84, %s85
    %p96 = scmp.eq.s32.totalorder %s15, 0
    %p97 = por %p95, %p96
    %p98 = scmp.ne.s32.totalorder %s84, %s85
    %p99 = scmp.eq.s32.totalorder %s16, 1
    %p100 = por %p98, %p99
    %p102 = scmp.ne.s32.totalorder %s85, %s101
    %p103 = scmp.eq.s32.totalorder %s16, 0
    %p104 = por %p102, %p103
    %s106 = sadd.s32 %s105, 1
    %p109 = scmp.eq.s32.totalorder %s10, 1
    %p110 = scmp.ne.s32.totalorder %s105, %s107
    %p111 = scmp.eq.s32.totalorder %s10, 0
    %p112 = por %p110, %p111
    %p113 = scmp.ne.s32.totalorder %s105, %s107
    %p114 = scmp.eq.s32.totalorder %s15, 1
    %p115 = por %p113, %p114
    %p116 = scmp.ne.s32.totalorder %s107, %s108
    %p117 = scmp.eq.s32.totalorder %s15, 0
    %p118 = por %p116, %p117
    %p119 = scmp.ne.s32.totalorder %s107, %s108
    %p120 = scmp.eq.s32.totalorder %s16, 1
    %p121 = por %p119, %p120
    %p123 = scmp.ne.s32.totalorder %s108, %s122
    %p124 = scmp.eq.s32.totalorder %s16, 0
    %p125 = por %p123, %p124
    %p126 = scmp.le.s32.totalorder 1, %s10
    %p127 = scmp.lt.s32.totalorder %s10, 3
    %p128 = pnand %p126, %p127
    %p129 = pneg %p128
    // Predicated region
    $region9: #{conv_block.2} parent=5 // pred_check
      _
    $region10: #{conv_block.2} parent=5 // pred_check_branch
      %131 = sbr.rel (%p128) target = $region12
    $region11: #{conv_block.2} parent=5 // pred_region
      %s132 = ssub.s32 %s10, 1
      // Predicated region
      $region13: #{conv_block.2} parent=11 // pred_check
        %p133 = pneg %p69
      $region14: #{conv_block.2} parent=11 // pred_check_branch
        %135 = sbr.rel (%p133) target = $region16
      $region15: #{conv_block.2} parent=11 // pred_region
        _
      $region16: #{conv_block.2} parent=11 // pred_fallthru
        _
    $region12: #{conv_block.2} parent=5 // pred_fallthru
      _
    %p136 = scmp.lt.s32.totalorder %s10, 2
    // Predicated region
    $region17: #{conv_block.2} parent=5 // pred_check
      %p137 = pneg %p136
    $region18: #{conv_block.2} parent=5 // pred_check_branch
      %139 = sbr.rel (%p137) target = $region20
    $region19: #{conv_block.2} parent=5 // pred_region
      // Predicated region
      $region21: #{conv_block.2} parent=19 // pred_check
        %p140 = pneg %p42
      $region22: #{conv_block.2} parent=19 // pred_check_branch
        %142 = sbr.rel (%p140) target = $region24
      $region23: #{conv_block.2} parent=19 // pred_region
        %p143 = scmp.lt.s32.totalorder %s17, 1
        %s144 = scalar_select %p143, %s17, 1
        %s145 = smul.addr %s144, 54
        %s146 = smul.addr %s145, 4
        %s147 = scalar_lea.vmem %s0, %s146
      $region24: #{conv_block.2} parent=19 // pred_fallthru
        _
    $region20: #{conv_block.2} parent=5 // pred_fallthru
      _
    %p148 = scmp.le.s32.totalorder 1, %s10
    %p149 = scmp.lt.s32.totalorder %s10, 3
    %p150 = pnand %p148, %p149
    %p151 = pneg %p150
    // Predicated region
    $region25: #{conv_block.2} parent=5 // pred_check
      _
    $region26: #{conv_block.2} parent=5 // pred_check_branch
      %153 = sbr.rel (%p150) target = $region28
    $region27: #{conv_block.2} parent=5 // pred_region
      %s154 = ssub.s32 %s10, 1
      %p155 = scmp.lt.s32.totalorder %s19, 1
      %s156 = scalar_select %p155, %s19, 1
      %s157 = smul.addr %s156, 54
      %s158 = smul.addr %s157, 4
      %s159 = scalar_lea.vmem %s0, %s158
      %p160 = pneg %p48
      %p161 = pneg %p45
      %p162 = pneg %p69
      %p163 = pneg %p66
      %p164 = pneg %p97
      %p165 = pneg %p94
      %s166 = smul.u32 16, %s20
      %p167 = scmp.lt.s32.totalorder %s19, 1
      %s168 = scalar_select %p167, %s19, 1
      %p169 = scmp.lt.s32.totalorder %s166, 15
      %s170 = scalar_select %p169, %s166, 15
      %s171 = smul.addr %s170, 2
      %s172 = smul.addr %s168, 32
      %s173 = sadd.s32 %s171, %s172
      %s174 = smul.addr %s173, 8
      %s175 = scalar_lea.vmem %s2, %s174
      %p176 = pneg %p118
      %p177 = pneg %p115
      %p178 = scmp.lt.s32.totalorder %s19, 1
      %s179 = scalar_select %p178, %s19, 1
      %s180 = smul.addr %s179, 54
      %s181 = smul.addr %s180, 4
      %s182 = scalar_lea.vmem %s0, %s181
      %s183 = smul.u32 16, %s20
      %p184 = scmp.lt.s32.totalorder %s19, 1
      %s185 = scalar_select %p184, %s19, 1
      %p186 = scmp.lt.s32.totalorder %s183, 15
      %s187 = scalar_select %p186, %s183, 15
      %s188 = smul.addr %s187, 2
      %s189 = smul.addr %s185, 32
      %s190 = sadd.s32 %s188, %s189
      %s191 = smul.addr %s190, 8
      %s192 = scalar_lea.vmem %s2, %s191
      %s193 = smul.u32 16, %s20
      %p195 = scmp.eq.s32.totalorder %s19, 0
      %p196 = scmp.eq.s32.totalorder %s20, 0
      %p197 = pnand %p195, %p196
      %p198 = pneg %p197
      // Predicated region
      $region29: #{conv_block.2} parent=27 // pred_check
        _
      $region30: #{conv_block.2} parent=27 // pred_check_branch
        %200 = sbr.rel (%p197) target = $region32
      $region31: #{conv_block.2} parent=27 // pred_region
        %201 = vst [vmem:[%s3] sm:$0x3] 0.0
      $region32: #{conv_block.2} parent=27 // pred_fallthru
        _
      %s202 = smul.u32 %s20, 16
      %s203 = smul.u32 %s202, 3
      %s204 = smul.addr %s203, 4
      %s205 = scalar_lea.vmem %s182, %s204
      %v206 = vld [vmem:[%s205] sm:$0xf]
      %v207 = vld [vmem:[%s205 + $0x4] sm:$0xf]
      %v208 = vld [vmem:[%s205 + $0x8] sm:$0x1]
      %v209 = vld [vmem:[%s205 + $0xc] sm:$0xf]
      %v210 = vld [vmem:[%s205 + $0x10] sm:$0xf]
      %v211 = vld [vmem:[%s205 + $0x14] sm:$0x1]
      %v212 = vld [vmem:[%s205 + $0x18] sm:$0xf]
      %v213 = vld [vmem:[%s205 + $0x1c] sm:$0xf]
      %v214 = vld [vmem:[%s205 + $0x20] sm:$0x1]
      %v215 = vld [vmem:[%s205 + $0x24] sm:$0xf]
      %v216 = vld [vmem:[%s205 + $0x28] sm:$0xf]
      %v217 = vld [vmem:[%s205 + $0x2c] sm:$0x1]
      %v218 = vld [vmem:[%s205 + $0x30] sm:$0xf]
      %v219 = vld [vmem:[%s205 + $0x34] sm:$0xf]
      %v220 = vld [vmem:[%s205 + $0x38] sm:$0x1]
      %v221 = vld [vmem:[%s205 + $0x3c] sm:$0xf]
      %v222 = vld [vmem:[%s205 + $0x40] sm:$0xf]
      %v223 = vld [vmem:[%s205 + $0x44] sm:$0x1]
      %v224 = vld [vmem:[%s205 + $0x48] sm:$0xf]
      %v225 = vld [vmem:[%s205 + $0x4c] sm:$0xf]
      %v226 = vld [vmem:[%s205 + $0x50] sm:$0x1]
      %v227 = vld [vmem:[%s205 + $0x54] sm:$0xf]
      %v228 = vld [vmem:[%s205 + $0x58] sm:$0xf]
      %v229 = vld [vmem:[%s205 + $0x5c] sm:$0x1]
      %v230 = vld [vmem:[%s205 + $0x60] sm:$0xf]
      %v231 = vld [vmem:[%s205 + $0x64] sm:$0xf]
      %v232 = vld [vmem:[%s205 + $0x68] sm:$0x1]
      %v233 = vld [vmem:[%s205 + $0x6c] sm:$0xf]
      %v234 = vld [vmem:[%s205 + $0x70] sm:$0xf]
      %v235 = vld [vmem:[%s205 + $0x74] sm:$0x1]
      %v236 = vld [vmem:[%s205 + $0x78] sm:$0xf]
      %v237 = vld [vmem:[%s205 + $0x7c] sm:$0xf]
      %v238 = vld [vmem:[%s205 + $0x80] sm:$0x1]
      %v239 = vld [vmem:[%s205 + $0x84] sm:$0xf]
      %v240 = vld [vmem:[%s205 + $0x88] sm:$0xf]
      %v241 = vld [vmem:[%s205 + $0x8c] sm:$0x1]
      %v242 = vld [vmem:[%s205 + $0x90] sm:$0xf]
      %v243 = vld [vmem:[%s205 + $0x94] sm:$0xf]
      %v244 = vld [vmem:[%s205 + $0x98] sm:$0x1]
      %v245 = vld [vmem:[%s205 + $0x9c] sm:$0xf]
      %v246 = vld [vmem:[%s205 + $0xa0] sm:$0xf]
      %v247 = vld [vmem:[%s205 + $0xa4] sm:$0x1]
      %v248 = vld [vmem:[%s205 + $0xa8] sm:$0xf]
      %v249 = vld [vmem:[%s205 + $0xac] sm:$0xf]
      %v250 = vld [vmem:[%s205 + $0xb0] sm:$0x1]
      %v251 = vld [vmem:[%s205 + $0xb4] sm:$0xf]
      %v252 = vld [vmem:[%s205 + $0xb8] sm:$0xf]
      %v253 = vld [vmem:[%s205 + $0xbc] sm:$0x1]
      %v254 = vld [vmem:[%s1] sm:$0x3]
      %vm255 = vsmask.f32 3328
      %vm256 = vsmask.f32 7440
      %vm257 = vmor %vm255, %vm256
      %v259 = vshrl.u32 %v206, 16
      %v261 = vrot.slane %v259, 4
      %v262 = vshll.u32 %v206, 16
      %v264 = vrot.slane %v262, 5
      %v265 = vor.u32 %v261, %v264
      %v266 = vrot.slane %v265, 4
      %v268 = vshll.u32 %v207, 16
      %v270 = vrot.slane %v268, 5
      %v271 = vsel %vm257, %v266, %v270
      %v272 = vshrl.u32 %v207, 16
      %v274 = vrot.slane %v272, 4
      %v275 = vor.u32 %v274, %v270
      %v276 = vrot.slane %v275, 4
      %v278 = vshll.u32 %v208, 16
      %v280 = vrot.slane %v278, 5
      %v281 = vsel %vm257, %v276, %v280
      %v283 = vshrl.u32 %v209, 16
      %v285 = vrot.slane %v283, 4
      %v286 = vshll.u32 %v209, 16
      %v288 = vrot.slane %v286, 5
      %v289 = vor.u32 %v285, %v288
      %v290 = vrot.slane %v289, 4
      %v292 = vshll.u32 %v210, 16
      %v294 = vrot.slane %v292, 5
      %v295 = vsel %vm257, %v290, %v294
      %v296 = vshrl.u32 %v210, 16
      %v298 = vrot.slane %v296, 4
      %v299 = vor.u32 %v298, %v294
      %v300 = vrot.slane %v299, 4
      %v302 = vshll.u32 %v211, 16
      %v304 = vrot.slane %v302, 5
      %v305 = vsel %vm257, %v300, %v304
      %v307 = vshrl.u32 %v212, 16
      %v309 = vrot.slane %v307, 4
      %v310 = vshll.u32 %v212, 16
      %v312 = vrot.slane %v310, 5
      %v313 = vor.u32 %v309, %v312
      %v314 = vrot.slane %v313, 4
      %v316 = vshll.u32 %v213, 16
      %v318 = vrot.slane %v316, 5
      %v319 = vsel %vm257, %v314, %v318
      %v320 = vshrl.u32 %v213, 16
      %v322 = vrot.slane %v320, 4
      %v323 = vor.u32 %v322, %v318
      %v324 = vrot.slane %v323, 4
      %v326 = vshll.u32 %v214, 16
      %v328 = vrot.slane %v326, 5
      %v329 = vsel %vm257, %v324, %v328
      %v331 = vshrl.u32 %v215, 16
      %v333 = vrot.slane %v331, 4
      %v334 = vshll.u32 %v215, 16
      %v336 = vrot.slane %v334, 5
      %v337 = vor.u32 %v333, %v336
      %v338 = vrot.slane %v337, 4
      %v340 = vshll.u32 %v216, 16
      %v342 = vrot.slane %v340, 5
      %v343 = vsel %vm257, %v338, %v342
      %v344 = vshrl.u32 %v216, 16
      %v346 = vrot.slane %v344, 4
      %v347 = vor.u32 %v346, %v342
      %v348 = vrot.slane %v347, 4
      %v350 = vshll.u32 %v217, 16
      %v352 = vrot.slane %v350, 5
      %v353 = vsel %vm257, %v348, %v352
      %v355 = vshrl.u32 %v218, 16
      %v357 = vrot.slane %v355, 4
      %v358 = vshll.u32 %v218, 16
      %v360 = vrot.slane %v358, 5
      %v361 = vor.u32 %v357, %v360
      %v362 = vrot.slane %v361, 4
      %v364 = vshll.u32 %v219, 16
      %v366 = vrot.slane %v364, 5
      %v367 = vsel %vm257, %v362, %v366
      %v368 = vshrl.u32 %v219, 16
      %v370 = vrot.slane %v368, 4
      %v371 = vor.u32 %v370, %v366
      %v372 = vrot.slane %v371, 4
      %v374 = vshll.u32 %v220, 16
      %v376 = vrot.slane %v374, 5
      %v377 = vsel %vm257, %v372, %v376
      %v379 = vshrl.u32 %v221, 16
      %v381 = vrot.slane %v379, 4
      %v382 = vshll.u32 %v221, 16
      %v384 = vrot.slane %v382, 5
      %v385 = vor.u32 %v381, %v384
      %v386 = vrot.slane %v385, 4
      %v388 = vshll.u32 %v222, 16
      %v390 = vrot.slane %v388, 5
      %v391 = vsel %vm257, %v386, %v390
      %v392 = vshrl.u32 %v222, 16
      %v394 = vrot.slane %v392, 4
      %v395 = vor.u32 %v394, %v390
      %v396 = vrot.slane %v395, 4
      %v398 = vshll.u32 %v223, 16
      %v400 = vrot.slane %v398, 5
      %v401 = vsel %vm257, %v396, %v400
      %v403 = vshrl.u32 %v224, 16
      %v405 = vrot.slane %v403, 4
      %v406 = vshll.u32 %v224, 16
      %v408 = vrot.slane %v406, 5
      %v409 = vor.u32 %v405, %v408
      %v410 = vrot.slane %v409, 4
      %v412 = vshll.u32 %v225, 16
      %v414 = vrot.slane %v412, 5
      %v415 = vsel %vm257, %v410, %v414
      %v416 = vshrl.u32 %v225, 16
      %v418 = vrot.slane %v416, 4
      %v419 = vor.u32 %v418, %v414
      %v420 = vrot.slane %v419, 4
      %v422 = vshll.u32 %v226, 16
      %v424 = vrot.slane %v422, 5
      %v425 = vsel %vm257, %v420, %v424
      %v427 = vshrl.u32 %v227, 16
      %v429 = vrot.slane %v427, 4
      %v430 = vshll.u32 %v227, 16
      %v432 = vrot.slane %v430, 5
      %v433 = vor.u32 %v429, %v432
      %v434 = vrot.slane %v433, 4
      %v436 = vshll.u32 %v228, 16
      %v438 = vrot.slane %v436, 5
      %v439 = vsel %vm257, %v434, %v438
      %v440 = vshrl.u32 %v228, 16
      %v442 = vrot.slane %v440, 4
      %v443 = vor.u32 %v442, %v438
      %v444 = vrot.slane %v443, 4
      %v446 = vshll.u32 %v229, 16
      %v448 = vrot.slane %v446, 5
      %v449 = vsel %vm257, %v444, %v448
      %v451 = vshrl.u32 %v230, 16
      %v453 = vrot.slane %v451, 4
      %v454 = vshll.u32 %v230, 16
      %v456 = vrot.slane %v454, 5
      %v457 = vor.u32 %v453, %v456
      %v458 = vrot.slane %v457, 4
      %v460 = vshll.u32 %v231, 16
      %v462 = vrot.slane %v460, 5
      %v463 = vsel %vm257, %v458, %v462
      %v464 = vshrl.u32 %v231, 16
      %v466 = vrot.slane %v464, 4
      %v467 = vor.u32 %v466, %v462
      %v468 = vrot.slane %v467, 4
      %v470 = vshll.u32 %v232, 16
      %v472 = vrot.slane %v470, 5
      %v473 = vsel %vm257, %v468, %v472
      %v475 = vshrl.u32 %v233, 16
      %v477 = vrot.slane %v475, 4
      %v478 = vshll.u32 %v233, 16
      %v480 = vrot.slane %v478, 5
      %v481 = vor.u32 %v477, %v480
      %v482 = vrot.slane %v481, 4
      %v484 = vshll.u32 %v234, 16
      %v486 = vrot.slane %v484, 5
      %v487 = vsel %vm257, %v482, %v486
      %v488 = vshrl.u32 %v234, 16
      %v490 = vrot.slane %v488, 4
      %v491 = vor.u32 %v490, %v486
      %v492 = vrot.slane %v491, 4
      %v494 = vshll.u32 %v235, 16
      %v496 = vrot.slane %v494, 5
      %v497 = vsel %vm257, %v492, %v496
      %v499 = vshrl.u32 %v236, 16
      %v501 = vrot.slane %v499, 4
      %v502 = vshll.u32 %v236, 16
      %v504 = vrot.slane %v502, 5
      %v505 = vor.u32 %v501, %v504
      %v506 = vrot.slane %v505, 4
      %v508 = vshll.u32 %v237, 16
      %v510 = vrot.slane %v508, 5
      %v511 = vsel %vm257, %v506, %v510
      %v512 = vshrl.u32 %v237, 16
      %v514 = vrot.slane %v512, 4
      %v515 = vor.u32 %v514, %v510
      %v516 = vrot.slane %v515, 4
      %v518 = vshll.u32 %v238, 16
      %v520 = vrot.slane %v518, 5
      %v521 = vsel %vm257, %v516, %v520
      %v523 = vshrl.u32 %v239, 16
      %v525 = vrot.slane %v523, 4
      %v526 = vshll.u32 %v239, 16
      %v528 = vrot.slane %v526, 5
      %v529 = vor.u32 %v525, %v528
      %v530 = vrot.slane %v529, 4
      %v532 = vshll.u32 %v240, 16
      %v534 = vrot.slane %v532, 5
      %v535 = vsel %vm257, %v530, %v534
      %v536 = vshrl.u32 %v240, 16
      %v538 = vrot.slane %v536, 4
      %v539 = vor.u32 %v538, %v534
      %v540 = vrot.slane %v539, 4
      %v542 = vshll.u32 %v241, 16
      %v544 = vrot.slane %v542, 5
      %v545 = vsel %vm257, %v540, %v544
      %v547 = vshrl.u32 %v242, 16
      %v549 = vrot.slane %v547, 4
      %v550 = vshll.u32 %v242, 16
      %v552 = vrot.slane %v550, 5
      %v553 = vor.u32 %v549, %v552
      %v554 = vrot.slane %v553, 4
      %v556 = vshll.u32 %v243, 16
      %v558 = vrot.slane %v556, 5
      %v559 = vsel %vm257, %v554, %v558
      %v560 = vshrl.u32 %v243, 16
      %v562 = vrot.slane %v560, 4
      %v563 = vor.u32 %v562, %v558
      %v564 = vrot.slane %v563, 4
      %v566 = vshll.u32 %v244, 16
      %v568 = vrot.slane %v566, 5
      %v569 = vsel %vm257, %v564, %v568
      %v571 = vshrl.u32 %v245, 16
      %v573 = vrot.slane %v571, 4
      %v574 = vshll.u32 %v245, 16
      %v576 = vrot.slane %v574, 5
      %v577 = vor.u32 %v573, %v576
      %v578 = vrot.slane %v577, 4
      %v580 = vshll.u32 %v246, 16
      %v582 = vrot.slane %v580, 5
      %v583 = vsel %vm257, %v578, %v582
      %v584 = vshrl.u32 %v246, 16
      %v586 = vrot.slane %v584, 4
      %v587 = vor.u32 %v586, %v582
      %v588 = vrot.slane %v587, 4
      %v590 = vshll.u32 %v247, 16
      %v592 = vrot.slane %v590, 5
      %v593 = vsel %vm257, %v588, %v592
      %v595 = vshrl.u32 %v248, 16
      %v597 = vrot.slane %v595, 4
      %v598 = vshll.u32 %v248, 16
      %v600 = vrot.slane %v598, 5
      %v601 = vor.u32 %v597, %v600
      %v602 = vrot.slane %v601, 4
      %v604 = vshll.u32 %v249, 16
      %v606 = vrot.slane %v604, 5
      %v607 = vsel %vm257, %v602, %v606
      %v608 = vshrl.u32 %v249, 16
      %v610 = vrot.slane %v608, 4
      %v611 = vor.u32 %v610, %v606
      %v612 = vrot.slane %v611, 4
      %v614 = vshll.u32 %v250, 16
      %v616 = vrot.slane %v614, 5
      %v617 = vsel %vm257, %v612, %v616
      %v619 = vshrl.u32 %v251, 16
      %v621 = vrot.slane %v619, 4
      %v622 = vshll.u32 %v251, 16
      %v624 = vrot.slane %v622, 5
      %v625 = vor.u32 %v621, %v624
      %v626 = vrot.slane %v625, 4
      %v628 = vshll.u32 %v252, 16
      %v630 = vrot.slane %v628, 5
      %v631 = vsel %vm257, %v626, %v630
      %v632 = vshrl.u32 %v252, 16
      %v634 = vrot.slane %v632, 4
      %v635 = vor.u32 %v634, %v630
      %v636 = vrot.slane %v635, 4
      %v638 = vshll.u32 %v253, 16
      %v640 = vrot.slane %v638, 5
      %v641 = vsel %vm257, %v636, %v640
      %s642 = scalar_lea.vmem %s1, 2
      %v643 = vld [vmem:[%s642] sm:$0x3]
      %v644 = vunpack.c.l.b16 %v271
      %v645 = vunpack.c.l.b16 %v281
      %v646 = vunpack.c.l.b16 %v295
      %v647 = vunpack.c.l.b16 %v305
      %v648 = vunpack.c.l.b16 %v319
      %v649 = vunpack.c.l.b16 %v329
      %v650 = vunpack.c.l.b16 %v343
      %v651 = vunpack.c.l.b16 %v353
      %v652 = vunpack.c.l.b16 %v367
      %v653 = vunpack.c.l.b16 %v377
      %v654 = vunpack.c.l.b16 %v391
      %v655 = vunpack.c.l.b16 %v401
      %v656 = vunpack.c.l.b16 %v415
      %v657 = vunpack.c.l.b16 %v425
      %v658 = vunpack.c.l.b16 %v439
      %v659 = vunpack.c.l.b16 %v449
      %v660 = vunpack.c.l.b16 %v463
      %v661 = vunpack.c.l.b16 %v473
      %v662 = vunpack.c.l.b16 %v487
      %v663 = vunpack.c.l.b16 %v497
      %v664 = vunpack.c.l.b16 %v511
      %v665 = vunpack.c.l.b16 %v521
      %v666 = vunpack.c.l.b16 %v535
      %v667 = vunpack.c.l.b16 %v545
      %v668 = vunpack.c.l.b16 %v559
      %v669 = vunpack.c.l.b16 %v569
      %v670 = vunpack.c.l.b16 %v583
      %v671 = vunpack.c.l.b16 %v593
      %v672 = vunpack.c.l.b16 %v607
      %v673 = vunpack.c.l.b16 %v617
      %v674 = vunpack.c.l.b16 %v631
      %v675 = vunpack.c.l.b16 %v641
      %v676 = vpack.c.b16 %v645, %v644
      %v677 = vpack.c.b16 %v647, %v646
      %v678 = vpack.c.b16 %v649, %v648
      %v679 = vpack.c.b16 %v651, %v650
      %v680 = vpack.c.b16 %v653, %v652
      %v681 = vpack.c.b16 %v655, %v654
      %v682 = vpack.c.b16 %v657, %v656
      %v683 = vpack.c.b16 %v659, %v658
      %v684 = vpack.c.b16 %v661, %v660
      %v685 = vpack.c.b16 %v663, %v662
      %v686 = vpack.c.b16 %v665, %v664
      %v687 = vpack.c.b16 %v667, %v666
      %v688 = vpack.c.b16 %v669, %v668
      %v689 = vpack.c.b16 %v671, %v670
      %v690 = vpack.c.b16 %v673, %v672
      %v691 = vpack.c.b16 %v675, %v674
      %vm692 = vcmask 31744
      %v694 = vsel %vm692, %v676, 0
      %v697 = vsel %vm692, %v677, 0
      %v700 = vsel %vm692, %v678, 0
      %v703 = vsel %vm692, %v679, 0
      %v706 = vsel %vm692, %v680, 0
      %v709 = vsel %vm692, %v681, 0
      %v712 = vsel %vm692, %v682, 0
      %v715 = vsel %vm692, %v683, 0
      %v718 = vsel %vm692, %v684, 0
      %v721 = vsel %vm692, %v685, 0
      %v724 = vsel %vm692, %v686, 0
      %v727 = vsel %vm692, %v687, 0
      %v730 = vsel %vm692, %v688, 0
      %v733 = vsel %vm692, %v689, 0
      %v736 = vsel %vm692, %v690, 0
      %v739 = vsel %vm692, %v691, 0
      %vm741 = vcmask 1041408
      %v743 = vsel %vm741, %v643, 0
      %745 = vmatprep.subr.bf16.mxu0 0
      %746 = vmatpush1.bf16.msra.mxu0 0
      %747 = vmatprep.subr.bf16.mxu0 0
      %748 = vmatpush1.bf16.msra.mxu0 0
      %749 = vmatprep.subr.bf16.mxu0 0
      %750 = vmatpush1.bf16.msra.mxu0 0
      %751 = vmatprep.subr.bf16.mxu0 0
      %752 = vmatpush1.bf16.msra.mxu0 0
      %753 = vmatprep.subr.bf16.mxu0 0
      %754 = vmatpush1.bf16.msra.mxu0 0
      %755 = vmatprep.subr.bf16.mxu0 0
      %756 = vmatpush1.bf16.msra.mxu0 0
      %757 = vmatprep.subr.bf16.mxu0 0
      %758 = vmatpush1.bf16.msra.mxu0 0
      %759 = vmatprep.subr.bf16.mxu0 0
      %760 = vmatpush1.bf16.msra.mxu0 %v743
      %761 = vmatprep.subr.bf16.mxu0 0
      %762 = vmatpush2.bf16.msra.mxu0 0
      %763 = vmatprep.subr.bf16.mxu0 0
      %764 = vmatpush2.bf16.msra.mxu0 0
      %765 = vmatprep.subr.bf16.mxu0 0
      %766 = vmatpush2.bf16.msra.mxu0 0
      %767 = vmatprep.subr.bf16.mxu0 0
      %768 = vmatpush2.bf16.msra.mxu0 0
      %769 = vmatprep.subr.bf16.mxu0 0
      %770 = vmatpush2.bf16.msra.mxu0 0
      %771 = vmatprep.subr.bf16.mxu0 0
      %772 = vmatpush2.bf16.msra.mxu0 0
      %773 = vmatprep.subr.bf16.mxu0 0
      %774 = vmatpush2.bf16.msra.mxu0 0
      %775 = vmatprep.subr.bf16.mxu0 0
      %776 = vmatpush2.bf16.msra.mxu0 0
      %777 = vmatprep.mubr.bf16.mxu0 0
      %778 = vmatmul.mubr.bf16.gmra.mxu0 %v694
      %v779 = vpop.f32.mrf.mxu0
      %v780 = vadd.f32 0.0, %v779
      %v781 = vpop.f32.mrf.mxu0
      %v782 = vpop.f32.mrf.mxu0
      %v783 = vadd.f32 0.0, %v782
      %v784 = vpop.f32.mrf.mxu0
      %785 = vmatprep.mubr.bf16.mxu0 0
      %786 = vmatmul.mubr.bf16.gmra.mxu0 %v697
      %v787 = vpop.f32.mrf.mxu0
      %v788 = vadd.f32 0.0, %v787
      %v789 = vpop.f32.mrf.mxu0
      %v790 = vpop.f32.mrf.mxu0
      %v791 = vadd.f32 0.0, %v790
      %v792 = vpop.f32.mrf.mxu0
      %793 = vmatprep.mubr.bf16.mxu0 0
      %794 = vmatmul.mubr.bf16.gmra.mxu0 %v700
      %v795 = vpop.f32.mrf.mxu0
      %v796 = vadd.f32 0.0, %v795
      %v797 = vpop.f32.mrf.mxu0
      %v798 = vpop.f32.mrf.mxu0
      %v799 = vadd.f32 0.0, %v798
      %v800 = vpop.f32.mrf.mxu0
      %801 = vmatprep.mubr.bf16.mxu0 0
      %802 = vmatmul.mubr.bf16.gmra.mxu0 %v703
      %v803 = vpop.f32.mrf.mxu0
      %v804 = vadd.f32 0.0, %v803
      %v805 = vpop.f32.mrf.mxu0
      %v806 = vpop.f32.mrf.mxu0
      %v807 = vadd.f32 0.0, %v806
      %v808 = vpop.f32.mrf.mxu0
      %809 = vmatprep.mubr.bf16.mxu0 0
      %810 = vmatmul.mubr.bf16.gmra.mxu0 %v706
      %v811 = vpop.f32.mrf.mxu0
      %v812 = vadd.f32 0.0, %v811
      %v813 = vpop.f32.mrf.mxu0
      %v814 = vpop.f32.mrf.mxu0
      %v815 = vadd.f32 0.0, %v814
      %v816 = vpop.f32.mrf.mxu0
      %817 = vmatprep.mubr.bf16.mxu0 0
      %818 = vmatmul.mubr.bf16.gmra.mxu0 %v709
      %v819 = vpop.f32.mrf.mxu0
      %v820 = vadd.f32 0.0, %v819
      %v821 = vpop.f32.mrf.mxu0
      %v822 = vpop.f32.mrf.mxu0
      %v823 = vadd.f32 0.0, %v822
      %v824 = vpop.f32.mrf.mxu0
      %825 = vmatprep.mubr.bf16.mxu0 0
      %826 = vmatmul.mubr.bf16.gmra.mxu0 %v712
      %v827 = vpop.f32.mrf.mxu0
      %v828 = vadd.f32 0.0, %v827
      %v829 = vpop.f32.mrf.mxu0
      %v830 = vpop.f32.mrf.mxu0
      %v831 = vadd.f32 0.0, %v830
      %v832 = vpop.f32.mrf.mxu0
      %833 = vmatprep.mubr.bf16.mxu0 0
      %834 = vmatmul.mubr.bf16.gmra.mxu0 %v715
      %v835 = vpop.f32.mrf.mxu0
      %v836 = vadd.f32 0.0, %v835
      %v837 = vpop.f32.mrf.mxu0
      %v838 = vpop.f32.mrf.mxu0
      %v839 = vadd.f32 0.0, %v838
      %v840 = vpop.f32.mrf.mxu0
      %841 = vmatprep.mubr.bf16.mxu0 0
      %842 = vmatmul.mubr.bf16.gmra.mxu0 %v718
      %v843 = vpop.f32.mrf.mxu0
      %v844 = vadd.f32 0.0, %v843
      %v845 = vpop.f32.mrf.mxu0
      %v846 = vpop.f32.mrf.mxu0
      %v847 = vadd.f32 0.0, %v846
      %v848 = vpop.f32.mrf.mxu0
      %849 = vmatprep.mubr.bf16.mxu0 0
      %850 = vmatmul.mubr.bf16.gmra.mxu0 %v721
      %v851 = vpop.f32.mrf.mxu0
      %v852 = vadd.f32 0.0, %v851
      %v853 = vpop.f32.mrf.mxu0
      %v854 = vpop.f32.mrf.mxu0
      %v855 = vadd.f32 0.0, %v854
      %v856 = vpop.f32.mrf.mxu0
      %857 = vmatprep.mubr.bf16.mxu0 0
      %858 = vmatmul.mubr.bf16.gmra.mxu0 %v724
      %v859 = vpop.f32.mrf.mxu0
      %v860 = vadd.f32 0.0, %v859
      %v861 = vpop.f32.mrf.mxu0
      %v862 = vpop.f32.mrf.mxu0
      %v863 = vadd.f32 0.0, %v862
      %v864 = vpop.f32.mrf.mxu0
      %865 = vmatprep.mubr.bf16.mxu0 0
      %866 = vmatmul.mubr.bf16.gmra.mxu0 %v727
      %v867 = vpop.f32.mrf.mxu0
      %v868 = vadd.f32 0.0, %v867
      %v869 = vpop.f32.mrf.mxu0
      %v870 = vpop.f32.mrf.mxu0
      %v871 = vadd.f32 0.0, %v870
      %v872 = vpop.f32.mrf.mxu0
      %873 = vmatprep.mubr.bf16.mxu0 0
      %874 = vmatmul.mubr.bf16.gmra.mxu0 %v730
      %v875 = vpop.f32.mrf.mxu0
      %v876 = vadd.f32 0.0, %v875
      %v877 = vpop.f32.mrf.mxu0
      %v878 = vpop.f32.mrf.mxu0
      %v879 = vadd.f32 0.0, %v878
      %v880 = vpop.f32.mrf.mxu0
      %881 = vmatprep.mubr.bf16.mxu0 0
      %882 = vmatmul.mubr.bf16.gmra.mxu0 %v733
      %v883 = vpop.f32.mrf.mxu0
      %v884 = vadd.f32 0.0, %v883
      %v885 = vpop.f32.mrf.mxu0
      %v886 = vpop.f32.mrf.mxu0
      %v887 = vadd.f32 0.0, %v886
      %v888 = vpop.f32.mrf.mxu0
      %889 = vmatprep.mubr.bf16.mxu0 0
      %890 = vmatmul.mubr.bf16.gmra.mxu0 %v736
      %v891 = vpop.f32.mrf.mxu0
      %v892 = vadd.f32 0.0, %v891
      %v893 = vpop.f32.mrf.mxu0
      %v894 = vpop.f32.mrf.mxu0
      %v895 = vadd.f32 0.0, %v894
      %v896 = vpop.f32.mrf.mxu0
      %897 = vmatprep.mubr.bf16.mxu0 0
      %898 = vmatmul.mubr.bf16.gmra.mxu0 %v739
      %v899 = vpop.f32.mrf.mxu0
      %v900 = vadd.f32 0.0, %v899
      %v901 = vpop.f32.mrf.mxu0
      %v902 = vpop.f32.mrf.mxu0
      %v903 = vadd.f32 0.0, %v902
      %v904 = vpop.f32.mrf.mxu0
      %905 = vdwg.mxu0
      %v938 = vunpack.c.l.b16 %v206
      %v939 = vunpack.c.l.b16 %v207
      %v940 = vunpack.c.l.b16 %v209
      %v941 = vunpack.c.l.b16 %v210
      %v942 = vunpack.c.l.b16 %v212
      %v943 = vunpack.c.l.b16 %v213
      %v944 = vunpack.c.l.b16 %v215
      %v945 = vunpack.c.l.b16 %v216
      %v946 = vunpack.c.l.b16 %v218
      %v947 = vunpack.c.l.b16 %v219
      %v948 = vunpack.c.l.b16 %v221
      %v949 = vunpack.c.l.b16 %v222
      %v950 = vunpack.c.l.b16 %v224
      %v951 = vunpack.c.l.b16 %v225
      %v952 = vunpack.c.l.b16 %v227
      %v953 = vunpack.c.l.b16 %v228
      %v954 = vunpack.c.l.b16 %v230
      %v955 = vunpack.c.l.b16 %v231
      %v956 = vunpack.c.l.b16 %v233
      %v957 = vunpack.c.l.b16 %v234
      %v958 = vunpack.c.l.b16 %v236
      %v959 = vunpack.c.l.b16 %v237
      %v960 = vunpack.c.l.b16 %v239
      %v961 = vunpack.c.l.b16 %v240
      %v962 = vunpack.c.l.b16 %v242
      %v963 = vunpack.c.l.b16 %v243
      %v964 = vunpack.c.l.b16 %v245
      %v965 = vunpack.c.l.b16 %v246
      %v966 = vunpack.c.l.b16 %v248
      %v967 = vunpack.c.l.b16 %v249
      %v968 = vunpack.c.l.b16 %v251
      %v969 = vunpack.c.l.b16 %v252
      %v970 = vpack.c.b16 %v939, %v938
      %v971 = vpack.c.b16 %v941, %v940
      %v972 = vpack.c.b16 %v943, %v942
      %v973 = vpack.c.b16 %v945, %v944
      %v974 = vpack.c.b16 %v947, %v946
      %v975 = vpack.c.b16 %v949, %v948
      %v976 = vpack.c.b16 %v951, %v950
      %v977 = vpack.c.b16 %v953, %v952
      %v978 = vpack.c.b16 %v955, %v954
      %v979 = vpack.c.b16 %v957, %v956
      %v980 = vpack.c.b16 %v959, %v958
      %v981 = vpack.c.b16 %v961, %v960
      %v982 = vpack.c.b16 %v963, %v962
      %v983 = vpack.c.b16 %v965, %v964
      %v984 = vpack.c.b16 %v967, %v966
      %v985 = vpack.c.b16 %v969, %v968
      %v987 = vsel %vm692, %v970, 0
      %v990 = vsel %vm692, %v971, 0
      %v993 = vsel %vm692, %v972, 0
      %v996 = vsel %vm692, %v973, 0
      %v999 = vsel %vm692, %v974, 0
      %v1002 = vsel %vm692, %v975, 0
      %v1005 = vsel %vm692, %v976, 0
      %v1008 = vsel %vm692, %v977, 0
      %v1011 = vsel %vm692, %v978, 0
      %v1014 = vsel %vm692, %v979, 0
      %v1017 = vsel %vm692, %v980, 0
      %v1020 = vsel %vm692, %v981, 0
      %v1023 = vsel %vm692, %v982, 0
      %v1026 = vsel %vm692, %v983, 0
      %v1029 = vsel %vm692, %v984, 0
      %v1032 = vsel %vm692, %v985, 0
      %v1035 = vsel %vm741, %v254, 0
      %1037 = vmatprep.subr.bf16.mxu0 0
      %1038 = vmatpush1.bf16.msra.mxu0 0
      %1039 = vmatprep.subr.bf16.mxu0 0
      %1040 = vmatpush1.bf16.msra.mxu0 0
      %1041 = vmatprep.subr.bf16.mxu0 0
      %1042 = vmatpush1.bf16.msra.mxu0 0
      %1043 = vmatprep.subr.bf16.mxu0 0
      %1044 = vmatpush1.bf16.msra.mxu0 0
      %1045 = vmatprep.subr.bf16.mxu0 0
      %1046 = vmatpush1.bf16.msra.mxu0 0
      %1047 = vmatprep.subr.bf16.mxu0 0
      %1048 = vmatpush1.bf16.msra.mxu0 0
      %1049 = vmatprep.subr.bf16.mxu0 0
      %1050 = vmatpush1.bf16.msra.mxu0 0
      %1051 = vmatprep.subr.bf16.mxu0 0
      %1052 = vmatpush1.bf16.msra.mxu0 %v1035
      %1053 = vmatprep.subr.bf16.mxu0 0
      %1054 = vmatpush2.bf16.msra.mxu0 0
      %1055 = vmatprep.subr.bf16.mxu0 0
      %1056 = vmatpush2.bf16.msra.mxu0 0
      %1057 = vmatprep.subr.bf16.mxu0 0
      %1058 = vmatpush2.bf16.msra.mxu0 0
      %1059 = vmatprep.subr.bf16.mxu0 0
      %1060 = vmatpush2.bf16.msra.mxu0 0
      %1061 = vmatprep.subr.bf16.mxu0 0
      %1062 = vmatpush2.bf16.msra.mxu0 0
      %1063 = vmatprep.subr.bf16.mxu0 0
      %1064 = vmatpush2.bf16.msra.mxu0 0
      %1065 = vmatprep.subr.bf16.mxu0 0
      %1066 = vmatpush2.bf16.msra.mxu0 0
      %1067 = vmatprep.subr.bf16.mxu0 0
      %1068 = vmatpush2.bf16.msra.mxu0 0
      %1069 = vmatprep.mubr.bf16.mxu0 0
      %1070 = vmatmul.mubr.bf16.gmra.mxu0 %v987
      %v1071 = vpop.f32.mrf.mxu0
      %v1072 = vadd.f32 %v780, %v1071
      %v1073 = vpop.f32.mrf.mxu0
      %v1074 = vpop.f32.mrf.mxu0
      %v1075 = vadd.f32 %v783, %v1074
      %v1076 = vpop.f32.mrf.mxu0
      %1077 = vmatprep.mubr.bf16.mxu0 0
      %1078 = vmatmul.mubr.bf16.gmra.mxu0 %v990
      %v1079 = vpop.f32.mrf.mxu0
      %v1080 = vadd.f32 %v788, %v1079
      %v1081 = vpop.f32.mrf.mxu0
      %v1082 = vpop.f32.mrf.mxu0
      %v1083 = vadd.f32 %v791, %v1082
      %v1084 = vpop.f32.mrf.mxu0
      %1085 = vmatprep.mubr.bf16.mxu0 0
      %1086 = vmatmul.mubr.bf16.gmra.mxu0 %v993
      %v1087 = vpop.f32.mrf.mxu0
      %v1088 = vadd.f32 %v796, %v1087
      %v1089 = vpop.f32.mrf.mxu0
      %v1090 = vpop.f32.mrf.mxu0
      %v1091 = vadd.f32 %v799, %v1090
      %v1092 = vpop.f32.mrf.mxu0
      %1093 = vmatprep.mubr.bf16.mxu0 0
      %1094 = vmatmul.mubr.bf16.gmra.mxu0 %v996
      %v1095 = vpop.f32.mrf.mxu0
      %v1096 = vadd.f32 %v804, %v1095
      %v1097 = vpop.f32.mrf.mxu0
      %v1098 = vpop.f32.mrf.mxu0
      %v1099 = vadd.f32 %v807, %v1098
      %v1100 = vpop.f32.mrf.mxu0
      %1101 = vmatprep.mubr.bf16.mxu0 0
      %1102 = vmatmul.mubr.bf16.gmra.mxu0 %v999
      %v1103 = vpop.f32.mrf.mxu0
      %v1104 = vadd.f32 %v812, %v1103
      %v1105 = vpop.f32.mrf.mxu0
      %v1106 = vpop.f32.mrf.mxu0
      %v1107 = vadd.f32 %v815, %v1106
      %v1108 = vpop.f32.mrf.mxu0
      %1109 = vmatprep.mubr.bf16.mxu0 0
      %1110 = vmatmul.mubr.bf16.gmra.mxu0 %v1002
      %v1111 = vpop.f32.mrf.mxu0
      %v1112 = vadd.f32 %v820, %v1111
      %v1113 = vpop.f32.mrf.mxu0
      %v1114 = vpop.f32.mrf.mxu0
      %v1115 = vadd.f32 %v823, %v1114
      %v1116 = vpop.f32.mrf.mxu0
      %1117 = vmatprep.mubr.bf16.mxu0 0
      %1118 = vmatmul.mubr.bf16.gmra.mxu0 %v1005
      %v1119 = vpop.f32.mrf.mxu0
      %v1120 = vadd.f32 %v828, %v1119
      %v1121 = vpop.f32.mrf.mxu0
      %v1122 = vpop.f32.mrf.mxu0
      %v1123 = vadd.f32 %v831, %v1122
      %v1124 = vpop.f32.mrf.mxu0
      %1125 = vmatprep.mubr.bf16.mxu0 0
      %1126 = vmatmul.mubr.bf16.gmra.mxu0 %v1008
      %v1127 = vpop.f32.mrf.mxu0
      %v1128 = vadd.f32 %v836, %v1127
      %v1129 = vpop.f32.mrf.mxu0
      %v1130 = vpop.f32.mrf.mxu0
      %v1131 = vadd.f32 %v839, %v1130
      %v1132 = vpop.f32.mrf.mxu0
      %1133 = vmatprep.mubr.bf16.mxu0 0
      %1134 = vmatmul.mubr.bf16.gmra.mxu0 %v1011
      %v1135 = vpop.f32.mrf.mxu0
      %v1136 = vadd.f32 %v844, %v1135
      %v1137 = vpop.f32.mrf.mxu0
      %v1138 = vpop.f32.mrf.mxu0
      %v1139 = vadd.f32 %v847, %v1138
      %v1140 = vpop.f32.mrf.mxu0
      %1141 = vmatprep.mubr.bf16.mxu0 0
      %1142 = vmatmul.mubr.bf16.gmra.mxu0 %v1014
      %v1143 = vpop.f32.mrf.mxu0
      %v1144 = vadd.f32 %v852, %v1143
      %v1145 = vpop.f32.mrf.mxu0
      %v1146 = vpop.f32.mrf.mxu0
      %v1147 = vadd.f32 %v855, %v1146
      %v1148 = vpop.f32.mrf.mxu0
      %1149 = vmatprep.mubr.bf16.mxu0 0
      %1150 = vmatmul.mubr.bf16.gmra.mxu0 %v1017
      %v1151 = vpop.f32.mrf.mxu0
      %v1152 = vadd.f32 %v860, %v1151
      %v1153 = vpop.f32.mrf.mxu0
      %v1154 = vpop.f32.mrf.mxu0
      %v1155 = vadd.f32 %v863, %v1154
      %v1156 = vpop.f32.mrf.mxu0
      %1157 = vmatprep.mubr.bf16.mxu0 0
      %1158 = vmatmul.mubr.bf16.gmra.mxu0 %v1020
      %v1159 = vpop.f32.mrf.mxu0
      %v1160 = vadd.f32 %v868, %v1159
      %v1161 = vpop.f32.mrf.mxu0
      %v1162 = vpop.f32.mrf.mxu0
      %v1163 = vadd.f32 %v871, %v1162
      %v1164 = vpop.f32.mrf.mxu0
      %1165 = vmatprep.mubr.bf16.mxu0 0
      %1166 = vmatmul.mubr.bf16.gmra.mxu0 %v1023
      %v1167 = vpop.f32.mrf.mxu0
      %v1168 = vadd.f32 %v876, %v1167
      %v1169 = vpop.f32.mrf.mxu0
      %v1170 = vpop.f32.mrf.mxu0
      %v1171 = vadd.f32 %v879, %v1170
      %v1172 = vpop.f32.mrf.mxu0
      %1173 = vmatprep.mubr.bf16.mxu0 0
      %1174 = vmatmul.mubr.bf16.gmra.mxu0 %v1026
      %v1175 = vpop.f32.mrf.mxu0
      %v1176 = vadd.f32 %v884, %v1175
      %v1177 = vpop.f32.mrf.mxu0
      %v1178 = vpop.f32.mrf.mxu0
      %v1179 = vadd.f32 %v887, %v1178
      %v1180 = vpop.f32.mrf.mxu0
      %1181 = vmatprep.mubr.bf16.mxu0 0
      %1182 = vmatmul.mubr.bf16.gmra.mxu0 %v1029
      %v1183 = vpop.f32.mrf.mxu0
      %v1184 = vadd.f32 %v892, %v1183
      %v1185 = vpop.f32.mrf.mxu0
      %v1186 = vpop.f32.mrf.mxu0
      %v1187 = vadd.f32 %v895, %v1186
      %v1188 = vpop.f32.mrf.mxu0
      %1189 = vmatprep.mubr.bf16.mxu0 0
      %1190 = vmatmul.mubr.bf16.gmra.mxu0 %v1032
      %v1191 = vpop.f32.mrf.mxu0
      %v1192 = vadd.f32 %v900, %v1191
      %v1193 = vpop.f32.mrf.mxu0
      %v1194 = vpop.f32.mrf.mxu0
      %v1195 = vadd.f32 %v903, %v1194
      %v1196 = vpop.f32.mrf.mxu0
      %1197 = vdwg.mxu0
      %vm1214 = vcmask 1042432
      %vm1215 = vcmask 1046532
      %vm1216 = vmor %vm1214, %vm1215
      %v1217 = vrot.slane %v206, 5
      %v1218 = vrot.slane %v1217, 4
      %v1219 = vrot.slane %v207, 5
      %v1220 = vsel %vm1216, %v1218, %v1219
      %v1221 = vrot.slane %v1219, 4
      %v1222 = vrot.slane %v208, 5
      %v1223 = vsel %vm1216, %v1221, %v1222
      %v1224 = vrot.slane %v209, 5
      %v1225 = vrot.slane %v1224, 4
      %v1226 = vrot.slane %v210, 5
      %v1227 = vsel %vm1216, %v1225, %v1226
      %v1228 = vrot.slane %v1226, 4
      %v1229 = vrot.slane %v211, 5
      %v1230 = vsel %vm1216, %v1228, %v1229
      %v1231 = vrot.slane %v212, 5
      %v1232 = vrot.slane %v1231, 4
      %v1233 = vrot.slane %v213, 5
      %v1234 = vsel %vm1216, %v1232, %v1233
      %v1235 = vrot.slane %v1233, 4
      %v1236 = vrot.slane %v214, 5
      %v1237 = vsel %vm1216, %v1235, %v1236
      %v1238 = vrot.slane %v215, 5
      %v1239 = vrot.slane %v1238, 4
      %v1240 = vrot.slane %v216, 5
      %v1241 = vsel %vm1216, %v1239, %v1240
      %v1242 = vrot.slane %v1240, 4
      %v1243 = vrot.slane %v217, 5
      %v1244 = vsel %vm1216, %v1242, %v1243
      %v1245 = vrot.slane %v218, 5
      %v1246 = vrot.slane %v1245, 4
      %v1247 = vrot.slane %v219, 5
      %v1248 = vsel %vm1216, %v1246, %v1247
      %v1249 = vrot.slane %v1247, 4
      %v1250 = vrot.slane %v220, 5
      %v1251 = vsel %vm1216, %v1249, %v1250
      %v1252 = vrot.slane %v221, 5
      %v1253 = vrot.slane %v1252, 4
      %v1254 = vrot.slane %v222, 5
      %v1255 = vsel %vm1216, %v1253, %v1254
      %v1256 = vrot.slane %v1254, 4
      %v1257 = vrot.slane %v223, 5
      %v1258 = vsel %vm1216, %v1256, %v1257
      %v1259 = vrot.slane %v224, 5
      %v1260 = vrot.slane %v1259, 4
      %v1261 = vrot.slane %v225, 5
      %v1262 = vsel %vm1216, %v1260, %v1261
      %v1263 = vrot.slane %v1261, 4
      %v1264 = vrot.slane %v226, 5
      %v1265 = vsel %vm1216, %v1263, %v1264
      %v1266 = vrot.slane %v227, 5
      %v1267 = vrot.slane %v1266, 4
      %v1268 = vrot.slane %v228, 5
      %v1269 = vsel %vm1216, %v1267, %v1268
      %v1270 = vrot.slane %v1268, 4
      %v1271 = vrot.slane %v229, 5
      %v1272 = vsel %vm1216, %v1270, %v1271
      %v1273 = vrot.slane %v230, 5
      %v1274 = vrot.slane %v1273, 4
      %v1275 = vrot.slane %v231, 5
      %v1276 = vsel %vm1216, %v1274, %v1275
      %v1277 = vrot.slane %v1275, 4
      %v1278 = vrot.slane %v232, 5
      %v1279 = vsel %vm1216, %v1277, %v1278
      %v1280 = vrot.slane %v233, 5
      %v1281 = vrot.slane %v1280, 4
      %v1282 = vrot.slane %v234, 5
      %v1283 = vsel %vm1216, %v1281, %v1282
      %v1284 = vrot.slane %v1282, 4
      %v1285 = vrot.slane %v235, 5
      %v1286 = vsel %vm1216, %v1284, %v1285
      %v1287 = vrot.slane %v236, 5
      %v1288 = vrot.slane %v1287, 4
      %v1289 = vrot.slane %v237, 5
      %v1290 = vsel %vm1216, %v1288, %v1289
      %v1291 = vrot.slane %v1289, 4
      %v1292 = vrot.slane %v238, 5
      %v1293 = vsel %vm1216, %v1291, %v1292
      %v1294 = vrot.slane %v239, 5
      %v1295 = vrot.slane %v1294, 4
      %v1296 = vrot.slane %v240, 5
      %v1297 = vsel %vm1216, %v1295, %v1296
      %v1298 = vrot.slane %v1296, 4
      %v1299 = vrot.slane %v241, 5
      %v1300 = vsel %vm1216, %v1298, %v1299
      %v1301 = vrot.slane %v242, 5
      %v1302 = vrot.slane %v1301, 4
      %v1303 = vrot.slane %v243, 5
      %v1304 = vsel %vm1216, %v1302, %v1303
      %v1305 = vrot.slane %v1303, 4
      %v1306 = vrot.slane %v244, 5
      %v1307 = vsel %vm1216, %v1305, %v1306
      %v1308 = vrot.slane %v245, 5
      %v1309 = vrot.slane %v1308, 4
      %v1310 = vrot.slane %v246, 5
      %v1311 = vsel %vm1216, %v1309, %v1310
      %v1312 = vrot.slane %v1310, 4
      %v1313 = vrot.slane %v247, 5
      %v1314 = vsel %vm1216, %v1312, %v1313
      %v1315 = vrot.slane %v248, 5
      %v1316 = vrot.slane %v1315, 4
      %v1317 = vrot.slane %v249, 5
      %v1318 = vsel %vm1216, %v1316, %v1317
      %v1319 = vrot.slane %v1317, 4
      %v1320 = vrot.slane %v250, 5
      %v1321 = vsel %vm1216, %v1319, %v1320
      %v1322 = vrot.slane %v251, 5
      %v1323 = vrot.slane %v1322, 4
      %v1324 = vrot.slane %v252, 5
      %v1325 = vsel %vm1216, %v1323, %v1324
      %v1326 = vrot.slane %v1324, 4
      %v1327 = vrot.slane %v253, 5
      %v1328 = vsel %vm1216, %v1326, %v1327
      %s1329 = scalar_lea.vmem %s1, 4
      %v1330 = vld [vmem:[%s1329] sm:$0x3]
      %v1331 = vunpack.c.l.b16 %v1220
      %v1332 = vunpack.c.l.b16 %v1223
      %v1333 = vunpack.c.l.b16 %v1227
      %v1334 = vunpack.c.l.b16 %v1230
      %v1335 = vunpack.c.l.b16 %v1234
      %v1336 = vunpack.c.l.b16 %v1237
      %v1337 = vunpack.c.l.b16 %v1241
      %v1338 = vunpack.c.l.b16 %v1244
      %v1339 = vunpack.c.l.b16 %v1248
      %v1340 = vunpack.c.l.b16 %v1251
      %v1341 = vunpack.c.l.b16 %v1255
      %v1342 = vunpack.c.l.b16 %v1258
      %v1343 = vunpack.c.l.b16 %v1262
      %v1344 = vunpack.c.l.b16 %v1265
      %v1345 = vunpack.c.l.b16 %v1269
      %v1346 = vunpack.c.l.b16 %v1272
      %v1347 = vunpack.c.l.b16 %v1276
      %v1348 = vunpack.c.l.b16 %v1279
      %v1349 = vunpack.c.l.b16 %v1283
      %v1350 = vunpack.c.l.b16 %v1286
      %v1351 = vunpack.c.l.b16 %v1290
      %v1352 = vunpack.c.l.b16 %v1293
      %v1353 = vunpack.c.l.b16 %v1297
      %v1354 = vunpack.c.l.b16 %v1300
      %v1355 = vunpack.c.l.b16 %v1304
      %v1356 = vunpack.c.l.b16 %v1307
      %v1357 = vunpack.c.l.b16 %v1311
      %v1358 = vunpack.c.l.b16 %v1314
      %v1359 = vunpack.c.l.b16 %v1318
      %v1360 = vunpack.c.l.b16 %v1321
      %v1361 = vunpack.c.l.b16 %v1325
      %v1362 = vunpack.c.l.b16 %v1328
      %v1363 = vpack.c.b16 %v1332, %v1331
      %v1364 = vpack.c.b16 %v1334, %v1333
      %v1365 = vpack.c.b16 %v1336, %v1335
      %v1366 = vpack.c.b16 %v1338, %v1337
      %v1367 = vpack.c.b16 %v1340, %v1339
      %v1368 = vpack.c.b16 %v1342, %v1341
      %v1369 = vpack.c.b16 %v1344, %v1343
      %v1370 = vpack.c.b16 %v1346, %v1345
      %v1371 = vpack.c.b16 %v1348, %v1347
      %v1372 = vpack.c.b16 %v1350, %v1349
      %v1373 = vpack.c.b16 %v1352, %v1351
      %v1374 = vpack.c.b16 %v1354, %v1353
      %v1375 = vpack.c.b16 %v1356, %v1355
      %v1376 = vpack.c.b16 %v1358, %v1357
      %v1377 = vpack.c.b16 %v1360, %v1359
      %v1378 = vpack.c.b16 %v1362, %v1361
      %v1380 = vsel %vm692, %v1363, 0
      %v1383 = vsel %vm692, %v1364, 0
      %v1386 = vsel %vm692, %v1365, 0
      %v1389 = vsel %vm692, %v1366, 0
      %v1392 = vsel %vm692, %v1367, 0
      %v1395 = vsel %vm692, %v1368, 0
      %v1398 = vsel %vm692, %v1369, 0
      %v1401 = vsel %vm692, %v1370, 0
      %v1404 = vsel %vm692, %v1371, 0
      %v1407 = vsel %vm692, %v1372, 0
      %v1410 = vsel %vm692, %v1373, 0
      %v1413 = vsel %vm692, %v1374, 0
      %v1416 = vsel %vm692, %v1375, 0
      %v1419 = vsel %vm692, %v1376, 0
      %v1422 = vsel %vm692, %v1377, 0
      %v1425 = vsel %vm692, %v1378, 0
      %v1428 = vsel %vm741, %v1330, 0
      %1430 = vmatprep.subr.bf16.mxu0 0
      %1431 = vmatpush1.bf16.msra.mxu0 0
      %1432 = vmatprep.subr.bf16.mxu0 0
      %1433 = vmatpush1.bf16.msra.mxu0 0
      %1434 = vmatprep.subr.bf16.mxu0 0
      %1435 = vmatpush1.bf16.msra.mxu0 0
      %1436 = vmatprep.subr.bf16.mxu0 0
      %1437 = vmatpush1.bf16.msra.mxu0 0
      %1438 = vmatprep.subr.bf16.mxu0 0
      %1439 = vmatpush1.bf16.msra.mxu0 0
      %1440 = vmatprep.subr.bf16.mxu0 0
      %1441 = vmatpush1.bf16.msra.mxu0 0
      %1442 = vmatprep.subr.bf16.mxu0 0
      %1443 = vmatpush1.bf16.msra.mxu0 0
      %1444 = vmatprep.subr.bf16.mxu0 0
      %1445 = vmatpush1.bf16.msra.mxu0 %v1428
      %1446 = vmatprep.subr.bf16.mxu0 0
      %1447 = vmatpush2.bf16.msra.mxu0 0
      %1448 = vmatprep.subr.bf16.mxu0 0
      %1449 = vmatpush2.bf16.msra.mxu0 0
      %1450 = vmatprep.subr.bf16.mxu0 0
      %1451 = vmatpush2.bf16.msra.mxu0 0
      %1452 = vmatprep.subr.bf16.mxu0 0
      %1453 = vmatpush2.bf16.msra.mxu0 0
      %1454 = vmatprep.subr.bf16.mxu0 0
      %1455 = vmatpush2.bf16.msra.mxu0 0
      %1456 = vmatprep.subr.bf16.mxu0 0
      %1457 = vmatpush2.bf16.msra.mxu0 0
      %1458 = vmatprep.subr.bf16.mxu0 0
      %1459 = vmatpush2.bf16.msra.mxu0 0
      %1460 = vmatprep.subr.bf16.mxu0 0
      %1461 = vmatpush2.bf16.msra.mxu0 0
      %1462 = vmatprep.mubr.bf16.mxu0 0
      %1463 = vmatmul.mubr.bf16.gmra.mxu0 %v1380
      %v1464 = vpop.f32.mrf.mxu0
      %v1465 = vadd.f32 0.0, %v1464
      %v1466 = vpop.f32.mrf.mxu0
      %v1467 = vpop.f32.mrf.mxu0
      %v1468 = vadd.f32 0.0, %v1467
      %v1469 = vpop.f32.mrf.mxu0
      %1470 = vmatprep.mubr.bf16.mxu0 0
      %1471 = vmatmul.mubr.bf16.gmra.mxu0 %v1383
      %v1472 = vpop.f32.mrf.mxu0
      %v1473 = vadd.f32 0.0, %v1472
      %v1474 = vpop.f32.mrf.mxu0
      %v1475 = vpop.f32.mrf.mxu0
      %v1476 = vadd.f32 0.0, %v1475
      %v1477 = vpop.f32.mrf.mxu0
      %1478 = vmatprep.mubr.bf16.mxu0 0
      %1479 = vmatmul.mubr.bf16.gmra.mxu0 %v1386
      %v1480 = vpop.f32.mrf.mxu0
      %v1481 = vadd.f32 0.0, %v1480
      %v1482 = vpop.f32.mrf.mxu0
      %v1483 = vpop.f32.mrf.mxu0
      %v1484 = vadd.f32 0.0, %v1483
      %v1485 = vpop.f32.mrf.mxu0
      %1486 = vmatprep.mubr.bf16.mxu0 0
      %1487 = vmatmul.mubr.bf16.gmra.mxu0 %v1389
      %v1488 = vpop.f32.mrf.mxu0
      %v1489 = vadd.f32 0.0, %v1488
      %v1490 = vpop.f32.mrf.mxu0
      %v1491 = vpop.f32.mrf.mxu0
      %v1492 = vadd.f32 0.0, %v1491
      %v1493 = vpop.f32.mrf.mxu0
      %1494 = vmatprep.mubr.bf16.mxu0 0
      %1495 = vmatmul.mubr.bf16.gmra.mxu0 %v1392
      %v1496 = vpop.f32.mrf.mxu0
      %v1497 = vadd.f32 0.0, %v1496
      %v1498 = vpop.f32.mrf.mxu0
      %v1499 = vpop.f32.mrf.mxu0
      %v1500 = vadd.f32 0.0, %v1499
      %v1501 = vpop.f32.mrf.mxu0
      %1502 = vmatprep.mubr.bf16.mxu0 0
      %1503 = vmatmul.mubr.bf16.gmra.mxu0 %v1395
      %v1504 = vpop.f32.mrf.mxu0
      %v1505 = vadd.f32 0.0, %v1504
      %v1506 = vpop.f32.mrf.mxu0
      %v1507 = vpop.f32.mrf.mxu0
      %v1508 = vadd.f32 0.0, %v1507
      %v1509 = vpop.f32.mrf.mxu0
      %1510 = vmatprep.mubr.bf16.mxu0 0
      %1511 = vmatmul.mubr.bf16.gmra.mxu0 %v1398
      %v1512 = vpop.f32.mrf.mxu0
      %v1513 = vadd.f32 0.0, %v1512
      %v1514 = vpop.f32.mrf.mxu0
      %v1515 = vpop.f32.mrf.mxu0
      %v1516 = vadd.f32 0.0, %v1515
      %v1517 = vpop.f32.mrf.mxu0
      %1518 = vmatprep.mubr.bf16.mxu0 0
      %1519 = vmatmul.mubr.bf16.gmra.mxu0 %v1401
      %v1520 = vpop.f32.mrf.mxu0
      %v1521 = vadd.f32 0.0, %v1520
      %v1522 = vpop.f32.mrf.mxu0
      %v1523 = vpop.f32.mrf.mxu0
      %v1524 = vadd.f32 0.0, %v1523
      %v1525 = vpop.f32.mrf.mxu0
      %1526 = vmatprep.mubr.bf16.mxu0 0
      %1527 = vmatmul.mubr.bf16.gmra.mxu0 %v1404
      %v1528 = vpop.f32.mrf.mxu0
      %v1529 = vadd.f32 0.0, %v1528
      %v1530 = vpop.f32.mrf.mxu0
      %v1531 = vpop.f32.mrf.mxu0
      %v1532 = vadd.f32 0.0, %v1531
      %v1533 = vpop.f32.mrf.mxu0
      %1534 = vmatprep.mubr.bf16.mxu0 0
      %1535 = vmatmul.mubr.bf16.gmra.mxu0 %v1407
      %v1536 = vpop.f32.mrf.mxu0
      %v1537 = vadd.f32 0.0, %v1536
      %v1538 = vpop.f32.mrf.mxu0
      %v1539 = vpop.f32.mrf.mxu0
      %v1540 = vadd.f32 0.0, %v1539
      %v1541 = vpop.f32.mrf.mxu0
      %1542 = vmatprep.mubr.bf16.mxu0 0
      %1543 = vmatmul.mubr.bf16.gmra.mxu0 %v1410
      %v1544 = vpop.f32.mrf.mxu0
      %v1545 = vadd.f32 0.0, %v1544
      %v1546 = vpop.f32.mrf.mxu0
      %v1547 = vpop.f32.mrf.mxu0
      %v1548 = vadd.f32 0.0, %v1547
      %v1549 = vpop.f32.mrf.mxu0
      %1550 = vmatprep.mubr.bf16.mxu0 0
      %1551 = vmatmul.mubr.bf16.gmra.mxu0 %v1413
      %v1552 = vpop.f32.mrf.mxu0
      %v1553 = vadd.f32 0.0, %v1552
      %v1554 = vpop.f32.mrf.mxu0
      %v1555 = vpop.f32.mrf.mxu0
      %v1556 = vadd.f32 0.0, %v1555
      %v1557 = vpop.f32.mrf.mxu0
      %1558 = vmatprep.mubr.bf16.mxu0 0
      %1559 = vmatmul.mubr.bf16.gmra.mxu0 %v1416
      %v1560 = vpop.f32.mrf.mxu0
      %v1561 = vadd.f32 0.0, %v1560
      %v1562 = vpop.f32.mrf.mxu0
      %v1563 = vpop.f32.mrf.mxu0
      %v1564 = vadd.f32 0.0, %v1563
      %v1565 = vpop.f32.mrf.mxu0
      %1566 = vmatprep.mubr.bf16.mxu0 0
      %1567 = vmatmul.mubr.bf16.gmra.mxu0 %v1419
      %v1568 = vpop.f32.mrf.mxu0
      %v1569 = vadd.f32 0.0, %v1568
      %v1570 = vpop.f32.mrf.mxu0
      %v1571 = vpop.f32.mrf.mxu0
      %v1572 = vadd.f32 0.0, %v1571
      %v1573 = vpop.f32.mrf.mxu0
      %1574 = vmatprep.mubr.bf16.mxu0 0
      %1575 = vmatmul.mubr.bf16.gmra.mxu0 %v1422
      %v1576 = vpop.f32.mrf.mxu0
      %v1577 = vadd.f32 0.0, %v1576
      %v1578 = vpop.f32.mrf.mxu0
      %v1579 = vpop.f32.mrf.mxu0
      %v1580 = vadd.f32 0.0, %v1579
      %v1581 = vpop.f32.mrf.mxu0
      %1582 = vmatprep.mubr.bf16.mxu0 0
      %1583 = vmatmul.mubr.bf16.gmra.mxu0 %v1425
      %v1584 = vpop.f32.mrf.mxu0
      %v1585 = vadd.f32 0.0, %v1584
      %v1586 = vpop.f32.mrf.mxu0
      %v1587 = vpop.f32.mrf.mxu0
      %v1588 = vadd.f32 0.0, %v1587
      %v1589 = vpop.f32.mrf.mxu0
      %1590 = vdwg.mxu0
      %v1591 = vadd.f32 %v1072, %v1465
      %v1592 = vadd.f32 %v1075, %v1468
      %v1593 = vadd.f32 %v1080, %v1473
      %v1594 = vadd.f32 %v1083, %v1476
      %v1595 = vadd.f32 %v1088, %v1481
      %v1596 = vadd.f32 %v1091, %v1484
      %v1597 = vadd.f32 %v1096, %v1489
      %v1598 = vadd.f32 %v1099, %v1492
      %v1599 = vadd.f32 %v1104, %v1497
      %v1600 = vadd.f32 %v1107, %v1500
      %v1601 = vadd.f32 %v1112, %v1505
      %v1602 = vadd.f32 %v1115, %v1508
      %v1603 = vadd.f32 %v1120, %v1513
      %v1604 = vadd.f32 %v1123, %v1516
      %v1605 = vadd.f32 %v1128, %v1521
      %v1606 = vadd.f32 %v1131, %v1524
      %v1607 = vadd.f32 %v1136, %v1529
      %v1608 = vadd.f32 %v1139, %v1532
      %v1609 = vadd.f32 %v1144, %v1537
      %v1610 = vadd.f32 %v1147, %v1540
      %v1611 = vadd.f32 %v1152, %v1545
      %v1612 = vadd.f32 %v1155, %v1548
      %v1613 = vadd.f32 %v1160, %v1553
      %v1614 = vadd.f32 %v1163, %v1556
      %v1615 = vadd.f32 %v1168, %v1561
      %v1616 = vadd.f32 %v1171, %v1564
      %v1617 = vadd.f32 %v1176, %v1569
      %v1618 = vadd.f32 %v1179, %v1572
      %v1619 = vadd.f32 %v1184, %v1577
      %v1620 = vadd.f32 %v1187, %v1580
      %v1621 = vadd.f32 %v1192, %v1585
      %v1622 = vadd.f32 %v1195, %v1588
      %s1623 = sadd.s32 %s202, 1
      %s1624 = smul.u32 %s1623, 3
      %s1625 = smul.addr %s1624, 4
      %s1626 = scalar_lea.vmem %s182, %s1625
      %v1627 = vld [vmem:[%s1626] sm:$0xf]
      %v1628 = vld [vmem:[%s1626 + $0x4] sm:$0xf]
      %v1629 = vld [vmem:[%s1626 + $0x8] sm:$0x1]
      %v1630 = vld [vmem:[%s1626 + $0xc] sm:$0xf]
      %v1631 = vld [vmem:[%s1626 + $0x10] sm:$0xf]
      %v1632 = vld [vmem:[%s1626 + $0x14] sm:$0x1]
      %v1633 = vld [vmem:[%s1626 + $0x18] sm:$0xf]
      %v1634 = vld [vmem:[%s1626 + $0x1c] sm:$0xf]
      %v1635 = vld [vmem:[%s1626 + $0x20] sm:$0x1]
      %v1636 = vld [vmem:[%s1626 + $0x24] sm:$0xf]
      %v1637 = vld [vmem:[%s1626 + $0x28] sm:$0xf]
      %v1638 = vld [vmem:[%s1626 + $0x2c] sm:$0x1]
      %v1639 = vld [vmem:[%s1626 + $0x30] sm:$0xf]
      %v1640 = vld [vmem:[%s1626 + $0x34] sm:$0xf]
      %v1641 = vld [vmem:[%s1626 + $0x38] sm:$0x1]
      %v1642 = vld [vmem:[%s1626 + $0x3c] sm:$0xf]
      %v1643 = vld [vmem:[%s1626 + $0x40] sm:$0xf]
      %v1644 = vld [vmem:[%s1626 + $0x44] sm:$0x1]
      %v1645 = vld [vmem:[%s1626 + $0x48] sm:$0xf]
      %v1646 = vld [vmem:[%s1626 + $0x4c] sm:$0xf]
      %v1647 = vld [vmem:[%s1626 + $0x50] sm:$0x1]
      %v1648 = vld [vmem:[%s1626 + $0x54] sm:$0xf]
      %v1649 = vld [vmem:[%s1626 + $0x58] sm:$0xf]
      %v1650 = vld [vmem:[%s1626 + $0x5c] sm:$0x1]
      %v1651 = vld [vmem:[%s1626 + $0x60] sm:$0xf]
      %v1652 = vld [vmem:[%s1626 + $0x64] sm:$0xf]
      %v1653 = vld [vmem:[%s1626 + $0x68] sm:$0x1]
      %v1654 = vld [vmem:[%s1626 + $0x6c] sm:$0xf]
      %v1655 = vld [vmem:[%s1626 + $0x70] sm:$0xf]
      %v1656 = vld [vmem:[%s1626 + $0x74] sm:$0x1]
      %v1657 = vld [vmem:[%s1626 + $0x78] sm:$0xf]
      %v1658 = vld [vmem:[%s1626 + $0x7c] sm:$0xf]
      %v1659 = vld [vmem:[%s1626 + $0x80] sm:$0x1]
      %v1660 = vld [vmem:[%s1626 + $0x84] sm:$0xf]
      %v1661 = vld [vmem:[%s1626 + $0x88] sm:$0xf]
      %v1662 = vld [vmem:[%s1626 + $0x8c] sm:$0x1]
      %v1663 = vld [vmem:[%s1626 + $0x90] sm:$0xf]
      %v1664 = vld [vmem:[%s1626 + $0x94] sm:$0xf]
      %v1665 = vld [vmem:[%s1626 + $0x98] sm:$0x1]
      %v1666 = vld [vmem:[%s1626 + $0x9c] sm:$0xf]
      %v1667 = vld [vmem:[%s1626 + $0xa0] sm:$0xf]
      %v1668 = vld [vmem:[%s1626 + $0xa4] sm:$0x1]
      %v1669 = vld [vmem:[%s1626 + $0xa8] sm:$0xf]
      %v1670 = vld [vmem:[%s1626 + $0xac] sm:$0xf]
      %v1671 = vld [vmem:[%s1626 + $0xb0] sm:$0x1]
      %v1672 = vld [vmem:[%s1626 + $0xb4] sm:$0xf]
      %v1673 = vld [vmem:[%s1626 + $0xb8] sm:$0xf]
      %v1674 = vld [vmem:[%s1626 + $0xbc] sm:$0x1]
      %s1675 = scalar_lea.vmem %s1, 6
      %v1676 = vld [vmem:[%s1675] sm:$0x3]
      %v1709 = vunpack.c.l.b16 %v1627
      %v1710 = vunpack.c.l.b16 %v1628
      %v1711 = vunpack.c.l.b16 %v1630
      %v1712 = vunpack.c.l.b16 %v1631
      %v1713 = vunpack.c.l.b16 %v1633
      %v1714 = vunpack.c.l.b16 %v1634
      %v1715 = vunpack.c.l.b16 %v1636
      %v1716 = vunpack.c.l.b16 %v1637
      %v1717 = vunpack.c.l.b16 %v1639
      %v1718 = vunpack.c.l.b16 %v1640
      %v1719 = vunpack.c.l.b16 %v1642
      %v1720 = vunpack.c.l.b16 %v1643
      %v1721 = vunpack.c.l.b16 %v1645
      %v1722 = vunpack.c.l.b16 %v1646
      %v1723 = vunpack.c.l.b16 %v1648
      %v1724 = vunpack.c.l.b16 %v1649
      %v1725 = vunpack.c.l.b16 %v1651
      %v1726 = vunpack.c.l.b16 %v1652
      %v1727 = vunpack.c.l.b16 %v1654
      %v1728 = vunpack.c.l.b16 %v1655
      %v1729 = vunpack.c.l.b16 %v1657
      %v1730 = vunpack.c.l.b16 %v1658
      %v1731 = vunpack.c.l.b16 %v1660
      %v1732 = vunpack.c.l.b16 %v1661
      %v1733 = vunpack.c.l.b16 %v1663
      %v1734 = vunpack.c.l.b16 %v1664
      %v1735 = vunpack.c.l.b16 %v1666
      %v1736 = vunpack.c.l.b16 %v1667
      %v1737 = vunpack.c.l.b16 %v1669
      %v1738 = vunpack.c.l.b16 %v1670
      %v1739 = vunpack.c.l.b16 %v1672
      %v1740 = vunpack.c.l.b16 %v1673
      %v1741 = vpack.c.b16 %v1710, %v1709
      %v1742 = vpack.c.b16 %v1712, %v1711
      %v1743 = vpack.c.b16 %v1714, %v1713
      %v1744 = vpack.c.b16 %v1716, %v1715
      %v1745 = vpack.c.b16 %v1718, %v1717
      %v1746 = vpack.c.b16 %v1720, %v1719
      %v1747 = vpack.c.b16 %v1722, %v1721
      %v1748 = vpack.c.b16 %v1724, %v1723
      %v1749 = vpack.c.b16 %v1726, %v1725
      %v1750 = vpack.c.b16 %v1728, %v1727
      %v1751 = vpack.c.b16 %v1730, %v1729
      %v1752 = vpack.c.b16 %v1732, %v1731
      %v1753 = vpack.c.b16 %v1734, %v1733
      %v1754 = vpack.c.b16 %v1736, %v1735
      %v1755 = vpack.c.b16 %v1738, %v1737
      %v1756 = vpack.c.b16 %v1740, %v1739
      %v1758 = vsel %vm692, %v1741, 0
      %v1761 = vsel %vm692, %v1742, 0
      %v1764 = vsel %vm692, %v1743, 0
      %v1767 = vsel %vm692, %v1744, 0
      %v1770 = vsel %vm692, %v1745, 0
      %v1773 = vsel %vm692, %v1746, 0
      %v1776 = vsel %vm692, %v1747, 0
      %v1779 = vsel %vm692, %v1748, 0
      %v1782 = vsel %vm692, %v1749, 0
      %v1785 = vsel %vm692, %v1750, 0
      %v1788 = vsel %vm692, %v1751, 0
      %v1791 = vsel %vm692, %v1752, 0
      %v1794 = vsel %vm692, %v1753, 0
      %v1797 = vsel %vm692, %v1754, 0
      %v1800 = vsel %vm692, %v1755, 0
      %v1803 = vsel %vm692, %v1756, 0
      %v1806 = vsel %vm741, %v1676, 0
      %1808 = vmatprep.subr.bf16.mxu0 0
      %1809 = vmatpush1.bf16.msra.mxu0 0
      %1810 = vmatprep.subr.bf16.mxu0 0
      %1811 = vmatpush1.bf16.msra.mxu0 0
      %1812 = vmatprep.subr.bf16.mxu0 0
      %1813 = vmatpush1.bf16.msra.mxu0 0
      %1814 = vmatprep.subr.bf16.mxu0 0
      %1815 = vmatpush1.bf16.msra.mxu0 0
      %1816 = vmatprep.subr.bf16.mxu0 0
      %1817 = vmatpush1.bf16.msra.mxu0 0
      %1818 = vmatprep.subr.bf16.mxu0 0
      %1819 = vmatpush1.bf16.msra.mxu0 0
      %1820 = vmatprep.subr.bf16.mxu0 0
      %1821 = vmatpush1.bf16.msra.mxu0 0
      %1822 = vmatprep.subr.bf16.mxu0 0
      %1823 = vmatpush1.bf16.msra.mxu0 %v1806
      %1824 = vmatprep.subr.bf16.mxu0 0
      %1825 = vmatpush2.bf16.msra.mxu0 0
      %1826 = vmatprep.subr.bf16.mxu0 0
      %1827 = vmatpush2.bf16.msra.mxu0 0
      %1828 = vmatprep.subr.bf16.mxu0 0
      %1829 = vmatpush2.bf16.msra.mxu0 0
      %1830 = vmatprep.subr.bf16.mxu0 0
      %1831 = vmatpush2.bf16.msra.mxu0 0
      %1832 = vmatprep.subr.bf16.mxu0 0
      %1833 = vmatpush2.bf16.msra.mxu0 0
      %1834 = vmatprep.subr.bf16.mxu0 0
      %1835 = vmatpush2.bf16.msra.mxu0 0
      %1836 = vmatprep.subr.bf16.mxu0 0
      %1837 = vmatpush2.bf16.msra.mxu0 0
      %1838 = vmatprep.subr.bf16.mxu0 0
      %1839 = vmatpush2.bf16.msra.mxu0 0
      %1840 = vmatprep.mubr.bf16.mxu0 0
      %1841 = vmatmul.mubr.bf16.gmra.mxu0 %v1758
      %v1842 = vpop.f32.mrf.mxu0
      %v1843 = vadd.f32 0.0, %v1842
      %v1844 = vpop.f32.mrf.mxu0
      %v1845 = vpop.f32.mrf.mxu0
      %v1846 = vadd.f32 0.0, %v1845
      %v1847 = vpop.f32.mrf.mxu0
      %1848 = vmatprep.mubr.bf16.mxu0 0
      %1849 = vmatmul.mubr.bf16.gmra.mxu0 %v1761
      %v1850 = vpop.f32.mrf.mxu0
      %v1851 = vadd.f32 0.0, %v1850
      %v1852 = vpop.f32.mrf.mxu0
      %v1853 = vpop.f32.mrf.mxu0
      %v1854 = vadd.f32 0.0, %v1853
      %v1855 = vpop.f32.mrf.mxu0
      %1856 = vmatprep.mubr.bf16.mxu0 0
      %1857 = vmatmul.mubr.bf16.gmra.mxu0 %v1764
      %v1858 = vpop.f32.mrf.mxu0
      %v1859 = vadd.f32 0.0, %v1858
      %v1860 = vpop.f32.mrf.mxu0
      %v1861 = vpop.f32.mrf.mxu0
      %v1862 = vadd.f32 0.0, %v1861
      %v1863 = vpop.f32.mrf.mxu0
      %1864 = vmatprep.mubr.bf16.mxu0 0
      %1865 = vmatmul.mubr.bf16.gmra.mxu0 %v1767
      %v1866 = vpop.f32.mrf.mxu0
      %v1867 = vadd.f32 0.0, %v1866
      %v1868 = vpop.f32.mrf.mxu0
      %v1869 = vpop.f32.mrf.mxu0
      %v1870 = vadd.f32 0.0, %v1869
      %v1871 = vpop.f32.mrf.mxu0
      %1872 = vmatprep.mubr.bf16.mxu0 0
      %1873 = vmatmul.mubr.bf16.gmra.mxu0 %v1770
      %v1874 = vpop.f32.mrf.mxu0
      %v1875 = vadd.f32 0.0, %v1874
      %v1876 = vpop.f32.mrf.mxu0
      %v1877 = vpop.f32.mrf.mxu0
      %v1878 = vadd.f32 0.0, %v1877
      %v1879 = vpop.f32.mrf.mxu0
      %1880 = vmatprep.mubr.bf16.mxu0 0
      %1881 = vmatmul.mubr.bf16.gmra.mxu0 %v1773
      %v1882 = vpop.f32.mrf.mxu0
      %v1883 = vadd.f32 0.0, %v1882
      %v1884 = vpop.f32.mrf.mxu0
      %v1885 = vpop.f32.mrf.mxu0
      %v1886 = vadd.f32 0.0, %v1885
      %v1887 = vpop.f32.mrf.mxu0
      %1888 = vmatprep.mubr.bf16.mxu0 0
      %1889 = vmatmul.mubr.bf16.gmra.mxu0 %v1776
      %v1890 = vpop.f32.mrf.mxu0
      %v1891 = vadd.f32 0.0, %v1890
      %v1892 = vpop.f32.mrf.mxu0
      %v1893 = vpop.f32.mrf.mxu0
      %v1894 = vadd.f32 0.0, %v1893
      %v1895 = vpop.f32.mrf.mxu0
      %1896 = vmatprep.mubr.bf16.mxu0 0
      %1897 = vmatmul.mubr.bf16.gmra.mxu0 %v1779
      %v1898 = vpop.f32.mrf.mxu0
      %v1899 = vadd.f32 0.0, %v1898
      %v1900 = vpop.f32.mrf.mxu0
      %v1901 = vpop.f32.mrf.mxu0
      %v1902 = vadd.f32 0.0, %v1901
      %v1903 = vpop.f32.mrf.mxu0
      %1904 = vmatprep.mubr.bf16.mxu0 0
      %1905 = vmatmul.mubr.bf16.gmra.mxu0 %v1782
      %v1906 = vpop.f32.mrf.mxu0
      %v1907 = vadd.f32 0.0, %v1906
      %v1908 = vpop.f32.mrf.mxu0
      %v1909 = vpop.f32.mrf.mxu0
      %v1910 = vadd.f32 0.0, %v1909
      %v1911 = vpop.f32.mrf.mxu0
      %1912 = vmatprep.mubr.bf16.mxu0 0
      %1913 = vmatmul.mubr.bf16.gmra.mxu0 %v1785
      %v1914 = vpop.f32.mrf.mxu0
      %v1915 = vadd.f32 0.0, %v1914
      %v1916 = vpop.f32.mrf.mxu0
      %v1917 = vpop.f32.mrf.mxu0
      %v1918 = vadd.f32 0.0, %v1917
      %v1919 = vpop.f32.mrf.mxu0
      %1920 = vmatprep.mubr.bf16.mxu0 0
      %1921 = vmatmul.mubr.bf16.gmra.mxu0 %v1788
      %v1922 = vpop.f32.mrf.mxu0
      %v1923 = vadd.f32 0.0, %v1922
      %v1924 = vpop.f32.mrf.mxu0
      %v1925 = vpop.f32.mrf.mxu0
      %v1926 = vadd.f32 0.0, %v1925
      %v1927 = vpop.f32.mrf.mxu0
      %1928 = vmatprep.mubr.bf16.mxu0 0
      %1929 = vmatmul.mubr.bf16.gmra.mxu0 %v1791
      %v1930 = vpop.f32.mrf.mxu0
      %v1931 = vadd.f32 0.0, %v1930
      %v1932 = vpop.f32.mrf.mxu0
      %v1933 = vpop.f32.mrf.mxu0
      %v1934 = vadd.f32 0.0, %v1933
      %v1935 = vpop.f32.mrf.mxu0
      %1936 = vmatprep.mubr.bf16.mxu0 0
      %1937 = vmatmul.mubr.bf16.gmra.mxu0 %v1794
      %v1938 = vpop.f32.mrf.mxu0
      %v1939 = vadd.f32 0.0, %v1938
      %v1940 = vpop.f32.mrf.mxu0
      %v1941 = vpop.f32.mrf.mxu0
      %v1942 = vadd.f32 0.0, %v1941
      %v1943 = vpop.f32.mrf.mxu0
      %1944 = vmatprep.mubr.bf16.mxu0 0
      %1945 = vmatmul.mubr.bf16.gmra.mxu0 %v1797
      %v1946 = vpop.f32.mrf.mxu0
      %v1947 = vadd.f32 0.0, %v1946
      %v1948 = vpop.f32.mrf.mxu0
      %v1949 = vpop.f32.mrf.mxu0
      %v1950 = vadd.f32 0.0, %v1949
      %v1951 = vpop.f32.mrf.mxu0
      %1952 = vmatprep.mubr.bf16.mxu0 0
      %1953 = vmatmul.mubr.bf16.gmra.mxu0 %v1800
      %v1954 = vpop.f32.mrf.mxu0
      %v1955 = vadd.f32 0.0, %v1954
      %v1956 = vpop.f32.mrf.mxu0
      %v1957 = vpop.f32.mrf.mxu0
      %v1958 = vadd.f32 0.0, %v1957
      %v1959 = vpop.f32.mrf.mxu0
      %1960 = vmatprep.mubr.bf16.mxu0 0
      %1961 = vmatmul.mubr.bf16.gmra.mxu0 %v1803
      %v1962 = vpop.f32.mrf.mxu0
      %v1963 = vadd.f32 0.0, %v1962
      %v1964 = vpop.f32.mrf.mxu0
      %v1965 = vpop.f32.mrf.mxu0
      %v1966 = vadd.f32 0.0, %v1965
      %v1967 = vpop.f32.mrf.mxu0
      %1968 = vdwg.mxu0
      %v1969 = vadd.f32 %v1591, %v1843
      %v1970 = vadd.f32 %v1592, %v1846
      %v1971 = vadd.f32 %v1593, %v1851
      %v1972 = vadd.f32 %v1594, %v1854
      %v1973 = vadd.f32 %v1595, %v1859
      %v1974 = vadd.f32 %v1596, %v1862
      %v1975 = vadd.f32 %v1597, %v1867
      %v1976 = vadd.f32 %v1598, %v1870
      %v1977 = vadd.f32 %v1599, %v1875
      %v1978 = vadd.f32 %v1600, %v1878
      %v1979 = vadd.f32 %v1601, %v1883
      %v1980 = vadd.f32 %v1602, %v1886
      %v1981 = vadd.f32 %v1603, %v1891
      %v1982 = vadd.f32 %v1604, %v1894
      %v1983 = vadd.f32 %v1605, %v1899
      %v1984 = vadd.f32 %v1606, %v1902
      %v1985 = vadd.f32 %v1607, %v1907
      %v1986 = vadd.f32 %v1608, %v1910
      %v1987 = vadd.f32 %v1609, %v1915
      %v1988 = vadd.f32 %v1610, %v1918
      %v1989 = vadd.f32 %v1611, %v1923
      %v1990 = vadd.f32 %v1612, %v1926
      %v1991 = vadd.f32 %v1613, %v1931
      %v1992 = vadd.f32 %v1614, %v1934
      %v1993 = vadd.f32 %v1615, %v1939
      %v1994 = vadd.f32 %v1616, %v1942
      %v1995 = vadd.f32 %v1617, %v1947
      %v1996 = vadd.f32 %v1618, %v1950
      %v1997 = vadd.f32 %v1619, %v1955
      %v1998 = vadd.f32 %v1620, %v1958
      %v1999 = vadd.f32 %v1621, %v1963
      %v2000 = vadd.f32 %v1622, %v1966
      %v2002 = vshrl.u32 %v1627, 16
      %v2004 = vrot.slane %v2002, 4
      %v2005 = vshll.u32 %v1627, 16
      %v2007 = vrot.slane %v2005, 5
      %v2008 = vor.u32 %v2004, %v2007
      %v2009 = vrot.slane %v2008, 4
      %v2011 = vshll.u32 %v1628, 16
      %v2013 = vrot.slane %v2011, 5
      %v2014 = vsel %vm257, %v2009, %v2013
      %v2015 = vshrl.u32 %v1628, 16
      %v2017 = vrot.slane %v2015, 4
      %v2018 = vor.u32 %v2017, %v2013
      %v2019 = vrot.slane %v2018, 4
      %v2021 = vshll.u32 %v1629, 16
      %v2023 = vrot.slane %v2021, 5
      %v2024 = vsel %vm257, %v2019, %v2023
      %v2026 = vshrl.u32 %v1630, 16
      %v2028 = vrot.slane %v2026, 4
      %v2029 = vshll.u32 %v1630, 16
      %v2031 = vrot.slane %v2029, 5
      %v2032 = vor.u32 %v2028, %v2031
      %v2033 = vrot.slane %v2032, 4
      %v2035 = vshll.u32 %v1631, 16
      %v2037 = vrot.slane %v2035, 5
      %v2038 = vsel %vm257, %v2033, %v2037
      %v2039 = vshrl.u32 %v1631, 16
      %v2041 = vrot.slane %v2039, 4
      %v2042 = vor.u32 %v2041, %v2037
      %v2043 = vrot.slane %v2042, 4
      %v2045 = vshll.u32 %v1632, 16
      %v2047 = vrot.slane %v2045, 5
      %v2048 = vsel %vm257, %v2043, %v2047
      %v2050 = vshrl.u32 %v1633, 16
      %v2052 = vrot.slane %v2050, 4
      %v2053 = vshll.u32 %v1633, 16
      %v2055 = vrot.slane %v2053, 5
      %v2056 = vor.u32 %v2052, %v2055
      %v2057 = vrot.slane %v2056, 4
      %v2059 = vshll.u32 %v1634, 16
      %v2061 = vrot.slane %v2059, 5
      %v2062 = vsel %vm257, %v2057, %v2061
      %v2063 = vshrl.u32 %v1634, 16
      %v2065 = vrot.slane %v2063, 4
      %v2066 = vor.u32 %v2065, %v2061
      %v2067 = vrot.slane %v2066, 4
      %v2069 = vshll.u32 %v1635, 16
      %v2071 = vrot.slane %v2069, 5
      %v2072 = vsel %vm257, %v2067, %v2071
      %v2074 = vshrl.u32 %v1636, 16
      %v2076 = vrot.slane %v2074, 4
      %v2077 = vshll.u32 %v1636, 16
      %v2079 = vrot.slane %v2077, 5
      %v2080 = vor.u32 %v2076, %v2079
      %v2081 = vrot.slane %v2080, 4
      %v2083 = vshll.u32 %v1637, 16
      %v2085 = vrot.slane %v2083, 5
      %v2086 = vsel %vm257, %v2081, %v2085
      %v2087 = vshrl.u32 %v1637, 16
      %v2089 = vrot.slane %v2087, 4
      %v2090 = vor.u32 %v2089, %v2085
      %v2091 = vrot.slane %v2090, 4
      %v2093 = vshll.u32 %v1638, 16
      %v2095 = vrot.slane %v2093, 5
      %v2096 = vsel %vm257, %v2091, %v2095
      %v2098 = vshrl.u32 %v1639, 16
      %v2100 = vrot.slane %v2098, 4
      %v2101 = vshll.u32 %v1639, 16
      %v2103 = vrot.slane %v2101, 5
      %v2104 = vor.u32 %v2100, %v2103
      %v2105 = vrot.slane %v2104, 4
      %v2107 = vshll.u32 %v1640, 16
      %v2109 = vrot.slane %v2107, 5
      %v2110 = vsel %vm257, %v2105, %v2109
      %v2111 = vshrl.u32 %v1640, 16
      %v2113 = vrot.slane %v2111, 4
      %v2114 = vor.u32 %v2113, %v2109
      %v2115 = vrot.slane %v2114, 4
      %v2117 = vshll.u32 %v1641, 16
      %v2119 = vrot.slane %v2117, 5
      %v2120 = vsel %vm257, %v2115, %v2119
      %v2122 = vshrl.u32 %v1642, 16
      %v2124 = vrot.slane %v2122, 4
      %v2125 = vshll.u32 %v1642, 16
      %v2127 = vrot.slane %v2125, 5
      %v2128 = vor.u32 %v2124, %v2127
      %v2129 = vrot.slane %v2128, 4
      %v2131 = vshll.u32 %v1643, 16
      %v2133 = vrot.slane %v2131, 5
      %v2134 = vsel %vm257, %v2129, %v2133
      %v2135 = vshrl.u32 %v1643, 16
      %v2137 = vrot.slane %v2135, 4
      %v2138 = vor.u32 %v2137, %v2133
      %v2139 = vrot.slane %v2138, 4
      %v2141 = vshll.u32 %v1644, 16
      %v2143 = vrot.slane %v2141, 5
      %v2144 = vsel %vm257, %v2139, %v2143
      %v2146 = vshrl.u32 %v1645, 16
      %v2148 = vrot.slane %v2146, 4
      %v2149 = vshll.u32 %v1645, 16
      %v2151 = vrot.slane %v2149, 5
      %v2152 = vor.u32 %v2148, %v2151
      %v2153 = vrot.slane %v2152, 4
      %v2155 = vshll.u32 %v1646, 16
      %v2157 = vrot.slane %v2155, 5
      %v2158 = vsel %vm257, %v2153, %v2157
      %v2159 = vshrl.u32 %v1646, 16
      %v2161 = vrot.slane %v2159, 4
      %v2162 = vor.u32 %v2161, %v2157
      %v2163 = vrot.slane %v2162, 4
      %v2165 = vshll.u32 %v1647, 16
      %v2167 = vrot.slane %v2165, 5
      %v2168 = vsel %vm257, %v2163, %v2167
      %v2170 = vshrl.u32 %v1648, 16
      %v2172 = vrot.slane %v2170, 4
      %v2173 = vshll.u32 %v1648, 16
      %v2175 = vrot.slane %v2173, 5
      %v2176 = vor.u32 %v2172, %v2175
      %v2177 = vrot.slane %v2176, 4
      %v2179 = vshll.u32 %v1649, 16
      %v2181 = vrot.slane %v2179, 5
      %v2182 = vsel %vm257, %v2177, %v2181
      %v2183 = vshrl.u32 %v1649, 16
      %v2185 = vrot.slane %v2183, 4
      %v2186 = vor.u32 %v2185, %v2181
      %v2187 = vrot.slane %v2186, 4
      %v2189 = vshll.u32 %v1650, 16
      %v2191 = vrot.slane %v2189, 5
      %v2192 = vsel %vm257, %v2187, %v2191
      %v2194 = vshrl.u32 %v1651, 16
      %v2196 = vrot.slane %v2194, 4
      %v2197 = vshll.u32 %v1651, 16
      %v2199 = vrot.slane %v2197, 5
      %v2200 = vor.u32 %v2196, %v2199
      %v2201 = vrot.slane %v2200, 4
      %v2203 = vshll.u32 %v1652, 16
      %v2205 = vrot.slane %v2203, 5
      %v2206 = vsel %vm257, %v2201, %v2205
      %v2207 = vshrl.u32 %v1652, 16
      %v2209 = vrot.slane %v2207, 4
      %v2210 = vor.u32 %v2209, %v2205
      %v2211 = vrot.slane %v2210, 4
      %v2213 = vshll.u32 %v1653, 16
      %v2215 = vrot.slane %v2213, 5
      %v2216 = vsel %vm257, %v2211, %v2215
      %v2218 = vshrl.u32 %v1654, 16
      %v2220 = vrot.slane %v2218, 4
      %v2221 = vshll.u32 %v1654, 16
      %v2223 = vrot.slane %v2221, 5
      %v2224 = vor.u32 %v2220, %v2223
      %v2225 = vrot.slane %v2224, 4
      %v2227 = vshll.u32 %v1655, 16
      %v2229 = vrot.slane %v2227, 5
      %v2230 = vsel %vm257, %v2225, %v2229
      %v2231 = vshrl.u32 %v1655, 16
      %v2233 = vrot.slane %v2231, 4
      %v2234 = vor.u32 %v2233, %v2229
      %v2235 = vrot.slane %v2234, 4
      %v2237 = vshll.u32 %v1656, 16
      %v2239 = vrot.slane %v2237, 5
      %v2240 = vsel %vm257, %v2235, %v2239
      %v2242 = vshrl.u32 %v1657, 16
      %v2244 = vrot.slane %v2242, 4
      %v2245 = vshll.u32 %v1657, 16
      %v2247 = vrot.slane %v2245, 5
      %v2248 = vor.u32 %v2244, %v2247
      %v2249 = vrot.slane %v2248, 4
      %v2251 = vshll.u32 %v1658, 16
      %v2253 = vrot.slane %v2251, 5
      %v2254 = vsel %vm257, %v2249, %v2253
      %v2255 = vshrl.u32 %v1658, 16
      %v2257 = vrot.slane %v2255, 4
      %v2258 = vor.u32 %v2257, %v2253
      %v2259 = vrot.slane %v2258, 4
      %v2261 = vshll.u32 %v1659, 16
      %v2263 = vrot.slane %v2261, 5
      %v2264 = vsel %vm257, %v2259, %v2263
      %v2266 = vshrl.u32 %v1660, 16
      %v2268 = vrot.slane %v2266, 4
      %v2269 = vshll.u32 %v1660, 16
      %v2271 = vrot.slane %v2269, 5
      %v2272 = vor.u32 %v2268, %v2271
      %v2273 = vrot.slane %v2272, 4
      %v2275 = vshll.u32 %v1661, 16
      %v2277 = vrot.slane %v2275, 5
      %v2278 = vsel %vm257, %v2273, %v2277
      %v2279 = vshrl.u32 %v1661, 16
      %v2281 = vrot.slane %v2279, 4
      %v2282 = vor.u32 %v2281, %v2277
      %v2283 = vrot.slane %v2282, 4
      %v2285 = vshll.u32 %v1662, 16
      %v2287 = vrot.slane %v2285, 5
      %v2288 = vsel %vm257, %v2283, %v2287
      %v2290 = vshrl.u32 %v1663, 16
      %v2292 = vrot.slane %v2290, 4
      %v2293 = vshll.u32 %v1663, 16
      %v2295 = vrot.slane %v2293, 5
      %v2296 = vor.u32 %v2292, %v2295
      %v2297 = vrot.slane %v2296, 4
      %v2299 = vshll.u32 %v1664, 16
      %v2301 = vrot.slane %v2299, 5
      %v2302 = vsel %vm257, %v2297, %v2301
      %v2303 = vshrl.u32 %v1664, 16
      %v2305 = vrot.slane %v2303, 4
      %v2306 = vor.u32 %v2305, %v2301
      %v2307 = vrot.slane %v2306, 4
      %v2309 = vshll.u32 %v1665, 16
      %v2311 = vrot.slane %v2309, 5
      %v2312 = vsel %vm257, %v2307, %v2311
      %v2314 = vshrl.u32 %v1666, 16
      %v2316 = vrot.slane %v2314, 4
      %v2317 = vshll.u32 %v1666, 16
      %v2319 = vrot.slane %v2317, 5
      %v2320 = vor.u32 %v2316, %v2319
      %v2321 = vrot.slane %v2320, 4
      %v2323 = vshll.u32 %v1667, 16
      %v2325 = vrot.slane %v2323, 5
      %v2326 = vsel %vm257, %v2321, %v2325
      %v2327 = vshrl.u32 %v1667, 16
      %v2329 = vrot.slane %v2327, 4
      %v2330 = vor.u32 %v2329, %v2325
      %v2331 = vrot.slane %v2330, 4
      %v2333 = vshll.u32 %v1668, 16
      %v2335 = vrot.slane %v2333, 5
      %v2336 = vsel %vm257, %v2331, %v2335
      %v2338 = vshrl.u32 %v1669, 16
      %v2340 = vrot.slane %v2338, 4
      %v2341 = vshll.u32 %v1669, 16
      %v2343 = vrot.slane %v2341, 5
      %v2344 = vor.u32 %v2340, %v2343
      %v2345 = vrot.slane %v2344, 4
      %v2347 = vshll.u32 %v1670, 16
      %v2349 = vrot.slane %v2347, 5
      %v2350 = vsel %vm257, %v2345, %v2349
      %v2351 = vshrl.u32 %v1670, 16
      %v2353 = vrot.slane %v2351, 4
      %v2354 = vor.u32 %v2353, %v2349
      %v2355 = vrot.slane %v2354, 4
      %v2357 = vshll.u32 %v1671, 16
      %v2359 = vrot.slane %v2357, 5
      %v2360 = vsel %vm257, %v2355, %v2359
      %v2362 = vshrl.u32 %v1672, 16
      %v2364 = vrot.slane %v2362, 4
      %v2365 = vshll.u32 %v1672, 16
      %v2367 = vrot.slane %v2365, 5
      %v2368 = vor.u32 %v2364, %v2367
      %v2369 = vrot.slane %v2368, 4
      %v2371 = vshll.u32 %v1673, 16
      %v2373 = vrot.slane %v2371, 5
      %v2374 = vsel %vm257, %v2369, %v2373
      %v2375 = vshrl.u32 %v1673, 16
      %v2377 = vrot.slane %v2375, 4
      %v2378 = vor.u32 %v2377, %v2373
      %v2379 = vrot.slane %v2378, 4
      %v2381 = vshll.u32 %v1674, 16
      %v2383 = vrot.slane %v2381, 5
      %v2384 = vsel %vm257, %v2379, %v2383
      %s2385 = scalar_lea.vmem %s1, 8
      %v2386 = vld [vmem:[%s2385] sm:$0x3]
      %v2387 = vunpack.c.l.b16 %v2014
      %v2388 = vunpack.c.l.b16 %v2024
      %v2389 = vunpack.c.l.b16 %v2038
      %v2390 = vunpack.c.l.b16 %v2048
      %v2391 = vunpack.c.l.b16 %v2062
      %v2392 = vunpack.c.l.b16 %v2072
      %v2393 = vunpack.c.l.b16 %v2086
      %v2394 = vunpack.c.l.b16 %v2096
      %v2395 = vunpack.c.l.b16 %v2110
      %v2396 = vunpack.c.l.b16 %v2120
      %v2397 = vunpack.c.l.b16 %v2134
      %v2398 = vunpack.c.l.b16 %v2144
      %v2399 = vunpack.c.l.b16 %v2158
      %v2400 = vunpack.c.l.b16 %v2168
      %v2401 = vunpack.c.l.b16 %v2182
      %v2402 = vunpack.c.l.b16 %v2192
      %v2403 = vunpack.c.l.b16 %v2206
      %v2404 = vunpack.c.l.b16 %v2216
      %v2405 = vunpack.c.l.b16 %v2230
      %v2406 = vunpack.c.l.b16 %v2240
      %v2407 = vunpack.c.l.b16 %v2254
      %v2408 = vunpack.c.l.b16 %v2264
      %v2409 = vunpack.c.l.b16 %v2278
      %v2410 = vunpack.c.l.b16 %v2288
      %v2411 = vunpack.c.l.b16 %v2302
      %v2412 = vunpack.c.l.b16 %v2312
      %v2413 = vunpack.c.l.b16 %v2326
      %v2414 = vunpack.c.l.b16 %v2336
      %v2415 = vunpack.c.l.b16 %v2350
      %v2416 = vunpack.c.l.b16 %v2360
      %v2417 = vunpack.c.l.b16 %v2374
      %v2418 = vunpack.c.l.b16 %v2384
      %v2419 = vpack.c.b16 %v2388, %v2387
      %v2420 = vpack.c.b16 %v2390, %v2389
      %v2421 = vpack.c.b16 %v2392, %v2391
      %v2422 = vpack.c.b16 %v2394, %v2393
      %v2423 = vpack.c.b16 %v2396, %v2395
      %v2424 = vpack.c.b16 %v2398, %v2397
      %v2425 = vpack.c.b16 %v2400, %v2399
      %v2426 = vpack.c.b16 %v2402, %v2401
      %v2427 = vpack.c.b16 %v2404, %v2403
      %v2428 = vpack.c.b16 %v2406, %v2405
      %v2429 = vpack.c.b16 %v2408, %v2407
      %v2430 = vpack.c.b16 %v2410, %v2409
      %v2431 = vpack.c.b16 %v2412, %v2411
      %v2432 = vpack.c.b16 %v2414, %v2413
      %v2433 = vpack.c.b16 %v2416, %v2415
      %v2434 = vpack.c.b16 %v2418, %v2417
      %v2436 = vsel %vm692, %v2419, 0
      %v2439 = vsel %vm692, %v2420, 0
      %v2442 = vsel %vm692, %v2421, 0
      %v2445 = vsel %vm692, %v2422, 0
      %v2448 = vsel %vm692, %v2423, 0
      %v2451 = vsel %vm692, %v2424, 0
      %v2454 = vsel %vm692, %v2425, 0
      %v2457 = vsel %vm692, %v2426, 0
      %v2460 = vsel %vm692, %v2427, 0
      %v2463 = vsel %vm692, %v2428, 0
      %v2466 = vsel %vm692, %v2429, 0
      %v2469 = vsel %vm692, %v2430, 0
      %v2472 = vsel %vm692, %v2431, 0
      %v2475 = vsel %vm692, %v2432, 0
      %v2478 = vsel %vm692, %v2433, 0
      %v2481 = vsel %vm692, %v2434, 0
      %v2484 = vsel %vm741, %v2386, 0
      %2486 = vmatprep.subr.bf16.mxu0 0
      %2487 = vmatpush1.bf16.msra.mxu0 0
      %2488 = vmatprep.subr.bf16.mxu0 0
      %2489 = vmatpush1.bf16.msra.mxu0 0
      %2490 = vmatprep.subr.bf16.mxu0 0
      %2491 = vmatpush1.bf16.msra.mxu0 0
      %2492 = vmatprep.subr.bf16.mxu0 0
      %2493 = vmatpush1.bf16.msra.mxu0 0
      %2494 = vmatprep.subr.bf16.mxu0 0
      %2495 = vmatpush1.bf16.msra.mxu0 0
      %2496 = vmatprep.subr.bf16.mxu0 0
      %2497 = vmatpush1.bf16.msra.mxu0 0
      %2498 = vmatprep.subr.bf16.mxu0 0
      %2499 = vmatpush1.bf16.msra.mxu0 0
      %2500 = vmatprep.subr.bf16.mxu0 0
      %2501 = vmatpush1.bf16.msra.mxu0 %v2484
      %2502 = vmatprep.subr.bf16.mxu0 0
      %2503 = vmatpush2.bf16.msra.mxu0 0
      %2504 = vmatprep.subr.bf16.mxu0 0
      %2505 = vmatpush2.bf16.msra.mxu0 0
      %2506 = vmatprep.subr.bf16.mxu0 0
      %2507 = vmatpush2.bf16.msra.mxu0 0
      %2508 = vmatprep.subr.bf16.mxu0 0
      %2509 = vmatpush2.bf16.msra.mxu0 0
      %2510 = vmatprep.subr.bf16.mxu0 0
      %2511 = vmatpush2.bf16.msra.mxu0 0
      %2512 = vmatprep.subr.bf16.mxu0 0
      %2513 = vmatpush2.bf16.msra.mxu0 0
      %2514 = vmatprep.subr.bf16.mxu0 0
      %2515 = vmatpush2.bf16.msra.mxu0 0
      %2516 = vmatprep.subr.bf16.mxu0 0
      %2517 = vmatpush2.bf16.msra.mxu0 0
      %2518 = vmatprep.mubr.bf16.mxu0 0
      %2519 = vmatmul.mubr.bf16.gmra.mxu0 %v2436
      %v2520 = vpop.f32.mrf.mxu0
      %v2521 = vadd.f32 0.0, %v2520
      %v2522 = vpop.f32.mrf.mxu0
      %v2523 = vpop.f32.mrf.mxu0
      %v2524 = vadd.f32 0.0, %v2523
      %v2525 = vpop.f32.mrf.mxu0
      %2526 = vmatprep.mubr.bf16.mxu0 0
      %2527 = vmatmul.mubr.bf16.gmra.mxu0 %v2439
      %v2528 = vpop.f32.mrf.mxu0
      %v2529 = vadd.f32 0.0, %v2528
      %v2530 = vpop.f32.mrf.mxu0
      %v2531 = vpop.f32.mrf.mxu0
      %v2532 = vadd.f32 0.0, %v2531
      %v2533 = vpop.f32.mrf.mxu0
      %2534 = vmatprep.mubr.bf16.mxu0 0
      %2535 = vmatmul.mubr.bf16.gmra.mxu0 %v2442
      %v2536 = vpop.f32.mrf.mxu0
      %v2537 = vadd.f32 0.0, %v2536
      %v2538 = vpop.f32.mrf.mxu0
      %v2539 = vpop.f32.mrf.mxu0
      %v2540 = vadd.f32 0.0, %v2539
      %v2541 = vpop.f32.mrf.mxu0
      %2542 = vmatprep.mubr.bf16.mxu0 0
      %2543 = vmatmul.mubr.bf16.gmra.mxu0 %v2445
      %v2544 = vpop.f32.mrf.mxu0
      %v2545 = vadd.f32 0.0, %v2544
      %v2546 = vpop.f32.mrf.mxu0
      %v2547 = vpop.f32.mrf.mxu0
      %v2548 = vadd.f32 0.0, %v2547
      %v2549 = vpop.f32.mrf.mxu0
      %2550 = vmatprep.mubr.bf16.mxu0 0
      %2551 = vmatmul.mubr.bf16.gmra.mxu0 %v2448
      %v2552 = vpop.f32.mrf.mxu0
      %v2553 = vadd.f32 0.0, %v2552
      %v2554 = vpop.f32.mrf.mxu0
      %v2555 = vpop.f32.mrf.mxu0
      %v2556 = vadd.f32 0.0, %v2555
      %v2557 = vpop.f32.mrf.mxu0
      %2558 = vmatprep.mubr.bf16.mxu0 0
      %2559 = vmatmul.mubr.bf16.gmra.mxu0 %v2451
      %v2560 = vpop.f32.mrf.mxu0
      %v2561 = vadd.f32 0.0, %v2560
      %v2562 = vpop.f32.mrf.mxu0
      %v2563 = vpop.f32.mrf.mxu0
      %v2564 = vadd.f32 0.0, %v2563
      %v2565 = vpop.f32.mrf.mxu0
      %2566 = vmatprep.mubr.bf16.mxu0 0
      %2567 = vmatmul.mubr.bf16.gmra.mxu0 %v2454
      %v2568 = vpop.f32.mrf.mxu0
      %v2569 = vadd.f32 0.0, %v2568
      %v2570 = vpop.f32.mrf.mxu0
      %v2571 = vpop.f32.mrf.mxu0
      %v2572 = vadd.f32 0.0, %v2571
      %v2573 = vpop.f32.mrf.mxu0
      %2574 = vmatprep.mubr.bf16.mxu0 0
      %2575 = vmatmul.mubr.bf16.gmra.mxu0 %v2457
      %v2576 = vpop.f32.mrf.mxu0
      %v2577 = vadd.f32 0.0, %v2576
      %v2578 = vpop.f32.mrf.mxu0
      %v2579 = vpop.f32.mrf.mxu0
      %v2580 = vadd.f32 0.0, %v2579
      %v2581 = vpop.f32.mrf.mxu0
      %2582 = vmatprep.mubr.bf16.mxu0 0
      %2583 = vmatmul.mubr.bf16.gmra.mxu0 %v2460
      %v2584 = vpop.f32.mrf.mxu0
      %v2585 = vadd.f32 0.0, %v2584
      %v2586 = vpop.f32.mrf.mxu0
      %v2587 = vpop.f32.mrf.mxu0
      %v2588 = vadd.f32 0.0, %v2587
      %v2589 = vpop.f32.mrf.mxu0
      %2590 = vmatprep.mubr.bf16.mxu0 0
      %2591 = vmatmul.mubr.bf16.gmra.mxu0 %v2463
      %v2592 = vpop.f32.mrf.mxu0
      %v2593 = vadd.f32 0.0, %v2592
      %v2594 = vpop.f32.mrf.mxu0
      %v2595 = vpop.f32.mrf.mxu0
      %v2596 = vadd.f32 0.0, %v2595
      %v2597 = vpop.f32.mrf.mxu0
      %2598 = vmatprep.mubr.bf16.mxu0 0
      %2599 = vmatmul.mubr.bf16.gmra.mxu0 %v2466
      %v2600 = vpop.f32.mrf.mxu0
      %v2601 = vadd.f32 0.0, %v2600
      %v2602 = vpop.f32.mrf.mxu0
      %v2603 = vpop.f32.mrf.mxu0
      %v2604 = vadd.f32 0.0, %v2603
      %v2605 = vpop.f32.mrf.mxu0
      %2606 = vmatprep.mubr.bf16.mxu0 0
      %2607 = vmatmul.mubr.bf16.gmra.mxu0 %v2469
      %v2608 = vpop.f32.mrf.mxu0
      %v2609 = vadd.f32 0.0, %v2608
      %v2610 = vpop.f32.mrf.mxu0
      %v2611 = vpop.f32.mrf.mxu0
      %v2612 = vadd.f32 0.0, %v2611
      %v2613 = vpop.f32.mrf.mxu0
      %2614 = vmatprep.mubr.bf16.mxu0 0
      %2615 = vmatmul.mubr.bf16.gmra.mxu0 %v2472
      %v2616 = vpop.f32.mrf.mxu0
      %v2617 = vadd.f32 0.0, %v2616
      %v2618 = vpop.f32.mrf.mxu0
      %v2619 = vpop.f32.mrf.mxu0
      %v2620 = vadd.f32 0.0, %v2619
      %v2621 = vpop.f32.mrf.mxu0
      %2622 = vmatprep.mubr.bf16.mxu0 0
      %2623 = vmatmul.mubr.bf16.gmra.mxu0 %v2475
      %v2624 = vpop.f32.mrf.mxu0
      %v2625 = vadd.f32 0.0, %v2624
      %v2626 = vpop.f32.mrf.mxu0
      %v2627 = vpop.f32.mrf.mxu0
      %v2628 = vadd.f32 0.0, %v2627
      %v2629 = vpop.f32.mrf.mxu0
      %2630 = vmatprep.mubr.bf16.mxu0 0
      %2631 = vmatmul.mubr.bf16.gmra.mxu0 %v2478
      %v2632 = vpop.f32.mrf.mxu0
      %v2633 = vadd.f32 0.0, %v2632
      %v2634 = vpop.f32.mrf.mxu0
      %v2635 = vpop.f32.mrf.mxu0
      %v2636 = vadd.f32 0.0, %v2635
      %v2637 = vpop.f32.mrf.mxu0
      %2638 = vmatprep.mubr.bf16.mxu0 0
      %2639 = vmatmul.mubr.bf16.gmra.mxu0 %v2481
      %v2640 = vpop.f32.mrf.mxu0
      %v2641 = vadd.f32 0.0, %v2640
      %v2642 = vpop.f32.mrf.mxu0
      %v2643 = vpop.f32.mrf.mxu0
      %v2644 = vadd.f32 0.0, %v2643
      %v2645 = vpop.f32.mrf.mxu0
      %2646 = vdwg.mxu0
      %v2647 = vadd.f32 %v1969, %v2521
      %v2648 = vadd.f32 %v1970, %v2524
      %v2649 = vadd.f32 %v1971, %v2529
      %v2650 = vadd.f32 %v1972, %v2532
      %v2651 = vadd.f32 %v1973, %v2537
      %v2652 = vadd.f32 %v1974, %v2540
      %v2653 = vadd.f32 %v1975, %v2545
      %v2654 = vadd.f32 %v1976, %v2548
      %v2655 = vadd.f32 %v1977, %v2553
      %v2656 = vadd.f32 %v1978, %v2556
      %v2657 = vadd.f32 %v1979, %v2561
      %v2658 = vadd.f32 %v1980, %v2564
      %v2659 = vadd.f32 %v1981, %v2569
      %v2660 = vadd.f32 %v1982, %v2572
      %v2661 = vadd.f32 %v1983, %v2577
      %v2662 = vadd.f32 %v1984, %v2580
      %v2663 = vadd.f32 %v1985, %v2585
      %v2664 = vadd.f32 %v1986, %v2588
      %v2665 = vadd.f32 %v1987, %v2593
      %v2666 = vadd.f32 %v1988, %v2596
      %v2667 = vadd.f32 %v1989, %v2601
      %v2668 = vadd.f32 %v1990, %v2604
      %v2669 = vadd.f32 %v1991, %v2609
      %v2670 = vadd.f32 %v1992, %v2612
      %v2671 = vadd.f32 %v1993, %v2617
      %v2672 = vadd.f32 %v1994, %v2620
      %v2673 = vadd.f32 %v1995, %v2625
      %v2674 = vadd.f32 %v1996, %v2628
      %v2675 = vadd.f32 %v1997, %v2633
      %v2676 = vadd.f32 %v1998, %v2636
      %v2677 = vadd.f32 %v1999, %v2641
      %v2678 = vadd.f32 %v2000, %v2644
      %v2695 = vrot.slane %v1627, 5
      %v2696 = vrot.slane %v2695, 4
      %v2697 = vrot.slane %v1628, 5
      %v2698 = vsel %vm1216, %v2696, %v2697
      %v2699 = vrot.slane %v2697, 4
      %v2700 = vrot.slane %v1629, 5
      %v2701 = vsel %vm1216, %v2699, %v2700
      %v2702 = vrot.slane %v1630, 5
      %v2703 = vrot.slane %v2702, 4
      %v2704 = vrot.slane %v1631, 5
      %v2705 = vsel %vm1216, %v2703, %v2704
      %v2706 = vrot.slane %v2704, 4
      %v2707 = vrot.slane %v1632, 5
      %v2708 = vsel %vm1216, %v2706, %v2707
      %v2709 = vrot.slane %v1633, 5
      %v2710 = vrot.slane %v2709, 4
      %v2711 = vrot.slane %v1634, 5
      %v2712 = vsel %vm1216, %v2710, %v2711
      %v2713 = vrot.slane %v2711, 4
      %v2714 = vrot.slane %v1635, 5
      %v2715 = vsel %vm1216, %v2713, %v2714
      %v2716 = vrot.slane %v1636, 5
      %v2717 = vrot.slane %v2716, 4
      %v2718 = vrot.slane %v1637, 5
      %v2719 = vsel %vm1216, %v2717, %v2718
      %v2720 = vrot.slane %v2718, 4
      %v2721 = vrot.slane %v1638, 5
      %v2722 = vsel %vm1216, %v2720, %v2721
      %v2723 = vrot.slane %v1639, 5
      %v2724 = vrot.slane %v2723, 4
      %v2725 = vrot.slane %v1640, 5
      %v2726 = vsel %vm1216, %v2724, %v2725
      %v2727 = vrot.slane %v2725, 4
      %v2728 = vrot.slane %v1641, 5
      %v2729 = vsel %vm1216, %v2727, %v2728
      %v2730 = vrot.slane %v1642, 5
      %v2731 = vrot.slane %v2730, 4
      %v2732 = vrot.slane %v1643, 5
      %v2733 = vsel %vm1216, %v2731, %v2732
      %v2734 = vrot.slane %v2732, 4
      %v2735 = vrot.slane %v1644, 5
      %v2736 = vsel %vm1216, %v2734, %v2735
      %v2737 = vrot.slane %v1645, 5
      %v2738 = vrot.slane %v2737, 4
      %v2739 = vrot.slane %v1646, 5
      %v2740 = vsel %vm1216, %v2738, %v2739
      %v2741 = vrot.slane %v2739, 4
      %v2742 = vrot.slane %v1647, 5
      %v2743 = vsel %vm1216, %v2741, %v2742
      %v2744 = vrot.slane %v1648, 5
      %v2745 = vrot.slane %v2744, 4
      %v2746 = vrot.slane %v1649, 5
      %v2747 = vsel %vm1216, %v2745, %v2746
      %v2748 = vrot.slane %v2746, 4
      %v2749 = vrot.slane %v1650, 5
      %v2750 = vsel %vm1216, %v2748, %v2749
      %v2751 = vrot.slane %v1651, 5
      %v2752 = vrot.slane %v2751, 4
      %v2753 = vrot.slane %v1652, 5
      %v2754 = vsel %vm1216, %v2752, %v2753
      %v2755 = vrot.slane %v2753, 4
      %v2756 = vrot.slane %v1653, 5
      %v2757 = vsel %vm1216, %v2755, %v2756
      %v2758 = vrot.slane %v1654, 5
      %v2759 = vrot.slane %v2758, 4
      %v2760 = vrot.slane %v1655, 5
      %v2761 = vsel %vm1216, %v2759, %v2760
      %v2762 = vrot.slane %v2760, 4
      %v2763 = vrot.slane %v1656, 5
      %v2764 = vsel %vm1216, %v2762, %v2763
      %v2765 = vrot.slane %v1657, 5
      %v2766 = vrot.slane %v2765, 4
      %v2767 = vrot.slane %v1658, 5
      %v2768 = vsel %vm1216, %v2766, %v2767
      %v2769 = vrot.slane %v2767, 4
      %v2770 = vrot.slane %v1659, 5
      %v2771 = vsel %vm1216, %v2769, %v2770
      %v2772 = vrot.slane %v1660, 5
      %v2773 = vrot.slane %v2772, 4
      %v2774 = vrot.slane %v1661, 5
      %v2775 = vsel %vm1216, %v2773, %v2774
      %v2776 = vrot.slane %v2774, 4
      %v2777 = vrot.slane %v1662, 5
      %v2778 = vsel %vm1216, %v2776, %v2777
      %v2779 = vrot.slane %v1663, 5
      %v2780 = vrot.slane %v2779, 4
      %v2781 = vrot.slane %v1664, 5
      %v2782 = vsel %vm1216, %v2780, %v2781
      %v2783 = vrot.slane %v2781, 4
      %v2784 = vrot.slane %v1665, 5
      %v2785 = vsel %vm1216, %v2783, %v2784
      %v2786 = vrot.slane %v1666, 5
      %v2787 = vrot.slane %v2786, 4
      %v2788 = vrot.slane %v1667, 5
      %v2789 = vsel %vm1216, %v2787, %v2788
      %v2790 = vrot.slane %v2788, 4
      %v2791 = vrot.slane %v1668, 5
      %v2792 = vsel %vm1216, %v2790, %v2791
      %v2793 = vrot.slane %v1669, 5
      %v2794 = vrot.slane %v2793, 4
      %v2795 = vrot.slane %v1670, 5
      %v2796 = vsel %vm1216, %v2794, %v2795
      %v2797 = vrot.slane %v2795, 4
      %v2798 = vrot.slane %v1671, 5
      %v2799 = vsel %vm1216, %v2797, %v2798
      %v2800 = vrot.slane %v1672, 5
      %v2801 = vrot.slane %v2800, 4
      %v2802 = vrot.slane %v1673, 5
      %v2803 = vsel %vm1216, %v2801, %v2802
      %v2804 = vrot.slane %v2802, 4
      %v2805 = vrot.slane %v1674, 5
      %v2806 = vsel %vm1216, %v2804, %v2805
      %s2807 = scalar_lea.vmem %s1, 10
      %v2808 = vld [vmem:[%s2807] sm:$0x3]
      %v2809 = vunpack.c.l.b16 %v2698
      %v2810 = vunpack.c.l.b16 %v2701
      %v2811 = vunpack.c.l.b16 %v2705
      %v2812 = vunpack.c.l.b16 %v2708
      %v2813 = vunpack.c.l.b16 %v2712
      %v2814 = vunpack.c.l.b16 %v2715
      %v2815 = vunpack.c.l.b16 %v2719
      %v2816 = vunpack.c.l.b16 %v2722
      %v2817 = vunpack.c.l.b16 %v2726
      %v2818 = vunpack.c.l.b16 %v2729
      %v2819 = vunpack.c.l.b16 %v2733
      %v2820 = vunpack.c.l.b16 %v2736
      %v2821 = vunpack.c.l.b16 %v2740
      %v2822 = vunpack.c.l.b16 %v2743
      %v2823 = vunpack.c.l.b16 %v2747
      %v2824 = vunpack.c.l.b16 %v2750
      %v2825 = vunpack.c.l.b16 %v2754
      %v2826 = vunpack.c.l.b16 %v2757
      %v2827 = vunpack.c.l.b16 %v2761
      %v2828 = vunpack.c.l.b16 %v2764
      %v2829 = vunpack.c.l.b16 %v2768
      %v2830 = vunpack.c.l.b16 %v2771
      %v2831 = vunpack.c.l.b16 %v2775
      %v2832 = vunpack.c.l.b16 %v2778
      %v2833 = vunpack.c.l.b16 %v2782
      %v2834 = vunpack.c.l.b16 %v2785
      %v2835 = vunpack.c.l.b16 %v2789
      %v2836 = vunpack.c.l.b16 %v2792
      %v2837 = vunpack.c.l.b16 %v2796
      %v2838 = vunpack.c.l.b16 %v2799
      %v2839 = vunpack.c.l.b16 %v2803
      %v2840 = vunpack.c.l.b16 %v2806
      %v2841 = vpack.c.b16 %v2810, %v2809
      %v2842 = vpack.c.b16 %v2812, %v2811
      %v2843 = vpack.c.b16 %v2814, %v2813
      %v2844 = vpack.c.b16 %v2816, %v2815
      %v2845 = vpack.c.b16 %v2818, %v2817
      %v2846 = vpack.c.b16 %v2820, %v2819
      %v2847 = vpack.c.b16 %v2822, %v2821
      %v2848 = vpack.c.b16 %v2824, %v2823
      %v2849 = vpack.c.b16 %v2826, %v2825
      %v2850 = vpack.c.b16 %v2828, %v2827
      %v2851 = vpack.c.b16 %v2830, %v2829
      %v2852 = vpack.c.b16 %v2832, %v2831
      %v2853 = vpack.c.b16 %v2834, %v2833
      %v2854 = vpack.c.b16 %v2836, %v2835
      %v2855 = vpack.c.b16 %v2838, %v2837
      %v2856 = vpack.c.b16 %v2840, %v2839
      %v2858 = vsel %vm692, %v2841, 0
      %v2861 = vsel %vm692, %v2842, 0
      %v2864 = vsel %vm692, %v2843, 0
      %v2867 = vsel %vm692, %v2844, 0
      %v2870 = vsel %vm692, %v2845, 0
      %v2873 = vsel %vm692, %v2846, 0
      %v2876 = vsel %vm692, %v2847, 0
      %v2879 = vsel %vm692, %v2848, 0
      %v2882 = vsel %vm692, %v2849, 0
      %v2885 = vsel %vm692, %v2850, 0
      %v2888 = vsel %vm692, %v2851, 0
      %v2891 = vsel %vm692, %v2852, 0
      %v2894 = vsel %vm692, %v2853, 0
      %v2897 = vsel %vm692, %v2854, 0
      %v2900 = vsel %vm692, %v2855, 0
      %v2903 = vsel %vm692, %v2856, 0
      %v2906 = vsel %vm741, %v2808, 0
      %2908 = vmatprep.subr.bf16.mxu0 0
      %2909 = vmatpush1.bf16.msra.mxu0 0
      %2910 = vmatprep.subr.bf16.mxu0 0
      %2911 = vmatpush1.bf16.msra.mxu0 0
      %2912 = vmatprep.subr.bf16.mxu0 0
      %2913 = vmatpush1.bf16.msra.mxu0 0
      %2914 = vmatprep.subr.bf16.mxu0 0
      %2915 = vmatpush1.bf16.msra.mxu0 0
      %2916 = vmatprep.subr.bf16.mxu0 0
      %2917 = vmatpush1.bf16.msra.mxu0 0
      %2918 = vmatprep.subr.bf16.mxu0 0
      %2919 = vmatpush1.bf16.msra.mxu0 0
      %2920 = vmatprep.subr.bf16.mxu0 0
      %2921 = vmatpush1.bf16.msra.mxu0 0
      %2922 = vmatprep.subr.bf16.mxu0 0
      %2923 = vmatpush1.bf16.msra.mxu0 %v2906
      %2924 = vmatprep.subr.bf16.mxu0 0
      %2925 = vmatpush2.bf16.msra.mxu0 0
      %2926 = vmatprep.subr.bf16.mxu0 0
      %2927 = vmatpush2.bf16.msra.mxu0 0
      %2928 = vmatprep.subr.bf16.mxu0 0
      %2929 = vmatpush2.bf16.msra.mxu0 0
      %2930 = vmatprep.subr.bf16.mxu0 0
      %2931 = vmatpush2.bf16.msra.mxu0 0
      %2932 = vmatprep.subr.bf16.mxu0 0
      %2933 = vmatpush2.bf16.msra.mxu0 0
      %2934 = vmatprep.subr.bf16.mxu0 0
      %2935 = vmatpush2.bf16.msra.mxu0 0
      %2936 = vmatprep.subr.bf16.mxu0 0
      %2937 = vmatpush2.bf16.msra.mxu0 0
      %2938 = vmatprep.subr.bf16.mxu0 0
      %2939 = vmatpush2.bf16.msra.mxu0 0
      %2940 = vmatprep.mubr.bf16.mxu0 0
      %2941 = vmatmul.mubr.bf16.gmra.mxu0 %v2858
      %v2942 = vpop.f32.mrf.mxu0
      %v2943 = vadd.f32 0.0, %v2942
      %v2944 = vpop.f32.mrf.mxu0
      %v2945 = vpop.f32.mrf.mxu0
      %v2946 = vadd.f32 0.0, %v2945
      %v2947 = vpop.f32.mrf.mxu0
      %2948 = vmatprep.mubr.bf16.mxu0 0
      %2949 = vmatmul.mubr.bf16.gmra.mxu0 %v2861
      %v2950 = vpop.f32.mrf.mxu0
      %v2951 = vadd.f32 0.0, %v2950
      %v2952 = vpop.f32.mrf.mxu0
      %v2953 = vpop.f32.mrf.mxu0
      %v2954 = vadd.f32 0.0, %v2953
      %v2955 = vpop.f32.mrf.mxu0
      %2956 = vmatprep.mubr.bf16.mxu0 0
      %2957 = vmatmul.mubr.bf16.gmra.mxu0 %v2864
      %v2958 = vpop.f32.mrf.mxu0
      %v2959 = vadd.f32 0.0, %v2958
      %v2960 = vpop.f32.mrf.mxu0
      %v2961 = vpop.f32.mrf.mxu0
      %v2962 = vadd.f32 0.0, %v2961
      %v2963 = vpop.f32.mrf.mxu0
      %2964 = vmatprep.mubr.bf16.mxu0 0
      %2965 = vmatmul.mubr.bf16.gmra.mxu0 %v2867
      %v2966 = vpop.f32.mrf.mxu0
      %v2967 = vadd.f32 0.0, %v2966
      %v2968 = vpop.f32.mrf.mxu0
      %v2969 = vpop.f32.mrf.mxu0
      %v2970 = vadd.f32 0.0, %v2969
      %v2971 = vpop.f32.mrf.mxu0
      %2972 = vmatprep.mubr.bf16.mxu0 0
      %2973 = vmatmul.mubr.bf16.gmra.mxu0 %v2870
      %v2974 = vpop.f32.mrf.mxu0
      %v2975 = vadd.f32 0.0, %v2974
      %v2976 = vpop.f32.mrf.mxu0
      %v2977 = vpop.f32.mrf.mxu0
      %v2978 = vadd.f32 0.0, %v2977
      %v2979 = vpop.f32.mrf.mxu0
      %2980 = vmatprep.mubr.bf16.mxu0 0
      %2981 = vmatmul.mubr.bf16.gmra.mxu0 %v2873
      %v2982 = vpop.f32.mrf.mxu0
      %v2983 = vadd.f32 0.0, %v2982
      %v2984 = vpop.f32.mrf.mxu0
      %v2985 = vpop.f32.mrf.mxu0
      %v2986 = vadd.f32 0.0, %v2985
      %v2987 = vpop.f32.mrf.mxu0
      %2988 = vmatprep.mubr.bf16.mxu0 0
      %2989 = vmatmul.mubr.bf16.gmra.mxu0 %v2876
      %v2990 = vpop.f32.mrf.mxu0
      %v2991 = vadd.f32 0.0, %v2990
      %v2992 = vpop.f32.mrf.mxu0
      %v2993 = vpop.f32.mrf.mxu0
      %v2994 = vadd.f32 0.0, %v2993
      %v2995 = vpop.f32.mrf.mxu0
      %2996 = vmatprep.mubr.bf16.mxu0 0
      %2997 = vmatmul.mubr.bf16.gmra.mxu0 %v2879
      %v2998 = vpop.f32.mrf.mxu0
      %v2999 = vadd.f32 0.0, %v2998
      %v3000 = vpop.f32.mrf.mxu0
      %v3001 = vpop.f32.mrf.mxu0
      %v3002 = vadd.f32 0.0, %v3001
      %v3003 = vpop.f32.mrf.mxu0
      %3004 = vmatprep.mubr.bf16.mxu0 0
      %3005 = vmatmul.mubr.bf16.gmra.mxu0 %v2882
      %v3006 = vpop.f32.mrf.mxu0
      %v3007 = vadd.f32 0.0, %v3006
      %v3008 = vpop.f32.mrf.mxu0
      %v3009 = vpop.f32.mrf.mxu0
      %v3010 = vadd.f32 0.0, %v3009
      %v3011 = vpop.f32.mrf.mxu0
      %3012 = vmatprep.mubr.bf16.mxu0 0
      %3013 = vmatmul.mubr.bf16.gmra.mxu0 %v2885
      %v3014 = vpop.f32.mrf.mxu0
      %v3015 = vadd.f32 0.0, %v3014
      %v3016 = vpop.f32.mrf.mxu0
      %v3017 = vpop.f32.mrf.mxu0
      %v3018 = vadd.f32 0.0, %v3017
      %v3019 = vpop.f32.mrf.mxu0
      %3020 = vmatprep.mubr.bf16.mxu0 0
      %3021 = vmatmul.mubr.bf16.gmra.mxu0 %v2888
      %v3022 = vpop.f32.mrf.mxu0
      %v3023 = vadd.f32 0.0, %v3022
      %v3024 = vpop.f32.mrf.mxu0
      %v3025 = vpop.f32.mrf.mxu0
      %v3026 = vadd.f32 0.0, %v3025
      %v3027 = vpop.f32.mrf.mxu0
      %3028 = vmatprep.mubr.bf16.mxu0 0
      %3029 = vmatmul.mubr.bf16.gmra.mxu0 %v2891
      %v3030 = vpop.f32.mrf.mxu0
      %v3031 = vadd.f32 0.0, %v3030
      %v3032 = vpop.f32.mrf.mxu0
      %v3033 = vpop.f32.mrf.mxu0
      %v3034 = vadd.f32 0.0, %v3033
      %v3035 = vpop.f32.mrf.mxu0
      %3036 = vmatprep.mubr.bf16.mxu0 0
      %3037 = vmatmul.mubr.bf16.gmra.mxu0 %v2894
      %v3038 = vpop.f32.mrf.mxu0
      %v3039 = vadd.f32 0.0, %v3038
      %v3040 = vpop.f32.mrf.mxu0
      %v3041 = vpop.f32.mrf.mxu0
      %v3042 = vadd.f32 0.0, %v3041
      %v3043 = vpop.f32.mrf.mxu0
      %3044 = vmatprep.mubr.bf16.mxu0 0
      %3045 = vmatmul.mubr.bf16.gmra.mxu0 %v2897
      %v3046 = vpop.f32.mrf.mxu0
      %v3047 = vadd.f32 0.0, %v3046
      %v3048 = vpop.f32.mrf.mxu0
      %v3049 = vpop.f32.mrf.mxu0
      %v3050 = vadd.f32 0.0, %v3049
      %v3051 = vpop.f32.mrf.mxu0
      %3052 = vmatprep.mubr.bf16.mxu0 0
      %3053 = vmatmul.mubr.bf16.gmra.mxu0 %v2900
      %v3054 = vpop.f32.mrf.mxu0
      %v3055 = vadd.f32 0.0, %v3054
      %v3056 = vpop.f32.mrf.mxu0
      %v3057 = vpop.f32.mrf.mxu0
      %v3058 = vadd.f32 0.0, %v3057
      %v3059 = vpop.f32.mrf.mxu0
      %3060 = vmatprep.mubr.bf16.mxu0 0
      %3061 = vmatmul.mubr.bf16.gmra.mxu0 %v2903
      %v3062 = vpop.f32.mrf.mxu0
      %v3063 = vadd.f32 0.0, %v3062
      %v3064 = vpop.f32.mrf.mxu0
      %v3065 = vpop.f32.mrf.mxu0
      %v3066 = vadd.f32 0.0, %v3065
      %v3067 = vpop.f32.mrf.mxu0
      %3068 = vdwg.mxu0
      %v3069 = vadd.f32 %v2647, %v2943
      %v3070 = vadd.f32 %v2648, %v2946
      %v3071 = vadd.f32 %v2649, %v2951
      %v3072 = vadd.f32 %v2650, %v2954
      %v3073 = vadd.f32 %v2651, %v2959
      %v3074 = vadd.f32 %v2652, %v2962
      %v3075 = vadd.f32 %v2653, %v2967
      %v3076 = vadd.f32 %v2654, %v2970
      %v3077 = vadd.f32 %v2655, %v2975
      %v3078 = vadd.f32 %v2656, %v2978
      %v3079 = vadd.f32 %v2657, %v2983
      %v3080 = vadd.f32 %v2658, %v2986
      %v3081 = vadd.f32 %v2659, %v2991
      %v3082 = vadd.f32 %v2660, %v2994
      %v3083 = vadd.f32 %v2661, %v2999
      %v3084 = vadd.f32 %v2662, %v3002
      %v3085 = vadd.f32 %v2663, %v3007
      %v3086 = vadd.f32 %v2664, %v3010
      %v3087 = vadd.f32 %v2665, %v3015
      %v3088 = vadd.f32 %v2666, %v3018
      %v3089 = vadd.f32 %v2667, %v3023
      %v3090 = vadd.f32 %v2668, %v3026
      %v3091 = vadd.f32 %v2669, %v3031
      %v3092 = vadd.f32 %v2670, %v3034
      %v3093 = vadd.f32 %v2671, %v3039
      %v3094 = vadd.f32 %v2672, %v3042
      %v3095 = vadd.f32 %v2673, %v3047
      %v3096 = vadd.f32 %v2674, %v3050
      %v3097 = vadd.f32 %v2675, %v3055
      %v3098 = vadd.f32 %v2676, %v3058
      %v3099 = vadd.f32 %v2677, %v3063
      %v3100 = vadd.f32 %v2678, %v3066
      %s3101 = sadd.s32 %s202, 2
      %s3102 = smul.u32 %s3101, 3
      %s3103 = smul.addr %s3102, 4
      %s3104 = scalar_lea.vmem %s182, %s3103
      %v3105 = vld [vmem:[%s3104] sm:$0xf]
      %v3106 = vld [vmem:[%s3104 + $0x4] sm:$0xf]
      %v3107 = vld [vmem:[%s3104 + $0x8] sm:$0x1]
      %v3108 = vld [vmem:[%s3104 + $0xc] sm:$0xf]
      %v3109 = vld [vmem:[%s3104 + $0x10] sm:$0xf]
      %v3110 = vld [vmem:[%s3104 + $0x14] sm:$0x1]
      %v3111 = vld [vmem:[%s3104 + $0x18] sm:$0xf]
      %v3112 = vld [vmem:[%s3104 + $0x1c] sm:$0xf]
      %v3113 = vld [vmem:[%s3104 + $0x20] sm:$0x1]
      %v3114 = vld [vmem:[%s3104 + $0x24] sm:$0xf]
      %v3115 = vld [vmem:[%s3104 + $0x28] sm:$0xf]
      %v3116 = vld [vmem:[%s3104 + $0x2c] sm:$0x1]
      %v3117 = vld [vmem:[%s3104 + $0x30] sm:$0xf]
      %v3118 = vld [vmem:[%s3104 + $0x34] sm:$0xf]
      %v3119 = vld [vmem:[%s3104 + $0x38] sm:$0x1]
      %v3120 = vld [vmem:[%s3104 + $0x3c] sm:$0xf]
      %v3121 = vld [vmem:[%s3104 + $0x40] sm:$0xf]
      %v3122 = vld [vmem:[%s3104 + $0x44] sm:$0x1]
      %v3123 = vld [vmem:[%s3104 + $0x48] sm:$0xf]
      %v3124 = vld [vmem:[%s3104 + $0x4c] sm:$0xf]
      %v3125 = vld [vmem:[%s3104 + $0x50] sm:$0x1]
      %v3126 = vld [vmem:[%s3104 + $0x54] sm:$0xf]
      %v3127 = vld [vmem:[%s3104 + $0x58] sm:$0xf]
      %v3128 = vld [vmem:[%s3104 + $0x5c] sm:$0x1]
      %v3129 = vld [vmem:[%s3104 + $0x60] sm:$0xf]
      %v3130 = vld [vmem:[%s3104 + $0x64] sm:$0xf]
      %v3131 = vld [vmem:[%s3104 + $0x68] sm:$0x1]
      %v3132 = vld [vmem:[%s3104 + $0x6c] sm:$0xf]
      %v3133 = vld [vmem:[%s3104 + $0x70] sm:$0xf]
      %v3134 = vld [vmem:[%s3104 + $0x74] sm:$0x1]
      %v3135 = vld [vmem:[%s3104 + $0x78] sm:$0xf]
      %v3136 = vld [vmem:[%s3104 + $0x7c] sm:$0xf]
      %v3137 = vld [vmem:[%s3104 + $0x80] sm:$0x1]
      %v3138 = vld [vmem:[%s3104 + $0x84] sm:$0xf]
      %v3139 = vld [vmem:[%s3104 + $0x88] sm:$0xf]
      %v3140 = vld [vmem:[%s3104 + $0x8c] sm:$0x1]
      %v3141 = vld [vmem:[%s3104 + $0x90] sm:$0xf]
      %v3142 = vld [vmem:[%s3104 + $0x94] sm:$0xf]
      %v3143 = vld [vmem:[%s3104 + $0x98] sm:$0x1]
      %v3144 = vld [vmem:[%s3104 + $0x9c] sm:$0xf]
      %v3145 = vld [vmem:[%s3104 + $0xa0] sm:$0xf]
      %v3146 = vld [vmem:[%s3104 + $0xa4] sm:$0x1]
      %v3147 = vld [vmem:[%s3104 + $0xa8] sm:$0xf]
      %v3148 = vld [vmem:[%s3104 + $0xac] sm:$0xf]
      %v3149 = vld [vmem:[%s3104 + $0xb0] sm:$0x1]
      %v3150 = vld [vmem:[%s3104 + $0xb4] sm:$0xf]
      %v3151 = vld [vmem:[%s3104 + $0xb8] sm:$0xf]
      %v3152 = vld [vmem:[%s3104 + $0xbc] sm:$0x1]
      %s3153 = scalar_lea.vmem %s1, 12
      %v3154 = vld [vmem:[%s3153] sm:$0x3]
      %v3187 = vunpack.c.l.b16 %v3105
      %v3188 = vunpack.c.l.b16 %v3106
      %v3189 = vunpack.c.l.b16 %v3108
      %v3190 = vunpack.c.l.b16 %v3109
      %v3191 = vunpack.c.l.b16 %v3111
      %v3192 = vunpack.c.l.b16 %v3112
      %v3193 = vunpack.c.l.b16 %v3114
      %v3194 = vunpack.c.l.b16 %v3115
      %v3195 = vunpack.c.l.b16 %v3117
      %v3196 = vunpack.c.l.b16 %v3118
      %v3197 = vunpack.c.l.b16 %v3120
      %v3198 = vunpack.c.l.b16 %v3121
      %v3199 = vunpack.c.l.b16 %v3123
      %v3200 = vunpack.c.l.b16 %v3124
      %v3201 = vunpack.c.l.b16 %v3126
      %v3202 = vunpack.c.l.b16 %v3127
      %v3203 = vunpack.c.l.b16 %v3129
      %v3204 = vunpack.c.l.b16 %v3130
      %v3205 = vunpack.c.l.b16 %v3132
      %v3206 = vunpack.c.l.b16 %v3133
      %v3207 = vunpack.c.l.b16 %v3135
      %v3208 = vunpack.c.l.b16 %v3136
      %v3209 = vunpack.c.l.b16 %v3138
      %v3210 = vunpack.c.l.b16 %v3139
      %v3211 = vunpack.c.l.b16 %v3141
      %v3212 = vunpack.c.l.b16 %v3142
      %v3213 = vunpack.c.l.b16 %v3144
      %v3214 = vunpack.c.l.b16 %v3145
      %v3215 = vunpack.c.l.b16 %v3147
      %v3216 = vunpack.c.l.b16 %v3148
      %v3217 = vunpack.c.l.b16 %v3150
      %v3218 = vunpack.c.l.b16 %v3151
      %v3219 = vpack.c.b16 %v3188, %v3187
      %v3220 = vpack.c.b16 %v3190, %v3189
      %v3221 = vpack.c.b16 %v3192, %v3191
      %v3222 = vpack.c.b16 %v3194, %v3193
      %v3223 = vpack.c.b16 %v3196, %v3195
      %v3224 = vpack.c.b16 %v3198, %v3197
      %v3225 = vpack.c.b16 %v3200, %v3199
      %v3226 = vpack.c.b16 %v3202, %v3201
      %v3227 = vpack.c.b16 %v3204, %v3203
      %v3228 = vpack.c.b16 %v3206, %v3205
      %v3229 = vpack.c.b16 %v3208, %v3207
      %v3230 = vpack.c.b16 %v3210, %v3209
      %v3231 = vpack.c.b16 %v3212, %v3211
      %v3232 = vpack.c.b16 %v3214, %v3213
      %v3233 = vpack.c.b16 %v3216, %v3215
      %v3234 = vpack.c.b16 %v3218, %v3217
      %v3236 = vsel %vm692, %v3219, 0
      %v3239 = vsel %vm692, %v3220, 0
      %v3242 = vsel %vm692, %v3221, 0
      %v3245 = vsel %vm692, %v3222, 0
      %v3248 = vsel %vm692, %v3223, 0
      %v3251 = vsel %vm692, %v3224, 0
      %v3254 = vsel %vm692, %v3225, 0
      %v3257 = vsel %vm692, %v3226, 0
      %v3260 = vsel %vm692, %v3227, 0
      %v3263 = vsel %vm692, %v3228, 0
      %v3266 = vsel %vm692, %v3229, 0
      %v3269 = vsel %vm692, %v3230, 0
      %v3272 = vsel %vm692, %v3231, 0
      %v3275 = vsel %vm692, %v3232, 0
      %v3278 = vsel %vm692, %v3233, 0
      %v3281 = vsel %vm692, %v3234, 0
      %v3284 = vsel %vm741, %v3154, 0
      %3286 = vmatprep.subr.bf16.mxu0 0
      %3287 = vmatpush1.bf16.msra.mxu0 0
      %3288 = vmatprep.subr.bf16.mxu0 0
      %3289 = vmatpush1.bf16.msra.mxu0 0
      %3290 = vmatprep.subr.bf16.mxu0 0
      %3291 = vmatpush1.bf16.msra.mxu0 0
      %3292 = vmatprep.subr.bf16.mxu0 0
      %3293 = vmatpush1.bf16.msra.mxu0 0
      %3294 = vmatprep.subr.bf16.mxu0 0
      %3295 = vmatpush1.bf16.msra.mxu0 0
      %3296 = vmatprep.subr.bf16.mxu0 0
      %3297 = vmatpush1.bf16.msra.mxu0 0
      %3298 = vmatprep.subr.bf16.mxu0 0
      %3299 = vmatpush1.bf16.msra.mxu0 0
      %3300 = vmatprep.subr.bf16.mxu0 0
      %3301 = vmatpush1.bf16.msra.mxu0 %v3284
      %3302 = vmatprep.subr.bf16.mxu0 0
      %3303 = vmatpush2.bf16.msra.mxu0 0
      %3304 = vmatprep.subr.bf16.mxu0 0
      %3305 = vmatpush2.bf16.msra.mxu0 0
      %3306 = vmatprep.subr.bf16.mxu0 0
      %3307 = vmatpush2.bf16.msra.mxu0 0
      %3308 = vmatprep.subr.bf16.mxu0 0
      %3309 = vmatpush2.bf16.msra.mxu0 0
      %3310 = vmatprep.subr.bf16.mxu0 0
      %3311 = vmatpush2.bf16.msra.mxu0 0
      %3312 = vmatprep.subr.bf16.mxu0 0
      %3313 = vmatpush2.bf16.msra.mxu0 0
      %3314 = vmatprep.subr.bf16.mxu0 0
      %3315 = vmatpush2.bf16.msra.mxu0 0
      %3316 = vmatprep.subr.bf16.mxu0 0
      %3317 = vmatpush2.bf16.msra.mxu0 0
      %3318 = vmatprep.mubr.bf16.mxu0 0
      %3319 = vmatmul.mubr.bf16.gmra.mxu0 %v3236
      %v3320 = vpop.f32.mrf.mxu0
      %v3321 = vadd.f32 0.0, %v3320
      %v3322 = vpop.f32.mrf.mxu0
      %v3323 = vpop.f32.mrf.mxu0
      %v3324 = vadd.f32 0.0, %v3323
      %v3325 = vpop.f32.mrf.mxu0
      %3326 = vmatprep.mubr.bf16.mxu0 0
      %3327 = vmatmul.mubr.bf16.gmra.mxu0 %v3239
      %v3328 = vpop.f32.mrf.mxu0
      %v3329 = vadd.f32 0.0, %v3328
      %v3330 = vpop.f32.mrf.mxu0
      %v3331 = vpop.f32.mrf.mxu0
      %v3332 = vadd.f32 0.0, %v3331
      %v3333 = vpop.f32.mrf.mxu0
      %3334 = vmatprep.mubr.bf16.mxu0 0
      %3335 = vmatmul.mubr.bf16.gmra.mxu0 %v3242
      %v3336 = vpop.f32.mrf.mxu0
      %v3337 = vadd.f32 0.0, %v3336
      %v3338 = vpop.f32.mrf.mxu0
      %v3339 = vpop.f32.mrf.mxu0
      %v3340 = vadd.f32 0.0, %v3339
      %v3341 = vpop.f32.mrf.mxu0
      %3342 = vmatprep.mubr.bf16.mxu0 0
      %3343 = vmatmul.mubr.bf16.gmra.mxu0 %v3245
      %v3344 = vpop.f32.mrf.mxu0
      %v3345 = vadd.f32 0.0, %v3344
      %v3346 = vpop.f32.mrf.mxu0
      %v3347 = vpop.f32.mrf.mxu0
      %v3348 = vadd.f32 0.0, %v3347
      %v3349 = vpop.f32.mrf.mxu0
      %3350 = vmatprep.mubr.bf16.mxu0 0
      %3351 = vmatmul.mubr.bf16.gmra.mxu0 %v3248
      %v3352 = vpop.f32.mrf.mxu0
      %v3353 = vadd.f32 0.0, %v3352
      %v3354 = vpop.f32.mrf.mxu0
      %v3355 = vpop.f32.mrf.mxu0
      %v3356 = vadd.f32 0.0, %v3355
      %v3357 = vpop.f32.mrf.mxu0
      %3358 = vmatprep.mubr.bf16.mxu0 0
      %3359 = vmatmul.mubr.bf16.gmra.mxu0 %v3251
      %v3360 = vpop.f32.mrf.mxu0
      %v3361 = vadd.f32 0.0, %v3360
      %v3362 = vpop.f32.mrf.mxu0
      %v3363 = vpop.f32.mrf.mxu0
      %v3364 = vadd.f32 0.0, %v3363
      %v3365 = vpop.f32.mrf.mxu0
      %3366 = vmatprep.mubr.bf16.mxu0 0
      %3367 = vmatmul.mubr.bf16.gmra.mxu0 %v3254
      %v3368 = vpop.f32.mrf.mxu0
      %v3369 = vadd.f32 0.0, %v3368
      %v3370 = vpop.f32.mrf.mxu0
      %v3371 = vpop.f32.mrf.mxu0
      %v3372 = vadd.f32 0.0, %v3371
      %v3373 = vpop.f32.mrf.mxu0
      %3374 = vmatprep.mubr.bf16.mxu0 0
      %3375 = vmatmul.mubr.bf16.gmra.mxu0 %v3257
      %v3376 = vpop.f32.mrf.mxu0
      %v3377 = vadd.f32 0.0, %v3376
      %v3378 = vpop.f32.mrf.mxu0
      %v3379 = vpop.f32.mrf.mxu0
      %v3380 = vadd.f32 0.0, %v3379
      %v3381 = vpop.f32.mrf.mxu0
      %3382 = vmatprep.mubr.bf16.mxu0 0
      %3383 = vmatmul.mubr.bf16.gmra.mxu0 %v3260
      %v3384 = vpop.f32.mrf.mxu0
      %v3385 = vadd.f32 0.0, %v3384
      %v3386 = vpop.f32.mrf.mxu0
      %v3387 = vpop.f32.mrf.mxu0
      %v3388 = vadd.f32 0.0, %v3387
      %v3389 = vpop.f32.mrf.mxu0
      %3390 = vmatprep.mubr.bf16.mxu0 0
      %3391 = vmatmul.mubr.bf16.gmra.mxu0 %v3263
      %v3392 = vpop.f32.mrf.mxu0
      %v3393 = vadd.f32 0.0, %v3392
      %v3394 = vpop.f32.mrf.mxu0
      %v3395 = vpop.f32.mrf.mxu0
      %v3396 = vadd.f32 0.0, %v3395
      %v3397 = vpop.f32.mrf.mxu0
      %3398 = vmatprep.mubr.bf16.mxu0 0
      %3399 = vmatmul.mubr.bf16.gmra.mxu0 %v3266
      %v3400 = vpop.f32.mrf.mxu0
      %v3401 = vadd.f32 0.0, %v3400
      %v3402 = vpop.f32.mrf.mxu0
      %v3403 = vpop.f32.mrf.mxu0
      %v3404 = vadd.f32 0.0, %v3403
      %v3405 = vpop.f32.mrf.mxu0
      %3406 = vmatprep.mubr.bf16.mxu0 0
      %3407 = vmatmul.mubr.bf16.gmra.mxu0 %v3269
      %v3408 = vpop.f32.mrf.mxu0
      %v3409 = vadd.f32 0.0, %v3408
      %v3410 = vpop.f32.mrf.mxu0
      %v3411 = vpop.f32.mrf.mxu0
      %v3412 = vadd.f32 0.0, %v3411
      %v3413 = vpop.f32.mrf.mxu0
      %3414 = vmatprep.mubr.bf16.mxu0 0
      %3415 = vmatmul.mubr.bf16.gmra.mxu0 %v3272
      %v3416 = vpop.f32.mrf.mxu0
      %v3417 = vadd.f32 0.0, %v3416
      %v3418 = vpop.f32.mrf.mxu0
      %v3419 = vpop.f32.mrf.mxu0
      %v3420 = vadd.f32 0.0, %v3419
      %v3421 = vpop.f32.mrf.mxu0
      %3422 = vmatprep.mubr.bf16.mxu0 0
      %3423 = vmatmul.mubr.bf16.gmra.mxu0 %v3275
      %v3424 = vpop.f32.mrf.mxu0
      %v3425 = vadd.f32 0.0, %v3424
      %v3426 = vpop.f32.mrf.mxu0
      %v3427 = vpop.f32.mrf.mxu0
      %v3428 = vadd.f32 0.0, %v3427
      %v3429 = vpop.f32.mrf.mxu0
      %3430 = vmatprep.mubr.bf16.mxu0 0
      %3431 = vmatmul.mubr.bf16.gmra.mxu0 %v3278
      %v3432 = vpop.f32.mrf.mxu0
      %v3433 = vadd.f32 0.0, %v3432
      %v3434 = vpop.f32.mrf.mxu0
      %v3435 = vpop.f32.mrf.mxu0
      %v3436 = vadd.f32 0.0, %v3435
      %v3437 = vpop.f32.mrf.mxu0
      %3438 = vmatprep.mubr.bf16.mxu0 0
      %3439 = vmatmul.mubr.bf16.gmra.mxu0 %v3281
      %v3440 = vpop.f32.mrf.mxu0
      %v3441 = vadd.f32 0.0, %v3440
      %v3442 = vpop.f32.mrf.mxu0
      %v3443 = vpop.f32.mrf.mxu0
      %v3444 = vadd.f32 0.0, %v3443
      %v3445 = vpop.f32.mrf.mxu0
      %3446 = vdwg.mxu0
      %v3447 = vadd.f32 %v3069, %v3321
      %v3448 = vadd.f32 %v3070, %v3324
      %v3449 = vadd.f32 %v3071, %v3329
      %v3450 = vadd.f32 %v3072, %v3332
      %v3451 = vadd.f32 %v3073, %v3337
      %v3452 = vadd.f32 %v3074, %v3340
      %v3453 = vadd.f32 %v3075, %v3345
      %v3454 = vadd.f32 %v3076, %v3348
      %v3455 = vadd.f32 %v3077, %v3353
      %v3456 = vadd.f32 %v3078, %v3356
      %v3457 = vadd.f32 %v3079, %v3361
      %v3458 = vadd.f32 %v3080, %v3364
      %v3459 = vadd.f32 %v3081, %v3369
      %v3460 = vadd.f32 %v3082, %v3372
      %v3461 = vadd.f32 %v3083, %v3377
      %v3462 = vadd.f32 %v3084, %v3380
      %v3463 = vadd.f32 %v3085, %v3385
      %v3464 = vadd.f32 %v3086, %v3388
      %v3465 = vadd.f32 %v3087, %v3393
      %v3466 = vadd.f32 %v3088, %v3396
      %v3467 = vadd.f32 %v3089, %v3401
      %v3468 = vadd.f32 %v3090, %v3404
      %v3469 = vadd.f32 %v3091, %v3409
      %v3470 = vadd.f32 %v3092, %v3412
      %v3471 = vadd.f32 %v3093, %v3417
      %v3472 = vadd.f32 %v3094, %v3420
      %v3473 = vadd.f32 %v3095, %v3425
      %v3474 = vadd.f32 %v3096, %v3428
      %v3475 = vadd.f32 %v3097, %v3433
      %v3476 = vadd.f32 %v3098, %v3436
      %v3477 = vadd.f32 %v3099, %v3441
      %v3478 = vadd.f32 %v3100, %v3444
      %v3480 = vshrl.u32 %v3105, 16
      %v3482 = vrot.slane %v3480, 4
      %v3483 = vshll.u32 %v3105, 16
      %v3485 = vrot.slane %v3483, 5
      %v3486 = vor.u32 %v3482, %v3485
      %v3487 = vrot.slane %v3486, 4
      %v3489 = vshll.u32 %v3106, 16
      %v3491 = vrot.slane %v3489, 5
      %v3492 = vsel %vm257, %v3487, %v3491
      %v3493 = vshrl.u32 %v3106, 16
      %v3495 = vrot.slane %v3493, 4
      %v3496 = vor.u32 %v3495, %v3491
      %v3497 = vrot.slane %v3496, 4
      %v3499 = vshll.u32 %v3107, 16
      %v3501 = vrot.slane %v3499, 5
      %v3502 = vsel %vm257, %v3497, %v3501
      %v3504 = vshrl.u32 %v3108, 16
      %v3506 = vrot.slane %v3504, 4
      %v3507 = vshll.u32 %v3108, 16
      %v3509 = vrot.slane %v3507, 5
      %v3510 = vor.u32 %v3506, %v3509
      %v3511 = vrot.slane %v3510, 4
      %v3513 = vshll.u32 %v3109, 16
      %v3515 = vrot.slane %v3513, 5
      %v3516 = vsel %vm257, %v3511, %v3515
      %v3517 = vshrl.u32 %v3109, 16
      %v3519 = vrot.slane %v3517, 4
      %v3520 = vor.u32 %v3519, %v3515
      %v3521 = vrot.slane %v3520, 4
      %v3523 = vshll.u32 %v3110, 16
      %v3525 = vrot.slane %v3523, 5
      %v3526 = vsel %vm257, %v3521, %v3525
      %v3528 = vshrl.u32 %v3111, 16
      %v3530 = vrot.slane %v3528, 4
      %v3531 = vshll.u32 %v3111, 16
      %v3533 = vrot.slane %v3531, 5
      %v3534 = vor.u32 %v3530, %v3533
      %v3535 = vrot.slane %v3534, 4
      %v3537 = vshll.u32 %v3112, 16
      %v3539 = vrot.slane %v3537, 5
      %v3540 = vsel %vm257, %v3535, %v3539
      %v3541 = vshrl.u32 %v3112, 16
      %v3543 = vrot.slane %v3541, 4
      %v3544 = vor.u32 %v3543, %v3539
      %v3545 = vrot.slane %v3544, 4
      %v3547 = vshll.u32 %v3113, 16
      %v3549 = vrot.slane %v3547, 5
      %v3550 = vsel %vm257, %v3545, %v3549
      %v3552 = vshrl.u32 %v3114, 16
      %v3554 = vrot.slane %v3552, 4
      %v3555 = vshll.u32 %v3114, 16
      %v3557 = vrot.slane %v3555, 5
      %v3558 = vor.u32 %v3554, %v3557
      %v3559 = vrot.slane %v3558, 4
      %v3561 = vshll.u32 %v3115, 16
      %v3563 = vrot.slane %v3561, 5
      %v3564 = vsel %vm257, %v3559, %v3563
      %v3565 = vshrl.u32 %v3115, 16
      %v3567 = vrot.slane %v3565, 4
      %v3568 = vor.u32 %v3567, %v3563
      %v3569 = vrot.slane %v3568, 4
      %v3571 = vshll.u32 %v3116, 16
      %v3573 = vrot.slane %v3571, 5
      %v3574 = vsel %vm257, %v3569, %v3573
      %v3576 = vshrl.u32 %v3117, 16
      %v3578 = vrot.slane %v3576, 4
      %v3579 = vshll.u32 %v3117, 16
      %v3581 = vrot.slane %v3579, 5
      %v3582 = vor.u32 %v3578, %v3581
      %v3583 = vrot.slane %v3582, 4
      %v3585 = vshll.u32 %v3118, 16
      %v3587 = vrot.slane %v3585, 5
      %v3588 = vsel %vm257, %v3583, %v3587
      %v3589 = vshrl.u32 %v3118, 16
      %v3591 = vrot.slane %v3589, 4
      %v3592 = vor.u32 %v3591, %v3587
      %v3593 = vrot.slane %v3592, 4
      %v3595 = vshll.u32 %v3119, 16
      %v3597 = vrot.slane %v3595, 5
      %v3598 = vsel %vm257, %v3593, %v3597
      %v3600 = vshrl.u32 %v3120, 16
      %v3602 = vrot.slane %v3600, 4
      %v3603 = vshll.u32 %v3120, 16
      %v3605 = vrot.slane %v3603, 5
      %v3606 = vor.u32 %v3602, %v3605
      %v3607 = vrot.slane %v3606, 4
      %v3609 = vshll.u32 %v3121, 16
      %v3611 = vrot.slane %v3609, 5
      %v3612 = vsel %vm257, %v3607, %v3611
      %v3613 = vshrl.u32 %v3121, 16
      %v3615 = vrot.slane %v3613, 4
      %v3616 = vor.u32 %v3615, %v3611
      %v3617 = vrot.slane %v3616, 4
      %v3619 = vshll.u32 %v3122, 16
      %v3621 = vrot.slane %v3619, 5
      %v3622 = vsel %vm257, %v3617, %v3621
      %v3624 = vshrl.u32 %v3123, 16
      %v3626 = vrot.slane %v3624, 4
      %v3627 = vshll.u32 %v3123, 16
      %v3629 = vrot.slane %v3627, 5
      %v3630 = vor.u32 %v3626, %v3629
      %v3631 = vrot.slane %v3630, 4
      %v3633 = vshll.u32 %v3124, 16
      %v3635 = vrot.slane %v3633, 5
      %v3636 = vsel %vm257, %v3631, %v3635
      %v3637 = vshrl.u32 %v3124, 16
      %v3639 = vrot.slane %v3637, 4
      %v3640 = vor.u32 %v3639, %v3635
      %v3641 = vrot.slane %v3640, 4
      %v3643 = vshll.u32 %v3125, 16
      %v3645 = vrot.slane %v3643, 5
      %v3646 = vsel %vm257, %v3641, %v3645
      %v3648 = vshrl.u32 %v3126, 16
      %v3650 = vrot.slane %v3648, 4
      %v3651 = vshll.u32 %v3126, 16
      %v3653 = vrot.slane %v3651, 5
      %v3654 = vor.u32 %v3650, %v3653
      %v3655 = vrot.slane %v3654, 4
      %v3657 = vshll.u32 %v3127, 16
      %v3659 = vrot.slane %v3657, 5
      %v3660 = vsel %vm257, %v3655, %v3659
      %v3661 = vshrl.u32 %v3127, 16
      %v3663 = vrot.slane %v3661, 4
      %v3664 = vor.u32 %v3663, %v3659
      %v3665 = vrot.slane %v3664, 4
      %v3667 = vshll.u32 %v3128, 16
      %v3669 = vrot.slane %v3667, 5
      %v3670 = vsel %vm257, %v3665, %v3669
      %v3672 = vshrl.u32 %v3129, 16
      %v3674 = vrot.slane %v3672, 4
      %v3675 = vshll.u32 %v3129, 16
      %v3677 = vrot.slane %v3675, 5
      %v3678 = vor.u32 %v3674, %v3677
      %v3679 = vrot.slane %v3678, 4
      %v3681 = vshll.u32 %v3130, 16
      %v3683 = vrot.slane %v3681, 5
      %v3684 = vsel %vm257, %v3679, %v3683
      %v3685 = vshrl.u32 %v3130, 16
      %v3687 = vrot.slane %v3685, 4
      %v3688 = vor.u32 %v3687, %v3683
      %v3689 = vrot.slane %v3688, 4
      %v3691 = vshll.u32 %v3131, 16
      %v3693 = vrot.slane %v3691, 5
      %v3694 = vsel %vm257, %v3689, %v3693
      %v3696 = vshrl.u32 %v3132, 16
      %v3698 = vrot.slane %v3696, 4
      %v3699 = vshll.u32 %v3132, 16
      %v3701 = vrot.slane %v3699, 5
      %v3702 = vor.u32 %v3698, %v3701
      %v3703 = vrot.slane %v3702, 4
      %v3705 = vshll.u32 %v3133, 16
      %v3707 = vrot.slane %v3705, 5
      %v3708 = vsel %vm257, %v3703, %v3707
      %v3709 = vshrl.u32 %v3133, 16
      %v3711 = vrot.slane %v3709, 4
      %v3712 = vor.u32 %v3711, %v3707
      %v3713 = vrot.slane %v3712, 4
      %v3715 = vshll.u32 %v3134, 16
      %v3717 = vrot.slane %v3715, 5
      %v3718 = vsel %vm257, %v3713, %v3717
      %v3720 = vshrl.u32 %v3135, 16
      %v3722 = vrot.slane %v3720, 4
      %v3723 = vshll.u32 %v3135, 16
      %v3725 = vrot.slane %v3723, 5
      %v3726 = vor.u32 %v3722, %v3725
      %v3727 = vrot.slane %v3726, 4
      %v3729 = vshll.u32 %v3136, 16
      %v3731 = vrot.slane %v3729, 5
      %v3732 = vsel %vm257, %v3727, %v3731
      %v3733 = vshrl.u32 %v3136, 16
      %v3735 = vrot.slane %v3733, 4
      %v3736 = vor.u32 %v3735, %v3731
      %v3737 = vrot.slane %v3736, 4
      %v3739 = vshll.u32 %v3137, 16
      %v3741 = vrot.slane %v3739, 5
      %v3742 = vsel %vm257, %v3737, %v3741
      %v3744 = vshrl.u32 %v3138, 16
      %v3746 = vrot.slane %v3744, 4
      %v3747 = vshll.u32 %v3138, 16
      %v3749 = vrot.slane %v3747, 5
      %v3750 = vor.u32 %v3746, %v3749
      %v3751 = vrot.slane %v3750, 4
      %v3753 = vshll.u32 %v3139, 16
      %v3755 = vrot.slane %v3753, 5
      %v3756 = vsel %vm257, %v3751, %v3755
      %v3757 = vshrl.u32 %v3139, 16
      %v3759 = vrot.slane %v3757, 4
      %v3760 = vor.u32 %v3759, %v3755
      %v3761 = vrot.slane %v3760, 4
      %v3763 = vshll.u32 %v3140, 16
      %v3765 = vrot.slane %v3763, 5
      %v3766 = vsel %vm257, %v3761, %v3765
      %v3768 = vshrl.u32 %v3141, 16
      %v3770 = vrot.slane %v3768, 4
      %v3771 = vshll.u32 %v3141, 16
      %v3773 = vrot.slane %v3771, 5
      %v3774 = vor.u32 %v3770, %v3773
      %v3775 = vrot.slane %v3774, 4
      %v3777 = vshll.u32 %v3142, 16
      %v3779 = vrot.slane %v3777, 5
      %v3780 = vsel %vm257, %v3775, %v3779
      %v3781 = vshrl.u32 %v3142, 16
      %v3783 = vrot.slane %v3781, 4
      %v3784 = vor.u32 %v3783, %v3779
      %v3785 = vrot.slane %v3784, 4
      %v3787 = vshll.u32 %v3143, 16
      %v3789 = vrot.slane %v3787, 5
      %v3790 = vsel %vm257, %v3785, %v3789
      %v3792 = vshrl.u32 %v3144, 16
      %v3794 = vrot.slane %v3792, 4
      %v3795 = vshll.u32 %v3144, 16
      %v3797 = vrot.slane %v3795, 5
      %v3798 = vor.u32 %v3794, %v3797
      %v3799 = vrot.slane %v3798, 4
      %v3801 = vshll.u32 %v3145, 16
      %v3803 = vrot.slane %v3801, 5
      %v3804 = vsel %vm257, %v3799, %v3803
      %v3805 = vshrl.u32 %v3145, 16
      %v3807 = vrot.slane %v3805, 4
      %v3808 = vor.u32 %v3807, %v3803
      %v3809 = vrot.slane %v3808, 4
      %v3811 = vshll.u32 %v3146, 16
      %v3813 = vrot.slane %v3811, 5
      %v3814 = vsel %vm257, %v3809, %v3813
      %v3816 = vshrl.u32 %v3147, 16
      %v3818 = vrot.slane %v3816, 4
      %v3819 = vshll.u32 %v3147, 16
      %v3821 = vrot.slane %v3819, 5
      %v3822 = vor.u32 %v3818, %v3821
      %v3823 = vrot.slane %v3822, 4
      %v3825 = vshll.u32 %v3148, 16
      %v3827 = vrot.slane %v3825, 5
      %v3828 = vsel %vm257, %v3823, %v3827
      %v3829 = vshrl.u32 %v3148, 16
      %v3831 = vrot.slane %v3829, 4
      %v3832 = vor.u32 %v3831, %v3827
      %v3833 = vrot.slane %v3832, 4
      %v3835 = vshll.u32 %v3149, 16
      %v3837 = vrot.slane %v3835, 5
      %v3838 = vsel %vm257, %v3833, %v3837
      %v3840 = vshrl.u32 %v3150, 16
      %v3842 = vrot.slane %v3840, 4
      %v3843 = vshll.u32 %v3150, 16
      %v3845 = vrot.slane %v3843, 5
      %v3846 = vor.u32 %v3842, %v3845
      %v3847 = vrot.slane %v3846, 4
      %v3849 = vshll.u32 %v3151, 16
      %v3851 = vrot.slane %v3849, 5
      %v3852 = vsel %vm257, %v3847, %v3851
      %v3853 = vshrl.u32 %v3151, 16
      %v3855 = vrot.slane %v3853, 4
      %v3856 = vor.u32 %v3855, %v3851
      %v3857 = vrot.slane %v3856, 4
      %v3859 = vshll.u32 %v3152, 16
      %v3861 = vrot.slane %v3859, 5
      %v3862 = vsel %vm257, %v3857, %v3861
      %s3863 = scalar_lea.vmem %s1, 14
      %v3864 = vld [vmem:[%s3863] sm:$0x3]
      %v3865 = vunpack.c.l.b16 %v3492
      %v3866 = vunpack.c.l.b16 %v3502
      %v3867 = vunpack.c.l.b16 %v3516
      %v3868 = vunpack.c.l.b16 %v3526
      %v3869 = vunpack.c.l.b16 %v3540
      %v3870 = vunpack.c.l.b16 %v3550
      %v3871 = vunpack.c.l.b16 %v3564
      %v3872 = vunpack.c.l.b16 %v3574
      %v3873 = vunpack.c.l.b16 %v3588
      %v3874 = vunpack.c.l.b16 %v3598
      %v3875 = vunpack.c.l.b16 %v3612
      %v3876 = vunpack.c.l.b16 %v3622
      %v3877 = vunpack.c.l.b16 %v3636
      %v3878 = vunpack.c.l.b16 %v3646
      %v3879 = vunpack.c.l.b16 %v3660
      %v3880 = vunpack.c.l.b16 %v3670
      %v3881 = vunpack.c.l.b16 %v3684
      %v3882 = vunpack.c.l.b16 %v3694
      %v3883 = vunpack.c.l.b16 %v3708
      %v3884 = vunpack.c.l.b16 %v3718
      %v3885 = vunpack.c.l.b16 %v3732
      %v3886 = vunpack.c.l.b16 %v3742
      %v3887 = vunpack.c.l.b16 %v3756
      %v3888 = vunpack.c.l.b16 %v3766
      %v3889 = vunpack.c.l.b16 %v3780
      %v3890 = vunpack.c.l.b16 %v3790
      %v3891 = vunpack.c.l.b16 %v3804
      %v3892 = vunpack.c.l.b16 %v3814
      %v3893 = vunpack.c.l.b16 %v3828
      %v3894 = vunpack.c.l.b16 %v3838
      %v3895 = vunpack.c.l.b16 %v3852
      %v3896 = vunpack.c.l.b16 %v3862
      %v3897 = vpack.c.b16 %v3866, %v3865
      %v3898 = vpack.c.b16 %v3868, %v3867
      %v3899 = vpack.c.b16 %v3870, %v3869
      %v3900 = vpack.c.b16 %v3872, %v3871
      %v3901 = vpack.c.b16 %v3874, %v3873
      %v3902 = vpack.c.b16 %v3876, %v3875
      %v3903 = vpack.c.b16 %v3878, %v3877
      %v3904 = vpack.c.b16 %v3880, %v3879
      %v3905 = vpack.c.b16 %v3882, %v3881
      %v3906 = vpack.c.b16 %v3884, %v3883
      %v3907 = vpack.c.b16 %v3886, %v3885
      %v3908 = vpack.c.b16 %v3888, %v3887
      %v3909 = vpack.c.b16 %v3890, %v3889
      %v3910 = vpack.c.b16 %v3892, %v3891
      %v3911 = vpack.c.b16 %v3894, %v3893
      %v3912 = vpack.c.b16 %v3896, %v3895
      %v3914 = vsel %vm692, %v3897, 0
      %v3917 = vsel %vm692, %v3898, 0
      %v3920 = vsel %vm692, %v3899, 0
      %v3923 = vsel %vm692, %v3900, 0
      %v3926 = vsel %vm692, %v3901, 0
      %v3929 = vsel %vm692, %v3902, 0
      %v3932 = vsel %vm692, %v3903, 0
      %v3935 = vsel %vm692, %v3904, 0
      %v3938 = vsel %vm692, %v3905, 0
      %v3941 = vsel %vm692, %v3906, 0
      %v3944 = vsel %vm692, %v3907, 0
      %v3947 = vsel %vm692, %v3908, 0
      %v3950 = vsel %vm692, %v3909, 0
      %v3953 = vsel %vm692, %v3910, 0
      %v3956 = vsel %vm692, %v3911, 0
      %v3959 = vsel %vm692, %v3912, 0
      %v3962 = vsel %vm741, %v3864, 0
      %3964 = vmatprep.subr.bf16.mxu0 0
      %3965 = vmatpush1.bf16.msra.mxu0 0
      %3966 = vmatprep.subr.bf16.mxu0 0
      %3967 = vmatpush1.bf16.msra.mxu0 0
      %3968 = vmatprep.subr.bf16.mxu0 0
      %3969 = vmatpush1.bf16.msra.mxu0 0
      %3970 = vmatprep.subr.bf16.mxu0 0
      %3971 = vmatpush1.bf16.msra.mxu0 0
      %3972 = vmatprep.subr.bf16.mxu0 0
      %3973 = vmatpush1.bf16.msra.mxu0 0
      %3974 = vmatprep.subr.bf16.mxu0 0
      %3975 = vmatpush1.bf16.msra.mxu0 0
      %3976 = vmatprep.subr.bf16.mxu0 0
      %3977 = vmatpush1.bf16.msra.mxu0 0
      %3978 = vmatprep.subr.bf16.mxu0 0
      %3979 = vmatpush1.bf16.msra.mxu0 %v3962
      %3980 = vmatprep.subr.bf16.mxu0 0
      %3981 = vmatpush2.bf16.msra.mxu0 0
      %3982 = vmatprep.subr.bf16.mxu0 0
      %3983 = vmatpush2.bf16.msra.mxu0 0
      %3984 = vmatprep.subr.bf16.mxu0 0
      %3985 = vmatpush2.bf16.msra.mxu0 0
      %3986 = vmatprep.subr.bf16.mxu0 0
      %3987 = vmatpush2.bf16.msra.mxu0 0
      %3988 = vmatprep.subr.bf16.mxu0 0
      %3989 = vmatpush2.bf16.msra.mxu0 0
      %3990 = vmatprep.subr.bf16.mxu0 0
      %3991 = vmatpush2.bf16.msra.mxu0 0
      %3992 = vmatprep.subr.bf16.mxu0 0
      %3993 = vmatpush2.bf16.msra.mxu0 0
      %3994 = vmatprep.subr.bf16.mxu0 0
      %3995 = vmatpush2.bf16.msra.mxu0 0
      %3996 = vmatprep.mubr.bf16.mxu0 0
      %3997 = vmatmul.mubr.bf16.gmra.mxu0 %v3914
      %v3998 = vpop.f32.mrf.mxu0
      %v3999 = vadd.f32 0.0, %v3998
      %v4000 = vpop.f32.mrf.mxu0
      %v4001 = vpop.f32.mrf.mxu0
      %v4002 = vadd.f32 0.0, %v4001
      %v4003 = vpop.f32.mrf.mxu0
      %4004 = vmatprep.mubr.bf16.mxu0 0
      %4005 = vmatmul.mubr.bf16.gmra.mxu0 %v3917
      %v4006 = vpop.f32.mrf.mxu0
      %v4007 = vadd.f32 0.0, %v4006
      %v4008 = vpop.f32.mrf.mxu0
      %v4009 = vpop.f32.mrf.mxu0
      %v4010 = vadd.f32 0.0, %v4009
      %v4011 = vpop.f32.mrf.mxu0
      %4012 = vmatprep.mubr.bf16.mxu0 0
      %4013 = vmatmul.mubr.bf16.gmra.mxu0 %v3920
      %v4014 = vpop.f32.mrf.mxu0
      %v4015 = vadd.f32 0.0, %v4014
      %v4016 = vpop.f32.mrf.mxu0
      %v4017 = vpop.f32.mrf.mxu0
      %v4018 = vadd.f32 0.0, %v4017
      %v4019 = vpop.f32.mrf.mxu0
      %4020 = vmatprep.mubr.bf16.mxu0 0
      %4021 = vmatmul.mubr.bf16.gmra.mxu0 %v3923
      %v4022 = vpop.f32.mrf.mxu0
      %v4023 = vadd.f32 0.0, %v4022
      %v4024 = vpop.f32.mrf.mxu0
      %v4025 = vpop.f32.mrf.mxu0
      %v4026 = vadd.f32 0.0, %v4025
      %v4027 = vpop.f32.mrf.mxu0
      %4028 = vmatprep.mubr.bf16.mxu0 0
      %4029 = vmatmul.mubr.bf16.gmra.mxu0 %v3926
      %v4030 = vpop.f32.mrf.mxu0
      %v4031 = vadd.f32 0.0, %v4030
      %v4032 = vpop.f32.mrf.mxu0
      %v4033 = vpop.f32.mrf.mxu0
      %v4034 = vadd.f32 0.0, %v4033
      %v4035 = vpop.f32.mrf.mxu0
      %4036 = vmatprep.mubr.bf16.mxu0 0
      %4037 = vmatmul.mubr.bf16.gmra.mxu0 %v3929
      %v4038 = vpop.f32.mrf.mxu0
      %v4039 = vadd.f32 0.0, %v4038
      %v4040 = vpop.f32.mrf.mxu0
      %v4041 = vpop.f32.mrf.mxu0
      %v4042 = vadd.f32 0.0, %v4041
      %v4043 = vpop.f32.mrf.mxu0
      %4044 = vmatprep.mubr.bf16.mxu0 0
      %4045 = vmatmul.mubr.bf16.gmra.mxu0 %v3932
      %v4046 = vpop.f32.mrf.mxu0
      %v4047 = vadd.f32 0.0, %v4046
      %v4048 = vpop.f32.mrf.mxu0
      %v4049 = vpop.f32.mrf.mxu0
      %v4050 = vadd.f32 0.0, %v4049
      %v4051 = vpop.f32.mrf.mxu0
      %4052 = vmatprep.mubr.bf16.mxu0 0
      %4053 = vmatmul.mubr.bf16.gmra.mxu0 %v3935
      %v4054 = vpop.f32.mrf.mxu0
      %v4055 = vadd.f32 0.0, %v4054
      %v4056 = vpop.f32.mrf.mxu0
      %v4057 = vpop.f32.mrf.mxu0
      %v4058 = vadd.f32 0.0, %v4057
      %v4059 = vpop.f32.mrf.mxu0
      %4060 = vmatprep.mubr.bf16.mxu0 0
      %4061 = vmatmul.mubr.bf16.gmra.mxu0 %v3938
      %v4062 = vpop.f32.mrf.mxu0
      %v4063 = vadd.f32 0.0, %v4062
      %v4064 = vpop.f32.mrf.mxu0
      %v4065 = vpop.f32.mrf.mxu0
      %v4066 = vadd.f32 0.0, %v4065
      %v4067 = vpop.f32.mrf.mxu0
      %4068 = vmatprep.mubr.bf16.mxu0 0
      %4069 = vmatmul.mubr.bf16.gmra.mxu0 %v3941
      %v4070 = vpop.f32.mrf.mxu0
      %v4071 = vadd.f32 0.0, %v4070
      %v4072 = vpop.f32.mrf.mxu0
      %v4073 = vpop.f32.mrf.mxu0
      %v4074 = vadd.f32 0.0, %v4073
      %v4075 = vpop.f32.mrf.mxu0
      %4076 = vmatprep.mubr.bf16.mxu0 0
      %4077 = vmatmul.mubr.bf16.gmra.mxu0 %v3944
      %v4078 = vpop.f32.mrf.mxu0
      %v4079 = vadd.f32 0.0, %v4078
      %v4080 = vpop.f32.mrf.mxu0
      %v4081 = vpop.f32.mrf.mxu0
      %v4082 = vadd.f32 0.0, %v4081
      %v4083 = vpop.f32.mrf.mxu0
      %4084 = vmatprep.mubr.bf16.mxu0 0
      %4085 = vmatmul.mubr.bf16.gmra.mxu0 %v3947
      %v4086 = vpop.f32.mrf.mxu0
      %v4087 = vadd.f32 0.0, %v4086
      %v4088 = vpop.f32.mrf.mxu0
      %v4089 = vpop.f32.mrf.mxu0
      %v4090 = vadd.f32 0.0, %v4089
      %v4091 = vpop.f32.mrf.mxu0
      %4092 = vmatprep.mubr.bf16.mxu0 0
      %4093 = vmatmul.mubr.bf16.gmra.mxu0 %v3950
      %v4094 = vpop.f32.mrf.mxu0
      %v4095 = vadd.f32 0.0, %v4094
      %v4096 = vpop.f32.mrf.mxu0
      %v4097 = vpop.f32.mrf.mxu0
      %v4098 = vadd.f32 0.0, %v4097
      %v4099 = vpop.f32.mrf.mxu0
      %4100 = vmatprep.mubr.bf16.mxu0 0
      %4101 = vmatmul.mubr.bf16.gmra.mxu0 %v3953
      %v4102 = vpop.f32.mrf.mxu0
      %v4103 = vadd.f32 0.0, %v4102
      %v4104 = vpop.f32.mrf.mxu0
      %v4105 = vpop.f32.mrf.mxu0
      %v4106 = vadd.f32 0.0, %v4105
      %v4107 = vpop.f32.mrf.mxu0
      %4108 = vmatprep.mubr.bf16.mxu0 0
      %4109 = vmatmul.mubr.bf16.gmra.mxu0 %v3956
      %v4110 = vpop.f32.mrf.mxu0
      %v4111 = vadd.f32 0.0, %v4110
      %v4112 = vpop.f32.mrf.mxu0
      %v4113 = vpop.f32.mrf.mxu0
      %v4114 = vadd.f32 0.0, %v4113
      %v4115 = vpop.f32.mrf.mxu0
      %4116 = vmatprep.mubr.bf16.mxu0 0
      %4117 = vmatmul.mubr.bf16.gmra.mxu0 %v3959
      %v4118 = vpop.f32.mrf.mxu0
      %v4119 = vadd.f32 0.0, %v4118
      %v4120 = vpop.f32.mrf.mxu0
      %v4121 = vpop.f32.mrf.mxu0
      %v4122 = vadd.f32 0.0, %v4121
      %v4123 = vpop.f32.mrf.mxu0
      %4124 = vdwg.mxu0
      %v4125 = vadd.f32 %v3447, %v3999
      %v4126 = vadd.f32 %v3448, %v4002
      %v4127 = vadd.f32 %v3449, %v4007
      %v4128 = vadd.f32 %v3450, %v4010
      %v4129 = vadd.f32 %v3451, %v4015
      %v4130 = vadd.f32 %v3452, %v4018
      %v4131 = vadd.f32 %v3453, %v4023
      %v4132 = vadd.f32 %v3454, %v4026
      %v4133 = vadd.f32 %v3455, %v4031
      %v4134 = vadd.f32 %v3456, %v4034
      %v4135 = vadd.f32 %v3457, %v4039
      %v4136 = vadd.f32 %v3458, %v4042
      %v4137 = vadd.f32 %v3459, %v4047
      %v4138 = vadd.f32 %v3460, %v4050
      %v4139 = vadd.f32 %v3461, %v4055
      %v4140 = vadd.f32 %v3462, %v4058
      %v4141 = vadd.f32 %v3463, %v4063
      %v4142 = vadd.f32 %v3464, %v4066
      %v4143 = vadd.f32 %v3465, %v4071
      %v4144 = vadd.f32 %v3466, %v4074
      %v4145 = vadd.f32 %v3467, %v4079
      %v4146 = vadd.f32 %v3468, %v4082
      %v4147 = vadd.f32 %v3469, %v4087
      %v4148 = vadd.f32 %v3470, %v4090
      %v4149 = vadd.f32 %v3471, %v4095
      %v4150 = vadd.f32 %v3472, %v4098
      %v4151 = vadd.f32 %v3473, %v4103
      %v4152 = vadd.f32 %v3474, %v4106
      %v4153 = vadd.f32 %v3475, %v4111
      %v4154 = vadd.f32 %v3476, %v4114
      %v4155 = vadd.f32 %v3477, %v4119
      %v4156 = vadd.f32 %v3478, %v4122
      %v4173 = vrot.slane %v3105, 5
      %v4174 = vrot.slane %v4173, 4
      %v4175 = vrot.slane %v3106, 5
      %v4176 = vsel %vm1216, %v4174, %v4175
      %v4177 = vrot.slane %v4175, 4
      %v4178 = vrot.slane %v3107, 5
      %v4179 = vsel %vm1216, %v4177, %v4178
      %v4180 = vrot.slane %v3108, 5
      %v4181 = vrot.slane %v4180, 4
      %v4182 = vrot.slane %v3109, 5
      %v4183 = vsel %vm1216, %v4181, %v4182
      %v4184 = vrot.slane %v4182, 4
      %v4185 = vrot.slane %v3110, 5
      %v4186 = vsel %vm1216, %v4184, %v4185
      %v4187 = vrot.slane %v3111, 5
      %v4188 = vrot.slane %v4187, 4
      %v4189 = vrot.slane %v3112, 5
      %v4190 = vsel %vm1216, %v4188, %v4189
      %v4191 = vrot.slane %v4189, 4
      %v4192 = vrot.slane %v3113, 5
      %v4193 = vsel %vm1216, %v4191, %v4192
      %v4194 = vrot.slane %v3114, 5
      %v4195 = vrot.slane %v4194, 4
      %v4196 = vrot.slane %v3115, 5
      %v4197 = vsel %vm1216, %v4195, %v4196
      %v4198 = vrot.slane %v4196, 4
      %v4199 = vrot.slane %v3116, 5
      %v4200 = vsel %vm1216, %v4198, %v4199
      %v4201 = vrot.slane %v3117, 5
      %v4202 = vrot.slane %v4201, 4
      %v4203 = vrot.slane %v3118, 5
      %v4204 = vsel %vm1216, %v4202, %v4203
      %v4205 = vrot.slane %v4203, 4
      %v4206 = vrot.slane %v3119, 5
      %v4207 = vsel %vm1216, %v4205, %v4206
      %v4208 = vrot.slane %v3120, 5
      %v4209 = vrot.slane %v4208, 4
      %v4210 = vrot.slane %v3121, 5
      %v4211 = vsel %vm1216, %v4209, %v4210
      %v4212 = vrot.slane %v4210, 4
      %v4213 = vrot.slane %v3122, 5
      %v4214 = vsel %vm1216, %v4212, %v4213
      %v4215 = vrot.slane %v3123, 5
      %v4216 = vrot.slane %v4215, 4
      %v4217 = vrot.slane %v3124, 5
      %v4218 = vsel %vm1216, %v4216, %v4217
      %v4219 = vrot.slane %v4217, 4
      %v4220 = vrot.slane %v3125, 5
      %v4221 = vsel %vm1216, %v4219, %v4220
      %v4222 = vrot.slane %v3126, 5
      %v4223 = vrot.slane %v4222, 4
      %v4224 = vrot.slane %v3127, 5
      %v4225 = vsel %vm1216, %v4223, %v4224
      %v4226 = vrot.slane %v4224, 4
      %v4227 = vrot.slane %v3128, 5
      %v4228 = vsel %vm1216, %v4226, %v4227
      %v4229 = vrot.slane %v3129, 5
      %v4230 = vrot.slane %v4229, 4
      %v4231 = vrot.slane %v3130, 5
      %v4232 = vsel %vm1216, %v4230, %v4231
      %v4233 = vrot.slane %v4231, 4
      %v4234 = vrot.slane %v3131, 5
      %v4235 = vsel %vm1216, %v4233, %v4234
      %v4236 = vrot.slane %v3132, 5
      %v4237 = vrot.slane %v4236, 4
      %v4238 = vrot.slane %v3133, 5
      %v4239 = vsel %vm1216, %v4237, %v4238
      %v4240 = vrot.slane %v4238, 4
      %v4241 = vrot.slane %v3134, 5
      %v4242 = vsel %vm1216, %v4240, %v4241
      %v4243 = vrot.slane %v3135, 5
      %v4244 = vrot.slane %v4243, 4
      %v4245 = vrot.slane %v3136, 5
      %v4246 = vsel %vm1216, %v4244, %v4245
      %v4247 = vrot.slane %v4245, 4
      %v4248 = vrot.slane %v3137, 5
      %v4249 = vsel %vm1216, %v4247, %v4248
      %v4250 = vrot.slane %v3138, 5
      %v4251 = vrot.slane %v4250, 4
      %v4252 = vrot.slane %v3139, 5
      %v4253 = vsel %vm1216, %v4251, %v4252
      %v4254 = vrot.slane %v4252, 4
      %v4255 = vrot.slane %v3140, 5
      %v4256 = vsel %vm1216, %v4254, %v4255
      %v4257 = vrot.slane %v3141, 5
      %v4258 = vrot.slane %v4257, 4
      %v4259 = vrot.slane %v3142, 5
      %v4260 = vsel %vm1216, %v4258, %v4259
      %v4261 = vrot.slane %v4259, 4
      %v4262 = vrot.slane %v3143, 5
      %v4263 = vsel %vm1216, %v4261, %v4262
      %v4264 = vrot.slane %v3144, 5
      %v4265 = vrot.slane %v4264, 4
      %v4266 = vrot.slane %v3145, 5
      %v4267 = vsel %vm1216, %v4265, %v4266
      %v4268 = vrot.slane %v4266, 4
      %v4269 = vrot.slane %v3146, 5
      %v4270 = vsel %vm1216, %v4268, %v4269
      %v4271 = vrot.slane %v3147, 5
      %v4272 = vrot.slane %v4271, 4
      %v4273 = vrot.slane %v3148, 5
      %v4274 = vsel %vm1216, %v4272, %v4273
      %v4275 = vrot.slane %v4273, 4
      %v4276 = vrot.slane %v3149, 5
      %v4277 = vsel %vm1216, %v4275, %v4276
      %v4278 = vrot.slane %v3150, 5
      %v4279 = vrot.slane %v4278, 4
      %v4280 = vrot.slane %v3151, 5
      %v4281 = vsel %vm1216, %v4279, %v4280
      %v4282 = vrot.slane %v4280, 4
      %v4283 = vrot.slane %v3152, 5
      %v4284 = vsel %vm1216, %v4282, %v4283
      %s4285 = scalar_lea.vmem %s1, 16
      %v4286 = vld [vmem:[%s4285] sm:$0x3]
      %v4287 = vunpack.c.l.b16 %v4176
      %v4288 = vunpack.c.l.b16 %v4179
      %v4289 = vunpack.c.l.b16 %v4183
      %v4290 = vunpack.c.l.b16 %v4186
      %v4291 = vunpack.c.l.b16 %v4190
      %v4292 = vunpack.c.l.b16 %v4193
      %v4293 = vunpack.c.l.b16 %v4197
      %v4294 = vunpack.c.l.b16 %v4200
      %v4295 = vunpack.c.l.b16 %v4204
      %v4296 = vunpack.c.l.b16 %v4207
      %v4297 = vunpack.c.l.b16 %v4211
      %v4298 = vunpack.c.l.b16 %v4214
      %v4299 = vunpack.c.l.b16 %v4218
      %v4300 = vunpack.c.l.b16 %v4221
      %v4301 = vunpack.c.l.b16 %v4225
      %v4302 = vunpack.c.l.b16 %v4228
      %v4303 = vunpack.c.l.b16 %v4232
      %v4304 = vunpack.c.l.b16 %v4235
      %v4305 = vunpack.c.l.b16 %v4239
      %v4306 = vunpack.c.l.b16 %v4242
      %v4307 = vunpack.c.l.b16 %v4246
      %v4308 = vunpack.c.l.b16 %v4249
      %v4309 = vunpack.c.l.b16 %v4253
      %v4310 = vunpack.c.l.b16 %v4256
      %v4311 = vunpack.c.l.b16 %v4260
      %v4312 = vunpack.c.l.b16 %v4263
      %v4313 = vunpack.c.l.b16 %v4267
      %v4314 = vunpack.c.l.b16 %v4270
      %v4315 = vunpack.c.l.b16 %v4274
      %v4316 = vunpack.c.l.b16 %v4277
      %v4317 = vunpack.c.l.b16 %v4281
      %v4318 = vunpack.c.l.b16 %v4284
      %v4319 = vpack.c.b16 %v4288, %v4287
      %v4320 = vpack.c.b16 %v4290, %v4289
      %v4321 = vpack.c.b16 %v4292, %v4291
      %v4322 = vpack.c.b16 %v4294, %v4293
      %v4323 = vpack.c.b16 %v4296, %v4295
      %v4324 = vpack.c.b16 %v4298, %v4297
      %v4325 = vpack.c.b16 %v4300, %v4299
      %v4326 = vpack.c.b16 %v4302, %v4301
      %v4327 = vpack.c.b16 %v4304, %v4303
      %v4328 = vpack.c.b16 %v4306, %v4305
      %v4329 = vpack.c.b16 %v4308, %v4307
      %v4330 = vpack.c.b16 %v4310, %v4309
      %v4331 = vpack.c.b16 %v4312, %v4311
      %v4332 = vpack.c.b16 %v4314, %v4313
      %v4333 = vpack.c.b16 %v4316, %v4315
      %v4334 = vpack.c.b16 %v4318, %v4317
      %v4336 = vsel %vm692, %v4319, 0
      %v4339 = vsel %vm692, %v4320, 0
      %v4342 = vsel %vm692, %v4321, 0
      %v4345 = vsel %vm692, %v4322, 0
      %v4348 = vsel %vm692, %v4323, 0
      %v4351 = vsel %vm692, %v4324, 0
      %v4354 = vsel %vm692, %v4325, 0
      %v4357 = vsel %vm692, %v4326, 0
      %v4360 = vsel %vm692, %v4327, 0
      %v4363 = vsel %vm692, %v4328, 0
      %v4366 = vsel %vm692, %v4329, 0
      %v4369 = vsel %vm692, %v4330, 0
      %v4372 = vsel %vm692, %v4331, 0
      %v4375 = vsel %vm692, %v4332, 0
      %v4378 = vsel %vm692, %v4333, 0
      %v4381 = vsel %vm692, %v4334, 0
      %v4384 = vsel %vm741, %v4286, 0
      %4386 = vmatprep.subr.bf16.mxu0 0
      %4387 = vmatpush1.bf16.msra.mxu0 0
      %4388 = vmatprep.subr.bf16.mxu0 0
      %4389 = vmatpush1.bf16.msra.mxu0 0
      %4390 = vmatprep.subr.bf16.mxu0 0
      %4391 = vmatpush1.bf16.msra.mxu0 0
      %4392 = vmatprep.subr.bf16.mxu0 0
      %4393 = vmatpush1.bf16.msra.mxu0 0
      %4394 = vmatprep.subr.bf16.mxu0 0
      %4395 = vmatpush1.bf16.msra.mxu0 0
      %4396 = vmatprep.subr.bf16.mxu0 0
      %4397 = vmatpush1.bf16.msra.mxu0 0
      %4398 = vmatprep.subr.bf16.mxu0 0
      %4399 = vmatpush1.bf16.msra.mxu0 0
      %4400 = vmatprep.subr.bf16.mxu0 0
      %4401 = vmatpush1.bf16.msra.mxu0 %v4384
      %4402 = vmatprep.subr.bf16.mxu0 0
      %4403 = vmatpush2.bf16.msra.mxu0 0
      %4404 = vmatprep.subr.bf16.mxu0 0
      %4405 = vmatpush2.bf16.msra.mxu0 0
      %4406 = vmatprep.subr.bf16.mxu0 0
      %4407 = vmatpush2.bf16.msra.mxu0 0
      %4408 = vmatprep.subr.bf16.mxu0 0
      %4409 = vmatpush2.bf16.msra.mxu0 0
      %4410 = vmatprep.subr.bf16.mxu0 0
      %4411 = vmatpush2.bf16.msra.mxu0 0
      %4412 = vmatprep.subr.bf16.mxu0 0
      %4413 = vmatpush2.bf16.msra.mxu0 0
      %4414 = vmatprep.subr.bf16.mxu0 0
      %4415 = vmatpush2.bf16.msra.mxu0 0
      %4416 = vmatprep.subr.bf16.mxu0 0
      %4417 = vmatpush2.bf16.msra.mxu0 0
      %4418 = vmatprep.mubr.bf16.mxu0 0
      %4419 = vmatmul.mubr.bf16.gmra.mxu0 %v4336
      %v4420 = vpop.f32.mrf.mxu0
      %v4421 = vadd.f32 0.0, %v4420
      %v4422 = vpop.f32.mrf.mxu0
      %v4423 = vpop.f32.mrf.mxu0
      %v4424 = vadd.f32 0.0, %v4423
      %v4425 = vpop.f32.mrf.mxu0
      %4426 = vmatprep.mubr.bf16.mxu0 0
      %4427 = vmatmul.mubr.bf16.gmra.mxu0 %v4339
      %v4428 = vpop.f32.mrf.mxu0
      %v4429 = vadd.f32 0.0, %v4428
      %v4430 = vpop.f32.mrf.mxu0
      %v4431 = vpop.f32.mrf.mxu0
      %v4432 = vadd.f32 0.0, %v4431
      %v4433 = vpop.f32.mrf.mxu0
      %4434 = vmatprep.mubr.bf16.mxu0 0
      %4435 = vmatmul.mubr.bf16.gmra.mxu0 %v4342
      %v4436 = vpop.f32.mrf.mxu0
      %v4437 = vadd.f32 0.0, %v4436
      %v4438 = vpop.f32.mrf.mxu0
      %v4439 = vpop.f32.mrf.mxu0
      %v4440 = vadd.f32 0.0, %v4439
      %v4441 = vpop.f32.mrf.mxu0
      %4442 = vmatprep.mubr.bf16.mxu0 0
      %4443 = vmatmul.mubr.bf16.gmra.mxu0 %v4345
      %v4444 = vpop.f32.mrf.mxu0
      %v4445 = vadd.f32 0.0, %v4444
      %v4446 = vpop.f32.mrf.mxu0
      %v4447 = vpop.f32.mrf.mxu0
      %v4448 = vadd.f32 0.0, %v4447
      %v4449 = vpop.f32.mrf.mxu0
      %4450 = vmatprep.mubr.bf16.mxu0 0
      %4451 = vmatmul.mubr.bf16.gmra.mxu0 %v4348
      %v4452 = vpop.f32.mrf.mxu0
      %v4453 = vadd.f32 0.0, %v4452
      %v4454 = vpop.f32.mrf.mxu0
      %v4455 = vpop.f32.mrf.mxu0
      %v4456 = vadd.f32 0.0, %v4455
      %v4457 = vpop.f32.mrf.mxu0
      %4458 = vmatprep.mubr.bf16.mxu0 0
      %4459 = vmatmul.mubr.bf16.gmra.mxu0 %v4351
      %v4460 = vpop.f32.mrf.mxu0
      %v4461 = vadd.f32 0.0, %v4460
      %v4462 = vpop.f32.mrf.mxu0
      %v4463 = vpop.f32.mrf.mxu0
      %v4464 = vadd.f32 0.0, %v4463
      %v4465 = vpop.f32.mrf.mxu0
      %4466 = vmatprep.mubr.bf16.mxu0 0
      %4467 = vmatmul.mubr.bf16.gmra.mxu0 %v4354
      %v4468 = vpop.f32.mrf.mxu0
      %v4469 = vadd.f32 0.0, %v4468
      %v4470 = vpop.f32.mrf.mxu0
      %v4471 = vpop.f32.mrf.mxu0
      %v4472 = vadd.f32 0.0, %v4471
      %v4473 = vpop.f32.mrf.mxu0
      %4474 = vmatprep.mubr.bf16.mxu0 0
      %4475 = vmatmul.mubr.bf16.gmra.mxu0 %v4357
      %v4476 = vpop.f32.mrf.mxu0
      %v4477 = vadd.f32 0.0, %v4476
      %v4478 = vpop.f32.mrf.mxu0
      %v4479 = vpop.f32.mrf.mxu0
      %v4480 = vadd.f32 0.0, %v4479
      %v4481 = vpop.f32.mrf.mxu0
      %4482 = vmatprep.mubr.bf16.mxu0 0
      %4483 = vmatmul.mubr.bf16.gmra.mxu0 %v4360
      %v4484 = vpop.f32.mrf.mxu0
      %v4485 = vadd.f32 0.0, %v4484
      %v4486 = vpop.f32.mrf.mxu0
      %v4487 = vpop.f32.mrf.mxu0
      %v4488 = vadd.f32 0.0, %v4487
      %v4489 = vpop.f32.mrf.mxu0
      %4490 = vmatprep.mubr.bf16.mxu0 0
      %4491 = vmatmul.mubr.bf16.gmra.mxu0 %v4363
      %v4492 = vpop.f32.mrf.mxu0
      %v4493 = vadd.f32 0.0, %v4492
      %v4494 = vpop.f32.mrf.mxu0
      %v4495 = vpop.f32.mrf.mxu0
      %v4496 = vadd.f32 0.0, %v4495
      %v4497 = vpop.f32.mrf.mxu0
      %4498 = vmatprep.mubr.bf16.mxu0 0
      %4499 = vmatmul.mubr.bf16.gmra.mxu0 %v4366
      %v4500 = vpop.f32.mrf.mxu0
      %v4501 = vadd.f32 0.0, %v4500
      %v4502 = vpop.f32.mrf.mxu0
      %v4503 = vpop.f32.mrf.mxu0
      %v4504 = vadd.f32 0.0, %v4503
      %v4505 = vpop.f32.mrf.mxu0
      %4506 = vmatprep.mubr.bf16.mxu0 0
      %4507 = vmatmul.mubr.bf16.gmra.mxu0 %v4369
      %v4508 = vpop.f32.mrf.mxu0
      %v4509 = vadd.f32 0.0, %v4508
      %v4510 = vpop.f32.mrf.mxu0
      %v4511 = vpop.f32.mrf.mxu0
      %v4512 = vadd.f32 0.0, %v4511
      %v4513 = vpop.f32.mrf.mxu0
      %4514 = vmatprep.mubr.bf16.mxu0 0
      %4515 = vmatmul.mubr.bf16.gmra.mxu0 %v4372
      %v4516 = vpop.f32.mrf.mxu0
      %v4517 = vadd.f32 0.0, %v4516
      %v4518 = vpop.f32.mrf.mxu0
      %v4519 = vpop.f32.mrf.mxu0
      %v4520 = vadd.f32 0.0, %v4519
      %v4521 = vpop.f32.mrf.mxu0
      %4522 = vmatprep.mubr.bf16.mxu0 0
      %4523 = vmatmul.mubr.bf16.gmra.mxu0 %v4375
      %v4524 = vpop.f32.mrf.mxu0
      %v4525 = vadd.f32 0.0, %v4524
      %v4526 = vpop.f32.mrf.mxu0
      %v4527 = vpop.f32.mrf.mxu0
      %v4528 = vadd.f32 0.0, %v4527
      %v4529 = vpop.f32.mrf.mxu0
      %4530 = vmatprep.mubr.bf16.mxu0 0
      %4531 = vmatmul.mubr.bf16.gmra.mxu0 %v4378
      %v4532 = vpop.f32.mrf.mxu0
      %v4533 = vadd.f32 0.0, %v4532
      %v4534 = vpop.f32.mrf.mxu0
      %v4535 = vpop.f32.mrf.mxu0
      %v4536 = vadd.f32 0.0, %v4535
      %v4537 = vpop.f32.mrf.mxu0
      %4538 = vmatprep.mubr.bf16.mxu0 0
      %4539 = vmatmul.mubr.bf16.gmra.mxu0 %v4381
      %v4540 = vpop.f32.mrf.mxu0
      %v4541 = vadd.f32 0.0, %v4540
      %v4542 = vpop.f32.mrf.mxu0
      %v4543 = vpop.f32.mrf.mxu0
      %v4544 = vadd.f32 0.0, %v4543
      %v4545 = vpop.f32.mrf.mxu0
      %4546 = vdwg.mxu0
      %v4547 = vadd.f32 %v4125, %v4421
      %v4548 = vadd.f32 %v4126, %v4424
      %v4549 = vadd.f32 %v4127, %v4429
      %v4550 = vadd.f32 %v4128, %v4432
      %v4551 = vadd.f32 %v4129, %v4437
      %v4552 = vadd.f32 %v4130, %v4440
      %v4553 = vadd.f32 %v4131, %v4445
      %v4554 = vadd.f32 %v4132, %v4448
      %v4555 = vadd.f32 %v4133, %v4453
      %v4556 = vadd.f32 %v4134, %v4456
      %v4557 = vadd.f32 %v4135, %v4461
      %v4558 = vadd.f32 %v4136, %v4464
      %v4559 = vadd.f32 %v4137, %v4469
      %v4560 = vadd.f32 %v4138, %v4472
      %v4561 = vadd.f32 %v4139, %v4477
      %v4562 = vadd.f32 %v4140, %v4480
      %v4563 = vadd.f32 %v4141, %v4485
      %v4564 = vadd.f32 %v4142, %v4488
      %v4565 = vadd.f32 %v4143, %v4493
      %v4566 = vadd.f32 %v4144, %v4496
      %v4567 = vadd.f32 %v4145, %v4501
      %v4568 = vadd.f32 %v4146, %v4504
      %v4569 = vadd.f32 %v4147, %v4509
      %v4570 = vadd.f32 %v4148, %v4512
      %v4571 = vadd.f32 %v4149, %v4517
      %v4572 = vadd.f32 %v4150, %v4520
      %v4573 = vadd.f32 %v4151, %v4525
      %v4574 = vadd.f32 %v4152, %v4528
      %v4575 = vadd.f32 %v4153, %v4533
      %v4576 = vadd.f32 %v4154, %v4536
      %v4577 = vadd.f32 %v4155, %v4541
      %v4578 = vadd.f32 %v4156, %v4544
      %4579 = vst [vmem:[%s192] sm:$0xff] %v4547
      %4580 = vst [vmem:[%s192 + $0x8] sm:$0xff] %v4548
      %4581 = vst [vmem:[%s192 + $0x10] sm:$0xff] %v4549
      %4582 = vst [vmem:[%s192 + $0x18] sm:$0xff] %v4550
      %4583 = vst [vmem:[%s192 + $0x20] sm:$0xff] %v4551
      %4584 = vst [vmem:[%s192 + $0x28] sm:$0xff] %v4552
      %4585 = vst [vmem:[%s192 + $0x30] sm:$0xff] %v4553
      %4586 = vst [vmem:[%s192 + $0x38] sm:$0xff] %v4554
      %4587 = vst [vmem:[%s192 + $0x40] sm:$0xff] %v4555
      %4588 = vst [vmem:[%s192 + $0x48] sm:$0xff] %v4556
      %4589 = vst [vmem:[%s192 + $0x50] sm:$0xff] %v4557
      %4590 = vst [vmem:[%s192 + $0x58] sm:$0xff] %v4558
      %4591 = vst [vmem:[%s192 + $0x60] sm:$0xff] %v4559
      %4592 = vst [vmem:[%s192 + $0x68] sm:$0xff] %v4560
      %4593 = vst [vmem:[%s192 + $0x70] sm:$0xff] %v4561
      %4594 = vst [vmem:[%s192 + $0x78] sm:$0xff] %v4562
      %4595 = vst [vmem:[%s192 + $0x80] sm:$0xff] %v4563
      %4596 = vst [vmem:[%s192 + $0x88] sm:$0xff] %v4564
      %4597 = vst [vmem:[%s192 + $0x90] sm:$0xff] %v4565
      %4598 = vst [vmem:[%s192 + $0x98] sm:$0xff] %v4566
      %4599 = vst [vmem:[%s192 + $0xa0] sm:$0xff] %v4567
      %4600 = vst [vmem:[%s192 + $0xa8] sm:$0xff] %v4568
      %4601 = vst [vmem:[%s192 + $0xb0] sm:$0xff] %v4569
      %4602 = vst [vmem:[%s192 + $0xb8] sm:$0xff] %v4570
      %4603 = vst [vmem:[%s192 + $0xc0] sm:$0xff] %v4571
      %4604 = vst [vmem:[%s192 + $0xc8] sm:$0xff] %v4572
      %4605 = vst [vmem:[%s192 + $0xd0] sm:$0xff] %v4573
      %4606 = vst [vmem:[%s192 + $0xd8] sm:$0xff] %v4574
      %4607 = vst [vmem:[%s192 + $0xe0] sm:$0xff] %v4575
      %4608 = vst [vmem:[%s192 + $0xe8] sm:$0xff] %v4576
      %4609 = vst [vmem:[%s192 + $0xf0] sm:$0xff] %v4577
      %4610 = vst [vmem:[%s192 + $0xf8] sm:$0xff] %v4578
      %v4611 = vadd.f32 %v4547, %v4548
      %v4612 = vadd.f32 %v4611, %v4549
      %v4613 = vadd.f32 %v4612, %v4550
      %v4614 = vadd.f32 %v4613, %v4551
      %v4615 = vadd.f32 %v4614, %v4552
      %v4616 = vadd.f32 %v4615, %v4553
      %v4617 = vadd.f32 %v4616, %v4554
      %v4618 = vadd.f32 %v4617, %v4555
      %v4619 = vadd.f32 %v4618, %v4556
      %v4620 = vadd.f32 %v4619, %v4557
      %v4621 = vadd.f32 %v4620, %v4558
      %v4622 = vadd.f32 %v4621, %v4559
      %v4623 = vadd.f32 %v4622, %v4560
      %v4624 = vadd.f32 %v4623, %v4561
      %v4625 = vadd.f32 %v4624, %v4562
      %v4626 = vadd.f32 %v4625, %v4563
      %v4627 = vadd.f32 %v4626, %v4564
      %v4628 = vadd.f32 %v4627, %v4565
      %v4629 = vadd.f32 %v4628, %v4566
      %v4630 = vadd.f32 %v4629, %v4567
      %v4631 = vadd.f32 %v4630, %v4568
      %v4632 = vadd.f32 %v4631, %v4569
      %v4633 = vadd.f32 %v4632, %v4570
      %v4634 = vadd.f32 %v4633, %v4571
      %v4635 = vadd.f32 %v4634, %v4572
      %v4636 = vadd.f32 %v4635, %v4573
      %v4637 = vadd.f32 %v4636, %v4574
      %v4638 = vadd.f32 %v4637, %v4575
      %v4639 = vadd.f32 %v4638, %v4576
      %v4640 = vadd.f32 %v4639, %v4577
      %v4641 = vadd.f32 %v4640, %v4578
      %v4642 = vrot.slane %v4641, 4
      %v4643 = vadd.f32 %v4641, %v4642
      %v4644 = vrot.slane %v4643, 2
      %v4645 = vadd.f32 %v4643, %v4644
      %v4646 = vrot.slane %v4645, 1
      %v4647 = vadd.f32 %v4645, %v4646
      %v4648 = vmul.f32 %v4547, %v4547
      %v4649 = vmul.f32 %v4548, %v4548
      %v4650 = vmul.f32 %v4549, %v4549
      %v4651 = vmul.f32 %v4550, %v4550
      %v4652 = vmul.f32 %v4551, %v4551
      %v4653 = vmul.f32 %v4552, %v4552
      %v4654 = vmul.f32 %v4553, %v4553
      %v4655 = vmul.f32 %v4554, %v4554
      %v4656 = vmul.f32 %v4555, %v4555
      %v4657 = vmul.f32 %v4556, %v4556
      %v4658 = vmul.f32 %v4557, %v4557
      %v4659 = vmul.f32 %v4558, %v4558
      %v4660 = vmul.f32 %v4559, %v4559
      %v4661 = vmul.f32 %v4560, %v4560
      %v4662 = vmul.f32 %v4561, %v4561
      %v4663 = vmul.f32 %v4562, %v4562
      %v4664 = vmul.f32 %v4563, %v4563
      %v4665 = vmul.f32 %v4564, %v4564
      %v4666 = vmul.f32 %v4565, %v4565
      %v4667 = vmul.f32 %v4566, %v4566
      %v4668 = vmul.f32 %v4567, %v4567
      %v4669 = vmul.f32 %v4568, %v4568
      %v4670 = vmul.f32 %v4569, %v4569
      %v4671 = vmul.f32 %v4570, %v4570
      %v4672 = vmul.f32 %v4571, %v4571
      %v4673 = vmul.f32 %v4572, %v4572
      %v4674 = vmul.f32 %v4573, %v4573
      %v4675 = vmul.f32 %v4574, %v4574
      %v4676 = vmul.f32 %v4575, %v4575
      %v4677 = vmul.f32 %v4576, %v4576
      %v4678 = vmul.f32 %v4577, %v4577
      %v4679 = vmul.f32 %v4578, %v4578
      %v4680 = vadd.f32 %v4648, %v4649
      %v4681 = vadd.f32 %v4680, %v4650
      %v4682 = vadd.f32 %v4681, %v4651
      %v4683 = vadd.f32 %v4682, %v4652
      %v4684 = vadd.f32 %v4683, %v4653
      %v4685 = vadd.f32 %v4684, %v4654
      %v4686 = vadd.f32 %v4685, %v4655
      %v4687 = vadd.f32 %v4686, %v4656
      %v4688 = vadd.f32 %v4687, %v4657
      %v4689 = vadd.f32 %v4688, %v4658
      %v4690 = vadd.f32 %v4689, %v4659
      %v4691 = vadd.f32 %v4690, %v4660
      %v4692 = vadd.f32 %v4691, %v4661
      %v4693 = vadd.f32 %v4692, %v4662
      %v4694 = vadd.f32 %v4693, %v4663
      %v4695 = vadd.f32 %v4694, %v4664
      %v4696 = vadd.f32 %v4695, %v4665
      %v4697 = vadd.f32 %v4696, %v4666
      %v4698 = vadd.f32 %v4697, %v4667
      %v4699 = vadd.f32 %v4698, %v4668
      %v4700 = vadd.f32 %v4699, %v4669
      %v4701 = vadd.f32 %v4700, %v4670
      %v4702 = vadd.f32 %v4701, %v4671
      %v4703 = vadd.f32 %v4702, %v4672
      %v4704 = vadd.f32 %v4703, %v4673
      %v4705 = vadd.f32 %v4704, %v4674
      %v4706 = vadd.f32 %v4705, %v4675
      %v4707 = vadd.f32 %v4706, %v4676
      %v4708 = vadd.f32 %v4707, %v4677
      %v4709 = vadd.f32 %v4708, %v4678
      %v4710 = vadd.f32 %v4709, %v4679
      %v4711 = vrot.slane %v4710, 4
      %v4712 = vadd.f32 %v4710, %v4711
      %v4713 = vrot.slane %v4712, 2
      %v4714 = vadd.f32 %v4712, %v4713
      %v4715 = vrot.slane %v4714, 1
      %v4716 = vadd.f32 %v4714, %v4715
      %v4717 = vld [vmem:[%s3] sm:$0x3]
      %vm4718 = vcmask 1040384
      %v4719 = vsel %vm4718, %v4647, %v4716
      %v4720 = vadd.f32 %v4717, %v4719
      %4721 = vst [vmem:[%s3] sm:$0x3] %v4720
      %s4722 = smul.u32 16, %s20
      %p4723 = scmp.lt.s32.totalorder %s19, 1
      %s4724 = scalar_select %p4723, %s19, 1
      %p4725 = scmp.lt.s32.totalorder %s4722, 15
      %s4726 = scalar_select %p4725, %s4722, 15
      %s4727 = smul.addr %s4726, 2
      %s4728 = smul.addr %s4724, 32
      %s4729 = sadd.s32 %s4727, %s4728
      %s4730 = smul.addr %s4729, 8
      %s4731 = scalar_lea.vmem %s2, %s4730
      // Predicated region
      $region33: #{conv_block.2} parent=27 // pred_check
        %p4732 = pneg %p94
      $region34: #{conv_block.2} parent=27 // pred_check_branch
        %4734 = sbr.rel (%p4732) target = $region36
      $region35: #{conv_block.2} parent=27 // pred_region
        %s4735 = smul.u32 16, %s20
      $region36: #{conv_block.2} parent=27 // pred_fallthru
        _
      // Predicated region
      $region37: #{conv_block.2} parent=27 // pred_check
        %p4736 = pneg %p115
      $region38: #{conv_block.2} parent=27 // pred_check_branch
        %4738 = sbr.rel (%p4736) target = $region40
      $region39: #{conv_block.2} parent=27 // pred_region
        _
      $region40: #{conv_block.2} parent=27 // pred_fallthru
        _
      // Predicated region
      $region41: #{conv_block.2} parent=27 // pred_check
        %p4739 = pneg %p115
      $region42: #{conv_block.2} parent=27 // pred_check_branch
        %4741 = sbr.rel (%p4739) target = $region44
      $region43: #{conv_block.2} parent=27 // pred_region
        _
      $region44: #{conv_block.2} parent=27 // pred_fallthru
        _
    $region28: #{conv_block.2} parent=5 // pred_fallthru
      _
    %p4742 = scmp.le.s32.totalorder 2, %s10
    // Predicated region
    $region45: #{conv_block.2} parent=5 // pred_check
      %p4743 = pneg %p4742
    $region46: #{conv_block.2} parent=5 // pred_check_branch
      %4745 = sbr.rel (%p4743) target = $region48
    $region47: #{conv_block.2} parent=5 // pred_region
      %s4746 = ssub.s32 %s10, 2
      // Predicated region
      $region49: #{conv_block.2} parent=47 // pred_check
        %p4747 = pneg %p100
      $region50: #{conv_block.2} parent=47 // pred_check_branch
        %4749 = sbr.rel (%p4747) target = $region52
      $region51: #{conv_block.2} parent=47 // pred_region
        %s4750 = smul.u32 16, %s22
        %p4751 = scmp.lt.s32.totalorder %s21, 1
        %s4752 = scalar_select %p4751, %s21, 1
        %p4753 = scmp.lt.s32.totalorder %s4750, 15
        %s4754 = scalar_select %p4753, %s4750, 15
        %s4755 = smul.addr %s4754, 2
        %s4756 = smul.addr %s4752, 32
        %s4757 = sadd.s32 %s4755, %s4756
        %s4758 = smul.addr %s4757, 8
        %s4759 = scalar_lea.vmem %s2, %s4758
      $region52: #{conv_block.2} parent=47 // pred_fallthru
        _
    $region48: #{conv_block.2} parent=5 // pred_fallthru
      _
  $region6: #{conv_block.2} parent=0 // loop_footer
    %s14 = sadd.s32 1, %s10
  $region7: #{conv_block.2} parent=0 // loop_footer_branch
    %9 = sbr.rel target = $region3
  $region8: #{conv_block.2} parent=0 // loop_exit
    _

</llo_original>
